<compile_context>
chip_gen: v5e
topology: v5e:2x2
jax: 0.10.0
libtpu: 0.0.40
codegen_flags: <defaults>
</compile_context>

<pallas_src>
import math

import jax
import jax.numpy as jnp
from jax.experimental import pallas as pl
from jax.experimental.pallas import tpu as pltpu

# ----------------------- tiny T5 config (synthetic) -----------------------
VOCAB = 32
D_MODEL = 32
N_HEADS = 4
D_KV = 8                      # head dim;  N_HEADS * D_KV == D_MODEL
D_FF = 64
N_ENC_LAYERS = 1
N_DEC_LAYERS = 1
NUM_BUCKETS = 32
MAX_DISTANCE = 128
EPS = 1e-6
PAD_ID = 0
DEC_START_ID = 0              # T5: decoder_start_token_id == pad_token_id
NEG_INF = float(jnp.finfo(jnp.float32).min)
LM_PAD = 128                  # lane-dense padded width for QKV / KV / LM-head outputs


# ----------------------------- fused Pallas kernel -----------------------------
def _make_reprover_kernel(n_enc, n_dec, Se, Sd):
    """Single fused kernel: encoder stack -> decoder stack -> LM head.

    One grid step == one batch element (batch axis is the parallel grid axis)."""

    def rms(x, g):
        # T5LayerNorm: RMS, no mean subtraction, no bias. f32 math.
        var = jnp.mean(x * x, axis=-1, keepdims=True)
        return x * jax.lax.rsqrt(var + EPS) * g

    def mm(x, w):
        # bf16 MXU inputs, f32 accumulation.
        return jnp.dot(x.astype(jnp.bfloat16), w, preferred_element_type=jnp.float32)

    def attention(q2, k2, v2, bias, wo, sq, sk):
        # q2: (sq, D) f32, k2/v2: (sk, D) f32, bias: broadcastable to (H, sq, sk) f32
        # wo: (D, D) bf16.  T5 attention: no 1/sqrt(d) scaling.
        qh = q2.reshape(sq, N_HEADS, D_KV).astype(jnp.bfloat16)
        kh = k2.reshape(sk, N_HEADS, D_KV).astype(jnp.bfloat16)
        vh = v2.reshape(sk, N_HEADS, D_KV).astype(jnp.bfloat16)
        s = jnp.einsum("qhd,khd->hqk", qh, kh,
                       preferred_element_type=jnp.float32)          # (H, sq, sk) f32
        s = s + bias                                                 # single add
        s = s - jnp.max(s, axis=-1, keepdims=True)
        p = jnp.exp(s)
        p = p * pl.reciprocal(jnp.sum(p, axis=-1, keepdims=True), approx=True)
        ctx = jnp.einsum("hqk,khd->qhd", p.astype(jnp.bfloat16), vh,
                         preferred_element_type=jnp.float32)         # (sq, H, Dh)
        return mm(ctx.reshape(sq, D_MODEL), wo)

    def kernel(x_enc_ref, x_dec_ref, enc_rel_ref, dec_rel_ref,
               enc_pad_ref, dec_pad_ref, gam_ref, lm_ref,
               e_wqkv_ref, e_wo_ref, e_wi_ref, e_wff_ref,
               d_wqkv_ref, d_swo_ref, d_cwq_ref, d_cwkv_ref, d_cwo_ref,
               d_wi_ref, d_wff_ref, out_ref):
        # --------- additive score biases (rel-pos + pad/causal), built ONCE ---------
        enc_keep = enc_pad_ref[...] > 0.5                            # (1, Se) bool
        enc_add = jnp.where(enc_keep, 0.0, NEG_INF)                  # (1, Se) f32
        enc_bias = enc_rel_ref[...] + enc_add[None, :, :]            # (H, Se, Se)

        row = jax.lax.broadcasted_iota(jnp.int32, (Sd, Sd), 0)
        col = jax.lax.broadcasted_iota(jnp.int32, (Sd, Sd), 1)
        dec_keep = (col <= row) & (dec_pad_ref[...] > 0.5)           # (Sd, Sd) bool
        dec_bias = dec_rel_ref[...] + jnp.where(dec_keep, 0.0, NEG_INF)[None, :, :]
        cross_bias = enc_add[None, :, :]                             # (1, 1, Se)

        def gamma(i):
            return gam_ref[i:i + 1, :]                               # (1, D) f32

        # ------------------------------ encoder ------------------------------
        x = x_enc_ref[...]                                           # (Se, D) f32
        for l in range(n_enc):
            hqkv = mm(rms(x, gamma(2 * l)), e_wqkv_ref[l])           # (Se, 128)
            x = x + attention(hqkv[:, :D_MODEL],
                              hqkv[:, D_MODEL:2 * D_MODEL],
                              hqkv[:, 2 * D_MODEL:3 * D_MODEL],
                              enc_bias, e_wo_ref[l], Se, Se)
            h = jnp.maximum(mm(rms(x, gamma(2 * l + 1)), e_wi_ref[l]), 0.0)
            x = x + mm(h, e_wff_ref[l])
        enc_h = rms(x, gamma(2 * n_enc))                             # final encoder LN

        # ------------------------------ decoder ------------------------------
        g0 = 2 * n_enc + 1
        y = x_dec_ref[...]                                           # (Sd, D) f32
        for l in range(n_dec):
            gb = g0 + 3 * l
            # self attention (causal + padding mask, decoder rel-pos bias)
            hqkv = mm(rms(y, gamma(gb)), d_wqkv_ref[l])              # (Sd, 128)
            y = y + attention(hqkv[:, :D_MODEL],
                              hqkv[:, D_MODEL:2 * D_MODEL],
                              hqkv[:, 2 * D_MODEL:3 * D_MODEL],
                              dec_bias, d_swo_ref[l], Sd, Sd)
            # cross attention (no rel-pos bias); K/V from final encoder hidden
            hq = mm(rms(y, gamma(gb + 1)), d_cwq_ref[l])             # (Sd, D)
            kv = mm(enc_h, d_cwkv_ref[l])                            # (Se, 128)
            y = y + attention(hq, kv[:, :D_MODEL], kv[:, D_MODEL:2 * D_MODEL],
                              cross_bias, d_cwo_ref[l], Sd, Se)
            # FFN
            h = jnp.maximum(mm(rms(y, gamma(gb + 2)), d_wi_ref[l]), 0.0)
            y = y + mm(h, d_wff_ref[l])
        dec_h = rms(y, gamma(g0 + 3 * n_dec)) * (D_MODEL ** -0.5)    # tied-emb rescale

        # ----------------------- LM head (lane-dense, 128 cols) --------------
        out_ref[...] = jnp.dot(dec_h.astype(jnp.bfloat16), lm_ref[...],
                               preferred_element_type=jnp.float32)   # (Sd, 128)

    return kernel


def _reprover_pallas(x_enc, x_dec, enc_rel, dec_rel, enc_pad, dec_pad,
                     gammas, lm_head, W, B, Se, Sd):
    def full(a):
        nd = a.ndim
        return pl.BlockSpec(a.shape, lambda b, _nd=nd: (0,) * _nd)

    def per_batch(a):
        tail = a.shape[1:]
        nt = len(tail)
        return pl.BlockSpec((None,) + tail, lambda b, _nt=nt: (b,) + (0,) * _nt)

    w_list = [W["e_wqkv"], W["e_wo"], W["e_wi"], W["e_wff"],
              W["d_wqkv"], W["d_swo"], W["d_cwq"], W["d_cwkv"], W["d_cwo"],
              W["d_wi"], W["d_wff"]]
    inputs = [x_enc, x_dec, enc_rel, dec_rel, enc_pad, dec_pad, gammas, lm_head] + w_list
    in_specs = ([per_batch(x_enc), per_batch(x_dec), full(enc_rel), full(dec_rel),
                 per_batch(enc_pad), per_batch(dec_pad), full(gammas), full(lm_head)]
                + [full(w) for w in w_list])

    kernel = _make_reprover_kernel(N_ENC_LAYERS, N_DEC_LAYERS, Se, Sd)
    return pl.pallas_call(
        kernel,
        grid=(B,),
        in_specs=in_specs,
        out_specs=pl.BlockSpec((None, Sd, LM_PAD), lambda b: (b, 0, 0)),
        out_shape=jax.ShapeDtypeStruct((B, Sd, LM_PAD), jnp.float32),
        compiler_params=pltpu.CompilerParams(
            dimension_semantics=("parallel",),   # v7x: batch split across TensorCores
            # 32 MiB is plenty for this toy config and safe on every generation;
            # raise toward ~96 MiB on v5e/v6e at real model sizes.
            vmem_limit_bytes=32 * 1024 * 1024,
        ),
    )(*inputs)


# ------------------------------ JAX glue -----------------------------------
def _relative_position_bucket(relative_position, bidirectional,
                              num_buckets=NUM_BUCKETS, max_distance=MAX_DISTANCE):
    relative_buckets = jnp.zeros_like(relative_position)
    if bidirectional:
        num_buckets //= 2
        relative_buckets += (relative_position > 0).astype(jnp.int32) * num_buckets
        relative_position = jnp.abs(relative_position)
    else:
        relative_position = -jnp.minimum(relative_position, 0)
    max_exact = num_buckets // 2
    is_small = relative_position < max_exact
    rp_f = jnp.maximum(relative_position, 1).astype(jnp.float32)
    rp_large = max_exact + (
        jnp.log(rp_f / max_exact) / math.log(max_distance / max_exact)
        * (num_buckets - max_exact)
    ).astype(jnp.int32)
    rp_large = jnp.minimum(rp_large, num_buckets - 1)
    relative_buckets += jnp.where(is_small, relative_position, rp_large)
    return relative_buckets


def compute_position_bias(rel_emb, q_len, k_len, bidirectional):
    ctx = jnp.arange(q_len, dtype=jnp.int32)[:, None]
    mem = jnp.arange(k_len, dtype=jnp.int32)[None, :]
    buckets = _relative_position_bucket(mem - ctx, bidirectional)
    values = rel_emb[buckets]                       # (q, k, H)
    return jnp.transpose(values, (2, 0, 1))         # (H, q, k)


def shift_right(input_ids):
    B = input_ids.shape[0]
    start = jnp.full((B, 1), DEC_START_ID, dtype=input_ids.dtype)
    return jnp.concatenate([start, input_ids[:, :-1]], axis=1)


def reprover_forward(prep, input_ids, attention_mask,
                     decoder_input_ids=None, decoder_attention_mask=None):
    """ReProver.forward: backbone(input_ids, ...).logits with shift_right default."""
    B, Se = input_ids.shape
    if decoder_input_ids is None:
        decoder_input_ids = shift_right(input_ids)
    if decoder_attention_mask is None:
        decoder_attention_mask = jnp.ones_like(decoder_input_ids)
    Sd = decoder_input_ids.shape[1]

    # embedding gather (glue)
    x_enc = prep["emb"][input_ids]                                   # (B, Se, D) f32
    x_dec = prep["emb"][decoder_input_ids]                           # (B, Sd, D) f32

    # relative-position biases (H, Sq, Sk) — combined with masks IN-KERNEL
    enc_rel = compute_position_bias(prep["enc_rel"], Se, Se, bidirectional=True)
    dec_rel = compute_position_bias(prep["dec_rel"], Sd, Sd, bidirectional=False)

    # only tiny padding masks cross HBM; causal mask is built in-kernel from iota
    enc_pad = attention_mask.astype(jnp.float32)[:, None, :]          # (B, 1, Se)
    dec_pad = decoder_attention_mask.astype(jnp.float32)[:, None, :]  # (B, 1, Sd)

    logits_pad = _reprover_pallas(x_enc, x_dec, enc_rel, dec_rel, enc_pad, dec_pad,
                                  prep["gammas"], prep["lm_head"], prep["weights"],
                                  B, Se, Sd)
    return logits_pad[:, :, :VOCAB]                                   # drop lane padding


# --------------------------- parameter init / prep --------------------------------
def init_params(key):
    ks = iter(jax.random.split(key, 64))

    def nrm(shape, scale=0.05):
        return scale * jax.random.normal(next(ks), shape, jnp.float32)

    def attn_p():
        return {"wq": nrm((D_MODEL, N_HEADS * D_KV)),
                "wk": nrm((D_MODEL, N_HEADS * D_KV)),
                "wv": nrm((D_MODEL, N_HEADS * D_KV)),
                "wo": nrm((N_HEADS * D_KV, D_MODEL))}

    enc_layers = [{"ln1": jnp.ones((D_MODEL,), jnp.float32),
                   "self": attn_p(),
                   "ln2": jnp.ones((D_MODEL,), jnp.float32),
                   "wi": nrm((D_MODEL, D_FF)),
                   "wo": nrm((D_FF, D_MODEL))} for _ in range(N_ENC_LAYERS)]
    dec_layers = [{"ln1": jnp.ones((D_MODEL,), jnp.float32),
                   "self": attn_p(),
                   "ln2": jnp.ones((D_MODEL,), jnp.float32),
                   "cross": attn_p(),
                   "ln3": jnp.ones((D_MODEL,), jnp.float32),
                   "wi": nrm((D_MODEL, D_FF)),
                   "wo": nrm((D_FF, D_MODEL))} for _ in range(N_DEC_LAYERS)]
    return {"emb": nrm((VOCAB, D_MODEL), scale=0.5),
            "enc_rel": nrm((NUM_BUCKETS, N_HEADS)),
            "dec_rel": nrm((NUM_BUCKETS, N_HEADS)),
            "enc_layers": enc_layers,
            "enc_final_ln": jnp.ones((D_MODEL,), jnp.float32),
            "dec_layers": dec_layers,
            "dec_final_ln": jnp.ones((D_MODEL,), jnp.float32)}


def prepare_params(params):
    """One-time weight prep for the fused kernel (outside jit):
       * QKV / KV concatenated and zero-padded to 128 columns (lane-dense matmul N),
       * per-layer weights stacked by kind (leading layer axis),
       * layernorm gammas packed into one (n_gamma, D) array,
       * tied LM head pre-transposed, zero-padded to (D, 128), cast to bf16."""
    bf = lambda w: w.astype(jnp.bfloat16)

    def pad_cols(w, n=LM_PAD):
        return jnp.pad(w, ((0, 0), (0, n - w.shape[1])))

    gammas = []
    e_wqkv, e_wo, e_wi, e_wff = [], [], [], []
    for lyr in params["enc_layers"]:
        a = lyr["self"]
        gammas += [lyr["ln1"], lyr["ln2"]]
        e_wqkv.append(pad_cols(jnp.concatenate([a["wq"], a["wk"], a["wv"]], axis=1)))
        e_wo.append(a["wo"])
        e_wi.append(lyr["wi"])
        e_wff.append(lyr["wo"])
    gammas.append(params["enc_final_ln"])

    d_wqkv, d_swo, d_cwq, d_cwkv, d_cwo, d_wi, d_wff = ([] for _ in range(7))
    for lyr in params["dec_layers"]:
        sa, ca = lyr["self"], lyr["cross"]
        gammas += [lyr["ln1"], lyr["ln2"], lyr["ln3"]]
        d_wqkv.append(pad_cols(jnp.concatenate([sa["wq"], sa["wk"], sa["wv"]], axis=1)))
        d_swo.append(sa["wo"])
        d_cwq.append(ca["wq"])
        d_cwkv.append(pad_cols(jnp.concatenate([ca["wk"], ca["wv"]], axis=1)))
        d_cwo.append(ca["wo"])
        d_wi.append(lyr["wi"])
        d_wff.append(lyr["wo"])
    gammas.append(params["dec_final_ln"])

    stack = lambda lst: bf(jnp.stack(lst, axis=0))
    lm_head = jnp.zeros((D_MODEL, LM_PAD), jnp.float32).at[:, :VOCAB].set(params["emb"].T)

    return {"emb": params["emb"],                    # f32, used for gather
            "gammas": jnp.stack(gammas, axis=0),     # (n_gamma, D) f32
            "lm_head": bf(lm_head),                  # (D, 128) bf16, tied + padded
            "enc_rel": params["enc_rel"],
            "dec_rel": params["dec_rel"],
            "weights": {"e_wqkv": stack(e_wqkv), "e_wo": stack(e_wo),
                        "e_wi": stack(e_wi), "e_wff": stack(e_wff),
                        "d_wqkv": stack(d_wqkv), "d_swo": stack(d_swo),
                        "d_cwq": stack(d_cwq), "d_cwkv": stack(d_cwkv),
                        "d_cwo": stack(d_cwo), "d_wi": stack(d_wi),
                        "d_wff": stack(d_wff)}}


# TODO(synk): ReProver's gflownet heads (back_head / z_head / p_b / log_z) and
# .generate() are not part of forward(); they are not implemented here.

if __name__ == "__main__":
    key = jax.random.PRNGKey(0)
    pkey, ikey = jax.random.split(key)
    params = init_params(pkey)
    prep = prepare_params(params)

    B, S = 2, 8
    input_ids = jax.random.randint(ikey, (B, S), 1, VOCAB, dtype=jnp.int32)
    attention_mask = jnp.array([[1, 1, 1, 1, 1, 1, 1, 1],
                                [1, 1, 1, 1, 1, 1, 0, 0]], dtype=jnp.int32)

    fwd = jax.jit(reprover_forward)
    logits = fwd(prep, input_ids, attention_mask)
    logits = jax.block_until_ready(logits)

    assert logits.shape == (B, S, VOCAB), logits.shape
    assert bool(jnp.all(jnp.isfinite(logits)))
    print("KERNEL_OK")
</pallas_src>

<mosaic_0001>
module attributes {stable_mosaic.version = 11 : i64} {
  func.func @kernel(%arg0: i32, %arg1: memref<1x8x32xf32, #tpu.memory_space<vmem>>, %arg2: memref<1x8x32xf32, #tpu.memory_space<vmem>>, %arg3: memref<4x8x8xf32, #tpu.memory_space<vmem>>, %arg4: memref<4x8x8xf32, #tpu.memory_space<vmem>>, %arg5: memref<1x1x8xf32, #tpu.memory_space<vmem>>, %arg6: memref<1x1x8xf32, #tpu.memory_space<vmem>>, %arg7: memref<7x32xf32, #tpu.memory_space<vmem>>, %arg8: memref<32x128xbf16, #tpu.memory_space<vmem>>, %arg9: memref<1x32x128xbf16, #tpu.memory_space<vmem>>, %arg10: memref<1x32x32xbf16, #tpu.memory_space<vmem>>, %arg11: memref<1x32x64xbf16, #tpu.memory_space<vmem>>, %arg12: memref<1x64x32xbf16, #tpu.memory_space<vmem>>, %arg13: memref<1x32x128xbf16, #tpu.memory_space<vmem>>, %arg14: memref<1x32x32xbf16, #tpu.memory_space<vmem>>, %arg15: memref<1x32x32xbf16, #tpu.memory_space<vmem>>, %arg16: memref<1x32x128xbf16, #tpu.memory_space<vmem>>, %arg17: memref<1x32x32xbf16, #tpu.memory_space<vmem>>, %arg18: memref<1x32x64xbf16, #tpu.memory_space<vmem>>, %arg19: memref<1x64x32xbf16, #tpu.memory_space<vmem>>, %arg20: memref<1x8x128xf32, #tpu.memory_space<vmem>>) attributes {dimension_semantics = [#tpu.dimension_semantics<parallel>], iteration_bounds = array<i64: 2>, scalar_prefetch = 0 : i64, scratch_operands = 0 : i64, tpu.core_type = #tpu.core_type<tc>, window_params = [{transform_indices = @transform_0, window_bounds = array<i64: 1, 8, 32>}, {transform_indices = @transform_1, window_bounds = array<i64: 1, 8, 32>}, {pipeline_mode = #tpu.pipeline_mode<synchronous>, transform_indices = @transform_2, window_bounds = array<i64: 4, 8, 8>}, {pipeline_mode = #tpu.pipeline_mode<synchronous>, transform_indices = @transform_3, window_bounds = array<i64: 4, 8, 8>}, {transform_indices = @transform_4, window_bounds = array<i64: 1, 1, 8>}, {transform_indices = @transform_5, window_bounds = array<i64: 1, 1, 8>}, {pipeline_mode = #tpu.pipeline_mode<synchronous>, transform_indices = @transform_6, window_bounds = array<i64: 7, 32>}, {pipeline_mode = #tpu.pipeline_mode<synchronous>, transform_indices = @transform_7, window_bounds = array<i64: 32, 128>}, {pipeline_mode = #tpu.pipeline_mode<synchronous>, transform_indices = @transform_8, window_bounds = array<i64: 1, 32, 128>}, {pipeline_mode = #tpu.pipeline_mode<synchronous>, transform_indices = @transform_9, window_bounds = array<i64: 1, 32, 32>}, {pipeline_mode = #tpu.pipeline_mode<synchronous>, transform_indices = @transform_10, window_bounds = array<i64: 1, 32, 64>}, {pipeline_mode = #tpu.pipeline_mode<synchronous>, transform_indices = @transform_11, window_bounds = array<i64: 1, 64, 32>}, {pipeline_mode = #tpu.pipeline_mode<synchronous>, transform_indices = @transform_12, window_bounds = array<i64: 1, 32, 128>}, {pipeline_mode = #tpu.pipeline_mode<synchronous>, transform_indices = @transform_13, window_bounds = array<i64: 1, 32, 32>}, {pipeline_mode = #tpu.pipeline_mode<synchronous>, transform_indices = @transform_14, window_bounds = array<i64: 1, 32, 32>}, {pipeline_mode = #tpu.pipeline_mode<synchronous>, transform_indices = @transform_15, window_bounds = array<i64: 1, 32, 128>}, {pipeline_mode = #tpu.pipeline_mode<synchronous>, transform_indices = @transform_16, window_bounds = array<i64: 1, 32, 32>}, {pipeline_mode = #tpu.pipeline_mode<synchronous>, transform_indices = @transform_17, window_bounds = array<i64: 1, 32, 64>}, {pipeline_mode = #tpu.pipeline_mode<synchronous>, transform_indices = @transform_18, window_bounds = array<i64: 1, 64, 32>}, {transform_indices = @transform_19, window_bounds = array<i64: 1, 8, 128>}]} {
    %c0 = arith.constant 0 : index
    %c0_0 = arith.constant 0 : index
    %c0_1 = arith.constant 0 : index
    %0 = vector.load %arg5[%c0, %c0_0, %c0_1] : memref<1x1x8xf32, #tpu.memory_space<vmem>>, vector<1x1x8xf32>
    %1 = vector.shape_cast %0 : vector<1x1x8xf32> to vector<1x8xf32>
    %cst = arith.constant 5.000000e-01 : f32
    %2 = vector.broadcast %cst : f32 to vector<1x8xf32>
    %3 = arith.cmpf ogt, %1, %2 : vector<1x8xf32>
    %cst_2 = arith.constant 0.000000e+00 : f32
    %cst_3 = arith.constant -3.40282347E+38 : f32
    %4 = vector.broadcast %cst_2 : f32 to vector<1x8xf32>
    %5 = vector.broadcast %cst_3 : f32 to vector<1x8xf32>
    %6 = arith.select %3, %4, %5 : vector<1x8xi1>, vector<1x8xf32>
    %c0_4 = arith.constant 0 : index
    %c0_5 = arith.constant 0 : index
    %c0_6 = arith.constant 0 : index
    %7 = vector.load %arg3[%c0_4, %c0_5, %c0_6] : memref<4x8x8xf32, #tpu.memory_space<vmem>>, vector<4x8x8xf32>
    %8 = vector.shape_cast %6 : vector<1x8xf32> to vector<1x1x8xf32>
    %9 = vector.broadcast %8 : vector<1x1x8xf32> to vector<4x8x8xf32>
    %10 = arith.addf %7, %9 : vector<4x8x8xf32>
    %11 = tpu.iota {dimensions = array<i32: 0>} : vector<8x8xi32>
    %12 = tpu.iota {dimensions = array<i32: 1>} : vector<8x8xi32>
    %13 = arith.cmpi sle, %12, %11 : vector<8x8xi32>
    %c0_7 = arith.constant 0 : index
    %c0_8 = arith.constant 0 : index
    %c0_9 = arith.constant 0 : index
    %14 = vector.load %arg6[%c0_7, %c0_8, %c0_9] : memref<1x1x8xf32, #tpu.memory_space<vmem>>, vector<1x1x8xf32>
    %15 = vector.shape_cast %14 : vector<1x1x8xf32> to vector<1x8xf32>
    %cst_10 = arith.constant 5.000000e-01 : f32
    %16 = vector.broadcast %cst_10 : f32 to vector<1x8xf32>
    %17 = arith.cmpf ogt, %15, %16 : vector<1x8xf32>
    %18 = vector.broadcast %17 : vector<1x8xi1> to vector<8x8xi1>
    %19 = arith.andi %13, %18 : vector<8x8xi1>
    %c0_11 = arith.constant 0 : index
    %c0_12 = arith.constant 0 : index
    %c0_13 = arith.constant 0 : index
    %20 = vector.load %arg4[%c0_11, %c0_12, %c0_13] : memref<4x8x8xf32, #tpu.memory_space<vmem>>, vector<4x8x8xf32>
    %cst_14 = arith.constant 0.000000e+00 : f32
    %cst_15 = arith.constant -3.40282347E+38 : f32
    %21 = vector.broadcast %cst_14 : f32 to vector<8x8xf32>
    %22 = vector.broadcast %cst_15 : f32 to vector<8x8xf32>
    %23 = arith.select %19, %21, %22 : vector<8x8xi1>, vector<8x8xf32>
    %24 = vector.shape_cast %23 : vector<8x8xf32> to vector<1x8x8xf32>
    %25 = vector.broadcast %24 : vector<1x8x8xf32> to vector<4x8x8xf32>
    %26 = arith.addf %20, %25 : vector<4x8x8xf32>
    %27 = vector.shape_cast %6 : vector<1x8xf32> to vector<1x1x8xf32>
    %c0_16 = arith.constant 0 : index
    %c0_17 = arith.constant 0 : index
    %c0_18 = arith.constant 0 : index
    %28 = vector.load %arg1[%c0_16, %c0_17, %c0_18] : memref<1x8x32xf32, #tpu.memory_space<vmem>>, vector<1x8x32xf32>
    %29 = vector.shape_cast %28 : vector<1x8x32xf32> to vector<8x32xf32>
    %c0_19 = arith.constant 0 : index
    %c0_20 = arith.constant 0 : index
    %30 = vector.load %arg7[%c0_19, %c0_20] : memref<7x32xf32, #tpu.memory_space<vmem>>, vector<1x32xf32>
    %31 = arith.mulf %29, %29 : vector<8x32xf32>
    %cst_21 = arith.constant dense<0.000000e+00> : vector<8xf32>
    %32 = vector.multi_reduction <add>, %31, %cst_21 [1] : vector<8x32xf32> to vector<8xf32>
    %33 = vector.shape_cast %32 : vector<8xf32> to vector<8x1xf32>
    %cst_22 = arith.constant 3.200000e+01 : f32
    %34 = vector.broadcast %cst_22 : f32 to vector<8x1xf32>
    %35 = arith.divf %33, %34 : vector<8x1xf32>
    %cst_23 = arith.constant 9.99999997E-7 : f32
    %36 = vector.broadcast %cst_23 : f32 to vector<8x1xf32>
    %37 = arith.addf %35, %36 : vector<8x1xf32>
    %38 = math.rsqrt %37 : vector<8x1xf32>
    %39 = vector.broadcast %38 : vector<8x1xf32> to vector<8x32xf32>
    %40 = arith.mulf %29, %39 : vector<8x32xf32>
    %41 = vector.broadcast %30 : vector<1x32xf32> to vector<8x32xf32>
    %42 = arith.mulf %40, %41 : vector<8x32xf32>
    %c0_24 = arith.constant 0 : index
    %c0_25 = arith.constant 0 : index
    %c0_26 = arith.constant 0 : index
    %43 = vector.load %arg9[%c0_24, %c0_25, %c0_26] : memref<1x32x128xbf16, #tpu.memory_space<vmem>>, vector<1x32x128xbf16>
    %44 = vector.shape_cast %43 : vector<1x32x128xbf16> to vector<32x128xbf16>
    %45 = arith.truncf %42 : vector<8x32xf32> to vector<8x32xbf16>
    %cst_27 = arith.constant dense<0.000000e+00> : vector<8x128xf32>
    %46 = tpu.matmul %45, %44, %cst_27 {dimension_numbers = #tpu.dot_dimension_numbers<[1], [0], [0], [1], [0, 0, 1, 1], [], []>} : vector<8x32xbf16>, vector<32x128xbf16>, vector<8x128xf32> -> vector<8x128xf32>
    %47 = vector.extract_strided_slice %46 {offsets = [0, 0], sizes = [8, 32], strides = [1, 1]} : vector<8x128xf32> to vector<8x32xf32>
    %48 = vector.extract_strided_slice %46 {offsets = [0, 32], sizes = [8, 32], strides = [1, 1]} : vector<8x128xf32> to vector<8x32xf32>
    %49 = vector.extract_strided_slice %46 {offsets = [0, 64], sizes = [8, 32], strides = [1, 1]} : vector<8x128xf32> to vector<8x32xf32>
    %c0_28 = arith.constant 0 : index
    %c0_29 = arith.constant 0 : index
    %c0_30 = arith.constant 0 : index
    %50 = vector.load %arg10[%c0_28, %c0_29, %c0_30] : memref<1x32x32xbf16, #tpu.memory_space<vmem>>, vector<1x32x32xbf16>
    %51 = vector.shape_cast %50 : vector<1x32x32xbf16> to vector<32x32xbf16>
    %52 = vector.shape_cast %47 : vector<8x32xf32> to vector<8x4x8xf32>
    %53 = arith.truncf %52 : vector<8x4x8xf32> to vector<8x4x8xbf16>
    %54 = vector.shape_cast %48 : vector<8x32xf32> to vector<8x4x8xf32>
    %55 = arith.truncf %54 : vector<8x4x8xf32> to vector<8x4x8xbf16>
    %56 = vector.shape_cast %49 : vector<8x32xf32> to vector<8x4x8xf32>
    %57 = arith.truncf %56 : vector<8x4x8xf32> to vector<8x4x8xbf16>
    "tpu.trace_start"() <{level = 10 : i32, message = "qhd,khd->hqk"}> : () -> ()
    %cst_31 = arith.constant dense<0.000000e+00> : vector<4x8x8xf32>
    %58 = tpu.matmul %53, %55, %cst_31 {dimension_numbers = #tpu.dot_dimension_numbers<[2], [2], [0], [0], [0, 1, 0, 0, 1, 0], [1], [1]>} : vector<8x4x8xbf16>, vector<8x4x8xbf16>, vector<4x8x8xf32> -> vector<4x8x8xf32>
    "tpu.trace_stop"() : () -> ()
    %59 = arith.addf %58, %10 : vector<4x8x8xf32>
    %cst_32 = arith.constant dense<0xFF800000> : vector<4x8xf32>
    %60 = vector.multi_reduction <maximumf>, %59, %cst_32 [2] : vector<4x8x8xf32> to vector<4x8xf32>
    %61 = vector.shape_cast %60 : vector<4x8xf32> to vector<4x8x1xf32>
    %62 = vector.broadcast %61 : vector<4x8x1xf32> to vector<4x8x8xf32>
    %63 = arith.subf %59, %62 : vector<4x8x8xf32>
    %64 = math.exp %63 : vector<4x8x8xf32>
    %cst_33 = arith.constant dense<0.000000e+00> : vector<4x8xf32>
    %65 = vector.multi_reduction <add>, %64, %cst_33 [2] : vector<4x8x8xf32> to vector<4x8xf32>
    %66 = vector.shape_cast %65 : vector<4x8xf32> to vector<4x8x1xf32>
    %67 = tpu.reciprocal %66 {approx = true} : vector<4x8x1xf32> -> vector<4x8x1xf32>
    %68 = vector.broadcast %67 : vector<4x8x1xf32> to vector<4x8x8xf32>
    %69 = arith.mulf %64, %68 : vector<4x8x8xf32>
    %70 = arith.truncf %69 : vector<4x8x8xf32> to vector<4x8x8xbf16>
    "tpu.trace_start"() <{level = 10 : i32, message = "hqk,khd->qhd"}> : () -> ()
    %cst_34 = arith.constant dense<0.000000e+00> : vector<4x8x8xf32>
    %71 = tpu.matmul %57, %70, %cst_34 {dimension_numbers = #tpu.dot_dimension_numbers<[0], [2], [2], [1], [0, 1, 0, 2, 1, 1], [1], [0]>} : vector<8x4x8xbf16>, vector<4x8x8xbf16>, vector<4x8x8xf32> -> vector<4x8x8xf32>
    %72 = tpu.transpose %71, [2, 0, 1] : vector<4x8x8xf32> -> vector<8x4x8xf32>
    "tpu.trace_stop"() : () -> ()
    %73 = vector.shape_cast %72 : vector<8x4x8xf32> to vector<8x32xf32>
    %74 = arith.truncf %73 : vector<8x32xf32> to vector<8x32xbf16>
    %cst_35 = arith.constant dense<0.000000e+00> : vector<8x32xf32>
    %75 = tpu.matmul %74, %51, %cst_35 {dimension_numbers = #tpu.dot_dimension_numbers<[1], [0], [0], [1], [0, 0, 1, 1], [], []>} : vector<8x32xbf16>, vector<32x32xbf16>, vector<8x32xf32> -> vector<8x32xf32>
    %76 = arith.addf %29, %75 : vector<8x32xf32>
    %c1 = arith.constant 1 : index
    %c0_36 = arith.constant 0 : index
    %77 = vector.load %arg7[%c1, %c0_36] : memref<7x32xf32, #tpu.memory_space<vmem>>, vector<1x32xf32>
    %78 = arith.mulf %76, %76 : vector<8x32xf32>
    %cst_37 = arith.constant dense<0.000000e+00> : vector<8xf32>
    %79 = vector.multi_reduction <add>, %78, %cst_37 [1] : vector<8x32xf32> to vector<8xf32>
    %80 = vector.shape_cast %79 : vector<8xf32> to vector<8x1xf32>
    %cst_38 = arith.constant 3.200000e+01 : f32
    %81 = vector.broadcast %cst_38 : f32 to vector<8x1xf32>
    %82 = arith.divf %80, %81 : vector<8x1xf32>
    %cst_39 = arith.constant 9.99999997E-7 : f32
    %83 = vector.broadcast %cst_39 : f32 to vector<8x1xf32>
    %84 = arith.addf %82, %83 : vector<8x1xf32>
    %85 = math.rsqrt %84 : vector<8x1xf32>
    %86 = vector.broadcast %85 : vector<8x1xf32> to vector<8x32xf32>
    %87 = arith.mulf %76, %86 : vector<8x32xf32>
    %88 = vector.broadcast %77 : vector<1x32xf32> to vector<8x32xf32>
    %89 = arith.mulf %87, %88 : vector<8x32xf32>
    %c0_40 = arith.constant 0 : index
    %c0_41 = arith.constant 0 : index
    %c0_42 = arith.constant 0 : index
    %90 = vector.load %arg11[%c0_40, %c0_41, %c0_42] : memref<1x32x64xbf16, #tpu.memory_space<vmem>>, vector<1x32x64xbf16>
    %91 = vector.shape_cast %90 : vector<1x32x64xbf16> to vector<32x64xbf16>
    %92 = arith.truncf %89 : vector<8x32xf32> to vector<8x32xbf16>
    %cst_43 = arith.constant dense<0.000000e+00> : vector<8x64xf32>
    %93 = tpu.matmul %92, %91, %cst_43 {dimension_numbers = #tpu.dot_dimension_numbers<[1], [0], [0], [1], [0, 0, 1, 1], [], []>} : vector<8x32xbf16>, vector<32x64xbf16>, vector<8x64xf32> -> vector<8x64xf32>
    %cst_44 = arith.constant 0.000000e+00 : f32
    %94 = vector.broadcast %cst_44 : f32 to vector<8x64xf32>
    %95 = arith.maximumf %93, %94 : vector<8x64xf32>
    %c0_45 = arith.constant 0 : index
    %c0_46 = arith.constant 0 : index
    %c0_47 = arith.constant 0 : index
    %96 = vector.load %arg12[%c0_45, %c0_46, %c0_47] : memref<1x64x32xbf16, #tpu.memory_space<vmem>>, vector<1x64x32xbf16>
    %97 = vector.shape_cast %96 : vector<1x64x32xbf16> to vector<64x32xbf16>
    %98 = arith.truncf %95 : vector<8x64xf32> to vector<8x64xbf16>
    %cst_48 = arith.constant dense<0.000000e+00> : vector<8x32xf32>
    %99 = tpu.matmul %98, %97, %cst_48 {dimension_numbers = #tpu.dot_dimension_numbers<[1], [0], [0], [1], [0, 0, 1, 1], [], []>} : vector<8x64xbf16>, vector<64x32xbf16>, vector<8x32xf32> -> vector<8x32xf32>
    %100 = arith.addf %76, %99 : vector<8x32xf32>
    %c2 = arith.constant 2 : index
    %c0_49 = arith.constant 0 : index
    %101 = vector.load %arg7[%c2, %c0_49] : memref<7x32xf32, #tpu.memory_space<vmem>>, vector<1x32xf32>
    %102 = arith.mulf %100, %100 : vector<8x32xf32>
    %cst_50 = arith.constant dense<0.000000e+00> : vector<8xf32>
    %103 = vector.multi_reduction <add>, %102, %cst_50 [1] : vector<8x32xf32> to vector<8xf32>
    %104 = vector.shape_cast %103 : vector<8xf32> to vector<8x1xf32>
    %cst_51 = arith.constant 3.200000e+01 : f32
    %105 = vector.broadcast %cst_51 : f32 to vector<8x1xf32>
    %106 = arith.divf %104, %105 : vector<8x1xf32>
    %cst_52 = arith.constant 9.99999997E-7 : f32
    %107 = vector.broadcast %cst_52 : f32 to vector<8x1xf32>
    %108 = arith.addf %106, %107 : vector<8x1xf32>
    %109 = math.rsqrt %108 : vector<8x1xf32>
    %110 = vector.broadcast %109 : vector<8x1xf32> to vector<8x32xf32>
    %111 = arith.mulf %100, %110 : vector<8x32xf32>
    %112 = vector.broadcast %101 : vector<1x32xf32> to vector<8x32xf32>
    %113 = arith.mulf %111, %112 : vector<8x32xf32>
    %c0_53 = arith.constant 0 : index
    %c0_54 = arith.constant 0 : index
    %c0_55 = arith.constant 0 : index
    %114 = vector.load %arg2[%c0_53, %c0_54, %c0_55] : memref<1x8x32xf32, #tpu.memory_space<vmem>>, vector<1x8x32xf32>
    %115 = vector.shape_cast %114 : vector<1x8x32xf32> to vector<8x32xf32>
    %c3 = arith.constant 3 : index
    %c0_56 = arith.constant 0 : index
    %116 = vector.load %arg7[%c3, %c0_56] : memref<7x32xf32, #tpu.memory_space<vmem>>, vector<1x32xf32>
    %117 = arith.mulf %115, %115 : vector<8x32xf32>
    %cst_57 = arith.constant dense<0.000000e+00> : vector<8xf32>
    %118 = vector.multi_reduction <add>, %117, %cst_57 [1] : vector<8x32xf32> to vector<8xf32>
    %119 = vector.shape_cast %118 : vector<8xf32> to vector<8x1xf32>
    %cst_58 = arith.constant 3.200000e+01 : f32
    %120 = vector.broadcast %cst_58 : f32 to vector<8x1xf32>
    %121 = arith.divf %119, %120 : vector<8x1xf32>
    %cst_59 = arith.constant 9.99999997E-7 : f32
    %122 = vector.broadcast %cst_59 : f32 to vector<8x1xf32>
    %123 = arith.addf %121, %122 : vector<8x1xf32>
    %124 = math.rsqrt %123 : vector<8x1xf32>
    %125 = vector.broadcast %124 : vector<8x1xf32> to vector<8x32xf32>
    %126 = arith.mulf %115, %125 : vector<8x32xf32>
    %127 = vector.broadcast %116 : vector<1x32xf32> to vector<8x32xf32>
    %128 = arith.mulf %126, %127 : vector<8x32xf32>
    %c0_60 = arith.constant 0 : index
    %c0_61 = arith.constant 0 : index
    %c0_62 = arith.constant 0 : index
    %129 = vector.load %arg13[%c0_60, %c0_61, %c0_62] : memref<1x32x128xbf16, #tpu.memory_space<vmem>>, vector<1x32x128xbf16>
    %130 = vector.shape_cast %129 : vector<1x32x128xbf16> to vector<32x128xbf16>
    %131 = arith.truncf %128 : vector<8x32xf32> to vector<8x32xbf16>
    %cst_63 = arith.constant dense<0.000000e+00> : vector<8x128xf32>
    %132 = tpu.matmul %131, %130, %cst_63 {dimension_numbers = #tpu.dot_dimension_numbers<[1], [0], [0], [1], [0, 0, 1, 1], [], []>} : vector<8x32xbf16>, vector<32x128xbf16>, vector<8x128xf32> -> vector<8x128xf32>
    %133 = vector.extract_strided_slice %132 {offsets = [0, 0], sizes = [8, 32], strides = [1, 1]} : vector<8x128xf32> to vector<8x32xf32>
    %134 = vector.extract_strided_slice %132 {offsets = [0, 32], sizes = [8, 32], strides = [1, 1]} : vector<8x128xf32> to vector<8x32xf32>
    %135 = vector.extract_strided_slice %132 {offsets = [0, 64], sizes = [8, 32], strides = [1, 1]} : vector<8x128xf32> to vector<8x32xf32>
    %c0_64 = arith.constant 0 : index
    %c0_65 = arith.constant 0 : index
    %c0_66 = arith.constant 0 : index
    %136 = vector.load %arg14[%c0_64, %c0_65, %c0_66] : memref<1x32x32xbf16, #tpu.memory_space<vmem>>, vector<1x32x32xbf16>
    %137 = vector.shape_cast %136 : vector<1x32x32xbf16> to vector<32x32xbf16>
    %138 = vector.shape_cast %133 : vector<8x32xf32> to vector<8x4x8xf32>
    %139 = arith.truncf %138 : vector<8x4x8xf32> to vector<8x4x8xbf16>
    %140 = vector.shape_cast %134 : vector<8x32xf32> to vector<8x4x8xf32>
    %141 = arith.truncf %140 : vector<8x4x8xf32> to vector<8x4x8xbf16>
    %142 = vector.shape_cast %135 : vector<8x32xf32> to vector<8x4x8xf32>
    %143 = arith.truncf %142 : vector<8x4x8xf32> to vector<8x4x8xbf16>
    "tpu.trace_start"() <{level = 10 : i32, message = "qhd,khd->hqk"}> : () -> ()
    %cst_67 = arith.constant dense<0.000000e+00> : vector<4x8x8xf32>
    %144 = tpu.matmul %139, %141, %cst_67 {dimension_numbers = #tpu.dot_dimension_numbers<[2], [2], [0], [0], [0, 1, 0, 0, 1, 0], [1], [1]>} : vector<8x4x8xbf16>, vector<8x4x8xbf16>, vector<4x8x8xf32> -> vector<4x8x8xf32>
    "tpu.trace_stop"() : () -> ()
    %145 = arith.addf %144, %26 : vector<4x8x8xf32>
    %cst_68 = arith.constant dense<0xFF800000> : vector<4x8xf32>
    %146 = vector.multi_reduction <maximumf>, %145, %cst_68 [2] : vector<4x8x8xf32> to vector<4x8xf32>
    %147 = vector.shape_cast %146 : vector<4x8xf32> to vector<4x8x1xf32>
    %148 = vector.broadcast %147 : vector<4x8x1xf32> to vector<4x8x8xf32>
    %149 = arith.subf %145, %148 : vector<4x8x8xf32>
    %150 = math.exp %149 : vector<4x8x8xf32>
    %cst_69 = arith.constant dense<0.000000e+00> : vector<4x8xf32>
    %151 = vector.multi_reduction <add>, %150, %cst_69 [2] : vector<4x8x8xf32> to vector<4x8xf32>
    %152 = vector.shape_cast %151 : vector<4x8xf32> to vector<4x8x1xf32>
    %153 = tpu.reciprocal %152 {approx = true} : vector<4x8x1xf32> -> vector<4x8x1xf32>
    %154 = vector.broadcast %153 : vector<4x8x1xf32> to vector<4x8x8xf32>
    %155 = arith.mulf %150, %154 : vector<4x8x8xf32>
    %156 = arith.truncf %155 : vector<4x8x8xf32> to vector<4x8x8xbf16>
    "tpu.trace_start"() <{level = 10 : i32, message = "hqk,khd->qhd"}> : () -> ()
    %cst_70 = arith.constant dense<0.000000e+00> : vector<4x8x8xf32>
    %157 = tpu.matmul %143, %156, %cst_70 {dimension_numbers = #tpu.dot_dimension_numbers<[0], [2], [2], [1], [0, 1, 0, 2, 1, 1], [1], [0]>} : vector<8x4x8xbf16>, vector<4x8x8xbf16>, vector<4x8x8xf32> -> vector<4x8x8xf32>
    %158 = tpu.transpose %157, [2, 0, 1] : vector<4x8x8xf32> -> vector<8x4x8xf32>
    "tpu.trace_stop"() : () -> ()
    %159 = vector.shape_cast %158 : vector<8x4x8xf32> to vector<8x32xf32>
    %160 = arith.truncf %159 : vector<8x32xf32> to vector<8x32xbf16>
    %cst_71 = arith.constant dense<0.000000e+00> : vector<8x32xf32>
    %161 = tpu.matmul %160, %137, %cst_71 {dimension_numbers = #tpu.dot_dimension_numbers<[1], [0], [0], [1], [0, 0, 1, 1], [], []>} : vector<8x32xbf16>, vector<32x32xbf16>, vector<8x32xf32> -> vector<8x32xf32>
    %162 = arith.addf %115, %161 : vector<8x32xf32>
    %c4 = arith.constant 4 : index
    %c0_72 = arith.constant 0 : index
    %163 = vector.load %arg7[%c4, %c0_72] : memref<7x32xf32, #tpu.memory_space<vmem>>, vector<1x32xf32>
    %164 = arith.mulf %162, %162 : vector<8x32xf32>
    %cst_73 = arith.constant dense<0.000000e+00> : vector<8xf32>
    %165 = vector.multi_reduction <add>, %164, %cst_73 [1] : vector<8x32xf32> to vector<8xf32>
    %166 = vector.shape_cast %165 : vector<8xf32> to vector<8x1xf32>
    %cst_74 = arith.constant 3.200000e+01 : f32
    %167 = vector.broadcast %cst_74 : f32 to vector<8x1xf32>
    %168 = arith.divf %166, %167 : vector<8x1xf32>
    %cst_75 = arith.constant 9.99999997E-7 : f32
    %169 = vector.broadcast %cst_75 : f32 to vector<8x1xf32>
    %170 = arith.addf %168, %169 : vector<8x1xf32>
    %171 = math.rsqrt %170 : vector<8x1xf32>
    %172 = vector.broadcast %171 : vector<8x1xf32> to vector<8x32xf32>
    %173 = arith.mulf %162, %172 : vector<8x32xf32>
    %174 = vector.broadcast %163 : vector<1x32xf32> to vector<8x32xf32>
    %175 = arith.mulf %173, %174 : vector<8x32xf32>
    %c0_76 = arith.constant 0 : index
    %c0_77 = arith.constant 0 : index
    %c0_78 = arith.constant 0 : index
    %176 = vector.load %arg15[%c0_76, %c0_77, %c0_78] : memref<1x32x32xbf16, #tpu.memory_space<vmem>>, vector<1x32x32xbf16>
    %177 = vector.shape_cast %176 : vector<1x32x32xbf16> to vector<32x32xbf16>
    %178 = arith.truncf %175 : vector<8x32xf32> to vector<8x32xbf16>
    %cst_79 = arith.constant dense<0.000000e+00> : vector<8x32xf32>
    %179 = tpu.matmul %178, %177, %cst_79 {dimension_numbers = #tpu.dot_dimension_numbers<[1], [0], [0], [1], [0, 0, 1, 1], [], []>} : vector<8x32xbf16>, vector<32x32xbf16>, vector<8x32xf32> -> vector<8x32xf32>
    %c0_80 = arith.constant 0 : index
    %c0_81 = arith.constant 0 : index
    %c0_82 = arith.constant 0 : index
    %180 = vector.load %arg16[%c0_80, %c0_81, %c0_82] : memref<1x32x128xbf16, #tpu.memory_space<vmem>>, vector<1x32x128xbf16>
    %181 = vector.shape_cast %180 : vector<1x32x128xbf16> to vector<32x128xbf16>
    %182 = arith.truncf %113 : vector<8x32xf32> to vector<8x32xbf16>
    %cst_83 = arith.constant dense<0.000000e+00> : vector<8x128xf32>
    %183 = tpu.matmul %182, %181, %cst_83 {dimension_numbers = #tpu.dot_dimension_numbers<[1], [0], [0], [1], [0, 0, 1, 1], [], []>} : vector<8x32xbf16>, vector<32x128xbf16>, vector<8x128xf32> -> vector<8x128xf32>
    %184 = vector.extract_strided_slice %183 {offsets = [0, 0], sizes = [8, 32], strides = [1, 1]} : vector<8x128xf32> to vector<8x32xf32>
    %185 = vector.extract_strided_slice %183 {offsets = [0, 32], sizes = [8, 32], strides = [1, 1]} : vector<8x128xf32> to vector<8x32xf32>
    %c0_84 = arith.constant 0 : index
    %c0_85 = arith.constant 0 : index
    %c0_86 = arith.constant 0 : index
    %186 = vector.load %arg17[%c0_84, %c0_85, %c0_86] : memref<1x32x32xbf16, #tpu.memory_space<vmem>>, vector<1x32x32xbf16>
    %187 = vector.shape_cast %186 : vector<1x32x32xbf16> to vector<32x32xbf16>
    %188 = vector.shape_cast %179 : vector<8x32xf32> to vector<8x4x8xf32>
    %189 = arith.truncf %188 : vector<8x4x8xf32> to vector<8x4x8xbf16>
    %190 = vector.shape_cast %184 : vector<8x32xf32> to vector<8x4x8xf32>
    %191 = arith.truncf %190 : vector<8x4x8xf32> to vector<8x4x8xbf16>
    %192 = vector.shape_cast %185 : vector<8x32xf32> to vector<8x4x8xf32>
    %193 = arith.truncf %192 : vector<8x4x8xf32> to vector<8x4x8xbf16>
    "tpu.trace_start"() <{level = 10 : i32, message = "qhd,khd->hqk"}> : () -> ()
    %cst_87 = arith.constant dense<0.000000e+00> : vector<4x8x8xf32>
    %194 = tpu.matmul %189, %191, %cst_87 {dimension_numbers = #tpu.dot_dimension_numbers<[2], [2], [0], [0], [0, 1, 0, 0, 1, 0], [1], [1]>} : vector<8x4x8xbf16>, vector<8x4x8xbf16>, vector<4x8x8xf32> -> vector<4x8x8xf32>
    "tpu.trace_stop"() : () -> ()
    %195 = vector.broadcast %27 : vector<1x1x8xf32> to vector<4x8x8xf32>
    %196 = arith.addf %194, %195 : vector<4x8x8xf32>
    %cst_88 = arith.constant dense<0xFF800000> : vector<4x8xf32>
    %197 = vector.multi_reduction <maximumf>, %196, %cst_88 [2] : vector<4x8x8xf32> to vector<4x8xf32>
    %198 = vector.shape_cast %197 : vector<4x8xf32> to vector<4x8x1xf32>
    %199 = vector.broadcast %198 : vector<4x8x1xf32> to vector<4x8x8xf32>
    %200 = arith.subf %196, %199 : vector<4x8x8xf32>
    %201 = math.exp %200 : vector<4x8x8xf32>
    %cst_89 = arith.constant dense<0.000000e+00> : vector<4x8xf32>
    %202 = vector.multi_reduction <add>, %201, %cst_89 [2] : vector<4x8x8xf32> to vector<4x8xf32>
    %203 = vector.shape_cast %202 : vector<4x8xf32> to vector<4x8x1xf32>
    %204 = tpu.reciprocal %203 {approx = true} : vector<4x8x1xf32> -> vector<4x8x1xf32>
    %205 = vector.broadcast %204 : vector<4x8x1xf32> to vector<4x8x8xf32>
    %206 = arith.mulf %201, %205 : vector<4x8x8xf32>
    %207 = arith.truncf %206 : vector<4x8x8xf32> to vector<4x8x8xbf16>
    "tpu.trace_start"() <{level = 10 : i32, message = "hqk,khd->qhd"}> : () -> ()
    %cst_90 = arith.constant dense<0.000000e+00> : vector<4x8x8xf32>
    %208 = tpu.matmul %193, %207, %cst_90 {dimension_numbers = #tpu.dot_dimension_numbers<[0], [2], [2], [1], [0, 1, 0, 2, 1, 1], [1], [0]>} : vector<8x4x8xbf16>, vector<4x8x8xbf16>, vector<4x8x8xf32> -> vector<4x8x8xf32>
    %209 = tpu.transpose %208, [2, 0, 1] : vector<4x8x8xf32> -> vector<8x4x8xf32>
    "tpu.trace_stop"() : () -> ()
    %210 = vector.shape_cast %209 : vector<8x4x8xf32> to vector<8x32xf32>
    %211 = arith.truncf %210 : vector<8x32xf32> to vector<8x32xbf16>
    %cst_91 = arith.constant dense<0.000000e+00> : vector<8x32xf32>
    %212 = tpu.matmul %211, %187, %cst_91 {dimension_numbers = #tpu.dot_dimension_numbers<[1], [0], [0], [1], [0, 0, 1, 1], [], []>} : vector<8x32xbf16>, vector<32x32xbf16>, vector<8x32xf32> -> vector<8x32xf32>
    %213 = arith.addf %162, %212 : vector<8x32xf32>
    %c5 = arith.constant 5 : index
    %c0_92 = arith.constant 0 : index
    %214 = vector.load %arg7[%c5, %c0_92] : memref<7x32xf32, #tpu.memory_space<vmem>>, vector<1x32xf32>
    %215 = arith.mulf %213, %213 : vector<8x32xf32>
    %cst_93 = arith.constant dense<0.000000e+00> : vector<8xf32>
    %216 = vector.multi_reduction <add>, %215, %cst_93 [1] : vector<8x32xf32> to vector<8xf32>
    %217 = vector.shape_cast %216 : vector<8xf32> to vector<8x1xf32>
    %cst_94 = arith.constant 3.200000e+01 : f32
    %218 = vector.broadcast %cst_94 : f32 to vector<8x1xf32>
    %219 = arith.divf %217, %218 : vector<8x1xf32>
    %cst_95 = arith.constant 9.99999997E-7 : f32
    %220 = vector.broadcast %cst_95 : f32 to vector<8x1xf32>
    %221 = arith.addf %219, %220 : vector<8x1xf32>
    %222 = math.rsqrt %221 : vector<8x1xf32>
    %223 = vector.broadcast %222 : vector<8x1xf32> to vector<8x32xf32>
    %224 = arith.mulf %213, %223 : vector<8x32xf32>
    %225 = vector.broadcast %214 : vector<1x32xf32> to vector<8x32xf32>
    %226 = arith.mulf %224, %225 : vector<8x32xf32>
    %c0_96 = arith.constant 0 : index
    %c0_97 = arith.constant 0 : index
    %c0_98 = arith.constant 0 : index
    %227 = vector.load %arg18[%c0_96, %c0_97, %c0_98] : memref<1x32x64xbf16, #tpu.memory_space<vmem>>, vector<1x32x64xbf16>
    %228 = vector.shape_cast %227 : vector<1x32x64xbf16> to vector<32x64xbf16>
    %229 = arith.truncf %226 : vector<8x32xf32> to vector<8x32xbf16>
    %cst_99 = arith.constant dense<0.000000e+00> : vector<8x64xf32>
    %230 = tpu.matmul %229, %228, %cst_99 {dimension_numbers = #tpu.dot_dimension_numbers<[1], [0], [0], [1], [0, 0, 1, 1], [], []>} : vector<8x32xbf16>, vector<32x64xbf16>, vector<8x64xf32> -> vector<8x64xf32>
    %cst_100 = arith.constant 0.000000e+00 : f32
    %231 = vector.broadcast %cst_100 : f32 to vector<8x64xf32>
    %232 = arith.maximumf %230, %231 : vector<8x64xf32>
    %c0_101 = arith.constant 0 : index
    %c0_102 = arith.constant 0 : index
    %c0_103 = arith.constant 0 : index
    %233 = vector.load %arg19[%c0_101, %c0_102, %c0_103] : memref<1x64x32xbf16, #tpu.memory_space<vmem>>, vector<1x64x32xbf16>
    %234 = vector.shape_cast %233 : vector<1x64x32xbf16> to vector<64x32xbf16>
    %235 = arith.truncf %232 : vector<8x64xf32> to vector<8x64xbf16>
    %cst_104 = arith.constant dense<0.000000e+00> : vector<8x32xf32>
    %236 = tpu.matmul %235, %234, %cst_104 {dimension_numbers = #tpu.dot_dimension_numbers<[1], [0], [0], [1], [0, 0, 1, 1], [], []>} : vector<8x64xbf16>, vector<64x32xbf16>, vector<8x32xf32> -> vector<8x32xf32>
    %237 = arith.addf %213, %236 : vector<8x32xf32>
    %c6 = arith.constant 6 : index
    %c0_105 = arith.constant 0 : index
    %238 = vector.load %arg7[%c6, %c0_105] : memref<7x32xf32, #tpu.memory_space<vmem>>, vector<1x32xf32>
    %239 = arith.mulf %237, %237 : vector<8x32xf32>
    %cst_106 = arith.constant dense<0.000000e+00> : vector<8xf32>
    %240 = vector.multi_reduction <add>, %239, %cst_106 [1] : vector<8x32xf32> to vector<8xf32>
    %241 = vector.shape_cast %240 : vector<8xf32> to vector<8x1xf32>
    %cst_107 = arith.constant 3.200000e+01 : f32
    %242 = vector.broadcast %cst_107 : f32 to vector<8x1xf32>
    %243 = arith.divf %241, %242 : vector<8x1xf32>
    %cst_108 = arith.constant 9.99999997E-7 : f32
    %244 = vector.broadcast %cst_108 : f32 to vector<8x1xf32>
    %245 = arith.addf %243, %244 : vector<8x1xf32>
    %246 = math.rsqrt %245 : vector<8x1xf32>
    %247 = vector.broadcast %246 : vector<8x1xf32> to vector<8x32xf32>
    %248 = arith.mulf %237, %247 : vector<8x32xf32>
    %249 = vector.broadcast %238 : vector<1x32xf32> to vector<8x32xf32>
    %250 = arith.mulf %248, %249 : vector<8x32xf32>
    %cst_109 = arith.constant 0.176776692 : f32
    %251 = vector.broadcast %cst_109 : f32 to vector<8x32xf32>
    %252 = arith.mulf %250, %251 : vector<8x32xf32>
    %253 = arith.truncf %252 : vector<8x32xf32> to vector<8x32xbf16>
    %c0_110 = arith.constant 0 : index
    %c0_111 = arith.constant 0 : index
    %254 = vector.load %arg8[%c0_110, %c0_111] : memref<32x128xbf16, #tpu.memory_space<vmem>>, vector<32x128xbf16>
    %cst_112 = arith.constant dense<0.000000e+00> : vector<8x128xf32>
    %255 = tpu.matmul %253, %254, %cst_112 {dimension_numbers = #tpu.dot_dimension_numbers<[1], [0], [0], [1], [0, 0, 1, 1], [], []>} : vector<8x32xbf16>, vector<32x128xbf16>, vector<8x128xf32> -> vector<8x128xf32>
    %c0_113 = arith.constant 0 : index
    %c0_114 = arith.constant 0 : index
    %c0_115 = arith.constant 0 : index
    %256 = vector.load %arg20[%c0_113, %c0_114, %c0_115] : memref<1x8x128xf32, #tpu.memory_space<vmem>>, vector<1x8x128xf32>
    %257 = vector.shape_cast %256 : vector<1x8x128xf32> to vector<8x128xf32>
    %258 = vector.shape_cast %255 : vector<8x128xf32> to vector<1x8x128xf32>
    tpu.vector_store %arg20[%c0_113, %c0_114, %c0_115], %258 {strides = array<i32>} : memref<1x8x128xf32, #tpu.memory_space<vmem>>, vector<1x8x128xf32>,
    return
  }
  func.func @transform_0(%arg0: i32) -> (i32, i32, i32) {
    %c0_i32 = arith.constant 0 : i32
    %c0_i32_0 = arith.constant 0 : i32
    %c0_i32_1 = arith.constant 0 : i32
    return %arg0, %c0_i32, %c0_i32_0 : i32, i32, i32
  }
  func.func @transform_1(%arg0: i32) -> (i32, i32, i32) {
    %c0_i32 = arith.constant 0 : i32
    %c0_i32_0 = arith.constant 0 : i32
    %c0_i32_1 = arith.constant 0 : i32
    return %arg0, %c0_i32, %c0_i32_0 : i32, i32, i32
  }
  func.func @transform_2(%arg0: i32) -> (i32, i32, i32) {
    %c0_i32 = arith.constant 0 : i32
    %c0_i32_0 = arith.constant 0 : i32
    %c0_i32_1 = arith.constant 0 : i32
    %c0_i32_2 = arith.constant 0 : i32
    return %c0_i32, %c0_i32_0, %c0_i32_1 : i32, i32, i32
  }
  func.func @transform_3(%arg0: i32) -> (i32, i32, i32) {
    %c0_i32 = arith.constant 0 : i32
    %c0_i32_0 = arith.constant 0 : i32
    %c0_i32_1 = arith.constant 0 : i32
    %c0_i32_2 = arith.constant 0 : i32
    return %c0_i32, %c0_i32_0, %c0_i32_1 : i32, i32, i32
  }
  func.func @transform_4(%arg0: i32) -> (i32, i32, i32) {
    %c0_i32 = arith.constant 0 : i32
    %c0_i32_0 = arith.constant 0 : i32
    %c0_i32_1 = arith.constant 0 : i32
    return %arg0, %c0_i32, %c0_i32_0 : i32, i32, i32
  }
  func.func @transform_5(%arg0: i32) -> (i32, i32, i32) {
    %c0_i32 = arith.constant 0 : i32
    %c0_i32_0 = arith.constant 0 : i32
    %c0_i32_1 = arith.constant 0 : i32
    return %arg0, %c0_i32, %c0_i32_0 : i32, i32, i32
  }
  func.func @transform_6(%arg0: i32) -> (i32, i32) {
    %c0_i32 = arith.constant 0 : i32
    %c0_i32_0 = arith.constant 0 : i32
    %c0_i32_1 = arith.constant 0 : i32
    return %c0_i32, %c0_i32_0 : i32, i32
  }
  func.func @transform_7(%arg0: i32) -> (i32, i32) {
    %c0_i32 = arith.constant 0 : i32
    %c0_i32_0 = arith.constant 0 : i32
    %c0_i32_1 = arith.constant 0 : i32
    return %c0_i32, %c0_i32_0 : i32, i32
  }
  func.func @transform_8(%arg0: i32) -> (i32, i32, i32) {
    %c0_i32 = arith.constant 0 : i32
    %c0_i32_0 = arith.constant 0 : i32
    %c0_i32_1 = arith.constant 0 : i32
    %c0_i32_2 = arith.constant 0 : i32
    return %c0_i32, %c0_i32_0, %c0_i32_1 : i32, i32, i32
  }
  func.func @transform_9(%arg0: i32) -> (i32, i32, i32) {
    %c0_i32 = arith.constant 0 : i32
    %c0_i32_0 = arith.constant 0 : i32
    %c0_i32_1 = arith.constant 0 : i32
    %c0_i32_2 = arith.constant 0 : i32
    return %c0_i32, %c0_i32_0, %c0_i32_1 : i32, i32, i32
  }
  func.func @transform_10(%arg0: i32) -> (i32, i32, i32) {
    %c0_i32 = arith.constant 0 : i32
    %c0_i32_0 = arith.constant 0 : i32
    %c0_i32_1 = arith.constant 0 : i32
    %c0_i32_2 = arith.constant 0 : i32
    return %c0_i32, %c0_i32_0, %c0_i32_1 : i32, i32, i32
  }
  func.func @transform_11(%arg0: i32) -> (i32, i32, i32) {
    %c0_i32 = arith.constant 0 : i32
    %c0_i32_0 = arith.constant 0 : i32
    %c0_i32_1 = arith.constant 0 : i32
    %c0_i32_2 = arith.constant 0 : i32
    return %c0_i32, %c0_i32_0, %c0_i32_1 : i32, i32, i32
  }
  func.func @transform_12(%arg0: i32) -> (i32, i32, i32) {
    %c0_i32 = arith.constant 0 : i32
    %c0_i32_0 = arith.constant 0 : i32
    %c0_i32_1 = arith.constant 0 : i32
    %c0_i32_2 = arith.constant 0 : i32
    return %c0_i32, %c0_i32_0, %c0_i32_1 : i32, i32, i32
  }
  func.func @transform_13(%arg0: i32) -> (i32, i32, i32) {
    %c0_i32 = arith.constant 0 : i32
    %c0_i32_0 = arith.constant 0 : i32
    %c0_i32_1 = arith.constant 0 : i32
    %c0_i32_2 = arith.constant 0 : i32
    return %c0_i32, %c0_i32_0, %c0_i32_1 : i32, i32, i32
  }
  func.func @transform_14(%arg0: i32) -> (i32, i32, i32) {
    %c0_i32 = arith.constant 0 : i32
    %c0_i32_0 = arith.constant 0 : i32
    %c0_i32_1 = arith.constant 0 : i32
    %c0_i32_2 = arith.constant 0 : i32
    return %c0_i32, %c0_i32_0, %c0_i32_1 : i32, i32, i32
  }
  func.func @transform_15(%arg0: i32) -> (i32, i32, i32) {
    %c0_i32 = arith.constant 0 : i32
    %c0_i32_0 = arith.constant 0 : i32
    %c0_i32_1 = arith.constant 0 : i32
    %c0_i32_2 = arith.constant 0 : i32
    return %c0_i32, %c0_i32_0, %c0_i32_1 : i32, i32, i32
  }
  func.func @transform_16(%arg0: i32) -> (i32, i32, i32) {
    %c0_i32 = arith.constant 0 : i32
    %c0_i32_0 = arith.constant 0 : i32
    %c0_i32_1 = arith.constant 0 : i32
    %c0_i32_2 = arith.constant 0 : i32
    return %c0_i32, %c0_i32_0, %c0_i32_1 : i32, i32, i32
  }
  func.func @transform_17(%arg0: i32) -> (i32, i32, i32) {
    %c0_i32 = arith.constant 0 : i32
    %c0_i32_0 = arith.constant 0 : i32
    %c0_i32_1 = arith.constant 0 : i32
    %c0_i32_2 = arith.constant 0 : i32
    return %c0_i32, %c0_i32_0, %c0_i32_1 : i32, i32, i32
  }
  func.func @transform_18(%arg0: i32) -> (i32, i32, i32) {
    %c0_i32 = arith.constant 0 : i32
    %c0_i32_0 = arith.constant 0 : i32
    %c0_i32_1 = arith.constant 0 : i32
    %c0_i32_2 = arith.constant 0 : i32
    return %c0_i32, %c0_i32_0, %c0_i32_1 : i32, i32, i32
  }
  func.func @transform_19(%arg0: i32) -> (i32, i32, i32) {
    %c0_i32 = arith.constant 0 : i32
    %c0_i32_0 = arith.constant 0 : i32
    %c0_i32_1 = arith.constant 0 : i32
    return %arg0, %c0_i32, %c0_i32_0 : i32, i32, i32
  }
}

</mosaic_0001>

<llo_original>
// kernel: reprover_forward.1
$region0: #{reprover_forward.1}
  #allocation0 [shape = 'u32[]', space=smem, size = 0x4, offset = 0x4, fixed_abs, tag = 'smem constant byte address 0x4 - core index']
  #allocation1 [shape = 'u32[72,128]{1,0:T(1,128)}', space=vmem, size = 0x9000, scoped, tag = 'internal scratch']
  %s0 = inlined_call_operand.vmem [shape: f32[2,8,32], index: 0, kind: input, shape index: {}]
  %s1 = inlined_call_operand.vmem [shape: f32[2,8,32], index: 1, kind: input, shape index: {}]
  %s2 = inlined_call_operand.vmem [shape: f32[4,8,8], index: 2, kind: input, shape index: {}]
  %s3 = inlined_call_operand.vmem [shape: f32[4,8,8], index: 3, kind: input, shape index: {}]
  %s4 = inlined_call_operand.vmem [shape: f32[2,1,8], index: 4, kind: input, shape index: {}]
  %s5 = inlined_call_operand.vmem [shape: f32[2,1,8], index: 5, kind: input, shape index: {}]
  %s6 = inlined_call_operand.vmem [shape: f32[7,32], index: 6, kind: input, shape index: {}]
  %s7 = inlined_call_operand.vmem [shape: bf16[32,128], index: 7, kind: input, shape index: {}]
  %s8 = inlined_call_operand.vmem [shape: bf16[1,32,128], index: 8, kind: input, shape index: {}]
  %s9 = inlined_call_operand.vmem [shape: bf16[1,32,32], index: 9, kind: input, shape index: {}]
  %s10 = inlined_call_operand.vmem [shape: bf16[1,32,64], index: 10, kind: input, shape index: {}]
  %s11 = inlined_call_operand.vmem [shape: bf16[1,64,32], index: 11, kind: input, shape index: {}]
  %s12 = inlined_call_operand.vmem [shape: bf16[1,32,128], index: 12, kind: input, shape index: {}]
  %s13 = inlined_call_operand.vmem [shape: bf16[1,32,32], index: 13, kind: input, shape index: {}]
  %s14 = inlined_call_operand.vmem [shape: bf16[1,32,32], index: 14, kind: input, shape index: {}]
  %s15 = inlined_call_operand.vmem [shape: bf16[1,32,128], index: 15, kind: input, shape index: {}]
  %s16 = inlined_call_operand.vmem [shape: bf16[1,32,32], index: 16, kind: input, shape index: {}]
  %s17 = inlined_call_operand.vmem [shape: bf16[1,32,64], index: 17, kind: input, shape index: {}]
  %s18 = inlined_call_operand.vmem [shape: bf16[1,64,32], index: 18, kind: input, shape index: {}]
  %s19 = inlined_call_operand.hbm [shape: f32[2,8,128], index: 19, kind: output, shape index: {}]
  %s20 = sld [smem:[#allocation0]]
  $region109: #{reprover_forward.1} parent=0
    _
  %s22 = ssub.s32 1, %s20
  %s23 = scalar_select 0, %s22, %s20
  $region1: #{reprover_forward.1} parent=0
    #allocation2 [shape = 'u8[8192]{0}', space=vmem, size = 0x2000, scoped, tag = 'output window, operand 0']
    #allocation3 [shape = 's32[2]{0}', space=sflag, size = 0x8, scoped, tag = 'scoped memory for reprover_forward.1']
    %24 = vsyncpa [#allocation3], 0
    %s25 = scalar_lea.sflag [#allocation3], 1
    %26 = vsyncpa %s25, 0
    loop: start=0, step=1, limit=4
    $region2: #{reprover_forward.1} parent=1 // loop_pre_header
      _
    $region3: #{reprover_forward.1} parent=1 // loop_header
      %s28 = sphi 0, %s32
      %p29 = scmp.ge.s32.totalorder %s28, 4
      %s38 = sphi 0, %s40
      %s41 = sphi 0, %s38
      %s42 = sphi 0, %s41
      %s58 = sphi 0, %s42
      %s64 = sphi 0, %s66
      %s67 = sphi 0, %s64
      %s68 = sphi 0, %s67
      %s84 = sphi 0, %s68
      %s88 = sphi 0, %s88
      %s90 = sphi 0, %s88
      %s91 = sphi 0, %s90
      %s105 = sphi 0, %s91
      %s109 = sphi 0, %s109
      %s111 = sphi 0, %s109
      %s112 = sphi 0, %s111
      %s126 = sphi 0, %s112
      %s132 = sphi 0, %s134
      %s135 = sphi 0, %s132
      %s136 = sphi 0, %s135
      %s152 = sphi 0, %s136
      %s158 = sphi 0, %s160
      %s161 = sphi 0, %s158
      %s162 = sphi 0, %s161
      %s178 = sphi 0, %s162
      %s182 = sphi 0, %s182
      %s184 = sphi 0, %s182
      %s185 = sphi 0, %s184
      %s199 = sphi 0, %s185
      %s203 = sphi 0, %s203
      %s205 = sphi 0, %s203
      %s206 = sphi 0, %s205
      %s220 = sphi 0, %s206
      %s224 = sphi 0, %s224
      %s226 = sphi 0, %s224
      %s227 = sphi 0, %s226
      %s241 = sphi 0, %s227
      %s245 = sphi 0, %s245
      %s247 = sphi 0, %s245
      %s248 = sphi 0, %s247
      %s262 = sphi 0, %s248
      %s266 = sphi 0, %s266
      %s268 = sphi 0, %s266
      %s269 = sphi 0, %s268
      %s283 = sphi 0, %s269
      %s287 = sphi 0, %s287
      %s289 = sphi 0, %s287
      %s290 = sphi 0, %s289
      %s304 = sphi 0, %s290
      %s308 = sphi 0, %s308
      %s310 = sphi 0, %s308
      %s311 = sphi 0, %s310
      %s325 = sphi 0, %s311
      %s329 = sphi 0, %s329
      %s331 = sphi 0, %s329
      %s332 = sphi 0, %s331
      %s346 = sphi 0, %s332
      %s350 = sphi 0, %s350
      %s352 = sphi 0, %s350
      %s353 = sphi 0, %s352
      %s367 = sphi 0, %s353
      %s371 = sphi 0, %s371
      %s373 = sphi 0, %s371
      %s374 = sphi 0, %s373
      %s388 = sphi 0, %s374
      %s392 = sphi 0, %s392
      %s394 = sphi 0, %s392
      %s395 = sphi 0, %s394
      %s409 = sphi 0, %s395
      %s413 = sphi 0, %s413
      %s415 = sphi 0, %s413
      %s416 = sphi 0, %s415
      %s430 = sphi 0, %s416
      %s434 = sphi 0, %s434
      %s436 = sphi 0, %s434
      %s437 = sphi 0, %s436
      %s451 = sphi 0, %s437
      %s457 = sphi 0, %s459
      %s460 = sphi 0, %s457
      %s461 = sphi 0, %s460
      %s477 = sphi 0, %s461
    $region4: #{reprover_forward.1} parent=1 // loop_header_branch
      %31 = sbr.rel (%p29) target = $region8
    $region5: #{reprover_forward.1} parent=1 // loop_body
      %s33 = ssub.s32 %s28, 1
      %s34 = ssub.s32 %s28, 2
      %s35 = sadd.s32 %s28, 1
      %s36 = ssub.s32 %s28, %s35
      %p37 = scmp.eq.s32.totalorder %s36, 0
      %s39 = sadd.s32 %s38, 1
      %s40 = scalar_select %p37, %s38, %s39
      %p43 = pneg %p37
      %p44 = scmp.eq.s32.totalorder %s28, 1
      %p45 = por %p43, %p44
      %p46 = scmp.ne.s32.totalorder %s38, %s41
      %p47 = scmp.eq.s32.totalorder %s28, 0
      %p48 = por %p46, %p47
      %p49 = scmp.ne.s32.totalorder %s38, %s41
      %p50 = scmp.eq.s32.totalorder %s33, 1
      %p51 = por %p49, %p50
      %p52 = scmp.ne.s32.totalorder %s41, %s42
      %p53 = scmp.eq.s32.totalorder %s33, 0
      %p54 = por %p52, %p53
      %p55 = scmp.ne.s32.totalorder %s41, %s42
      %p56 = scmp.eq.s32.totalorder %s34, 1
      %p57 = por %p55, %p56
      %p59 = scmp.ne.s32.totalorder %s42, %s58
      %p60 = scmp.eq.s32.totalorder %s34, 0
      %p61 = por %p59, %p60
      %s62 = ssub.s32 %s28, %s35
      %p63 = scmp.eq.s32.totalorder %s62, 0
      %s65 = sadd.s32 %s64, 1
      %s66 = scalar_select %p63, %s64, %s65
      %p69 = pneg %p63
      %p70 = scmp.eq.s32.totalorder %s28, 1
      %p71 = por %p69, %p70
      %p72 = scmp.ne.s32.totalorder %s64, %s67
      %p73 = scmp.eq.s32.totalorder %s28, 0
      %p74 = por %p72, %p73
      %p75 = scmp.ne.s32.totalorder %s64, %s67
      %p76 = scmp.eq.s32.totalorder %s33, 1
      %p77 = por %p75, %p76
      %p78 = scmp.ne.s32.totalorder %s67, %s68
      %p79 = scmp.eq.s32.totalorder %s33, 0
      %p80 = por %p78, %p79
      %p81 = scmp.ne.s32.totalorder %s67, %s68
      %p82 = scmp.eq.s32.totalorder %s34, 1
      %p83 = por %p81, %p82
      %p85 = scmp.ne.s32.totalorder %s68, %s84
      %p86 = scmp.eq.s32.totalorder %s34, 0
      %p87 = por %p85, %p86
      %s89 = sadd.s32 %s88, 1
      %p92 = scmp.eq.s32.totalorder %s28, 1
      %p93 = scmp.ne.s32.totalorder %s88, %s90
      %p94 = scmp.eq.s32.totalorder %s28, 0
      %p95 = por %p93, %p94
      %p96 = scmp.ne.s32.totalorder %s88, %s90
      %p97 = scmp.eq.s32.totalorder %s33, 1
      %p98 = por %p96, %p97
      %p99 = scmp.ne.s32.totalorder %s90, %s91
      %p100 = scmp.eq.s32.totalorder %s33, 0
      %p101 = por %p99, %p100
      %p102 = scmp.ne.s32.totalorder %s90, %s91
      %p103 = scmp.eq.s32.totalorder %s34, 1
      %p104 = por %p102, %p103
      %p106 = scmp.ne.s32.totalorder %s91, %s105
      %p107 = scmp.eq.s32.totalorder %s34, 0
      %p108 = por %p106, %p107
      %s110 = sadd.s32 %s109, 1
      %p113 = scmp.eq.s32.totalorder %s28, 1
      %p114 = scmp.ne.s32.totalorder %s109, %s111
      %p115 = scmp.eq.s32.totalorder %s28, 0
      %p116 = por %p114, %p115
      %p117 = scmp.ne.s32.totalorder %s109, %s111
      %p118 = scmp.eq.s32.totalorder %s33, 1
      %p119 = por %p117, %p118
      %p120 = scmp.ne.s32.totalorder %s111, %s112
      %p121 = scmp.eq.s32.totalorder %s33, 0
      %p122 = por %p120, %p121
      %p123 = scmp.ne.s32.totalorder %s111, %s112
      %p124 = scmp.eq.s32.totalorder %s34, 1
      %p125 = por %p123, %p124
      %p127 = scmp.ne.s32.totalorder %s112, %s126
      %p128 = scmp.eq.s32.totalorder %s34, 0
      %p129 = por %p127, %p128
      %s130 = ssub.s32 %s28, %s35
      %p131 = scmp.eq.s32.totalorder %s130, 0
      %s133 = sadd.s32 %s132, 1
      %s134 = scalar_select %p131, %s132, %s133
      %p137 = pneg %p131
      %p138 = scmp.eq.s32.totalorder %s28, 1
      %p139 = por %p137, %p138
      %p140 = scmp.ne.s32.totalorder %s132, %s135
      %p141 = scmp.eq.s32.totalorder %s28, 0
      %p142 = por %p140, %p141
      %p143 = scmp.ne.s32.totalorder %s132, %s135
      %p144 = scmp.eq.s32.totalorder %s33, 1
      %p145 = por %p143, %p144
      %p146 = scmp.ne.s32.totalorder %s135, %s136
      %p147 = scmp.eq.s32.totalorder %s33, 0
      %p148 = por %p146, %p147
      %p149 = scmp.ne.s32.totalorder %s135, %s136
      %p150 = scmp.eq.s32.totalorder %s34, 1
      %p151 = por %p149, %p150
      %p153 = scmp.ne.s32.totalorder %s136, %s152
      %p154 = scmp.eq.s32.totalorder %s34, 0
      %p155 = por %p153, %p154
      %s156 = ssub.s32 %s28, %s35
      %p157 = scmp.eq.s32.totalorder %s156, 0
      %s159 = sadd.s32 %s158, 1
      %s160 = scalar_select %p157, %s158, %s159
      %p163 = pneg %p157
      %p164 = scmp.eq.s32.totalorder %s28, 1
      %p165 = por %p163, %p164
      %p166 = scmp.ne.s32.totalorder %s158, %s161
      %p167 = scmp.eq.s32.totalorder %s28, 0
      %p168 = por %p166, %p167
      %p169 = scmp.ne.s32.totalorder %s158, %s161
      %p170 = scmp.eq.s32.totalorder %s33, 1
      %p171 = por %p169, %p170
      %p172 = scmp.ne.s32.totalorder %s161, %s162
      %p173 = scmp.eq.s32.totalorder %s33, 0
      %p174 = por %p172, %p173
      %p175 = scmp.ne.s32.totalorder %s161, %s162
      %p176 = scmp.eq.s32.totalorder %s34, 1
      %p177 = por %p175, %p176
      %p179 = scmp.ne.s32.totalorder %s162, %s178
      %p180 = scmp.eq.s32.totalorder %s34, 0
      %p181 = por %p179, %p180
      %s183 = sadd.s32 %s182, 1
      %p186 = scmp.eq.s32.totalorder %s28, 1
      %p187 = scmp.ne.s32.totalorder %s182, %s184
      %p188 = scmp.eq.s32.totalorder %s28, 0
      %p189 = por %p187, %p188
      %p190 = scmp.ne.s32.totalorder %s182, %s184
      %p191 = scmp.eq.s32.totalorder %s33, 1
      %p192 = por %p190, %p191
      %p193 = scmp.ne.s32.totalorder %s184, %s185
      %p194 = scmp.eq.s32.totalorder %s33, 0
      %p195 = por %p193, %p194
      %p196 = scmp.ne.s32.totalorder %s184, %s185
      %p197 = scmp.eq.s32.totalorder %s34, 1
      %p198 = por %p196, %p197
      %p200 = scmp.ne.s32.totalorder %s185, %s199
      %p201 = scmp.eq.s32.totalorder %s34, 0
      %p202 = por %p200, %p201
      %s204 = sadd.s32 %s203, 1
      %p207 = scmp.eq.s32.totalorder %s28, 1
      %p208 = scmp.ne.s32.totalorder %s203, %s205
      %p209 = scmp.eq.s32.totalorder %s28, 0
      %p210 = por %p208, %p209
      %p211 = scmp.ne.s32.totalorder %s203, %s205
      %p212 = scmp.eq.s32.totalorder %s33, 1
      %p213 = por %p211, %p212
      %p214 = scmp.ne.s32.totalorder %s205, %s206
      %p215 = scmp.eq.s32.totalorder %s33, 0
      %p216 = por %p214, %p215
      %p217 = scmp.ne.s32.totalorder %s205, %s206
      %p218 = scmp.eq.s32.totalorder %s34, 1
      %p219 = por %p217, %p218
      %p221 = scmp.ne.s32.totalorder %s206, %s220
      %p222 = scmp.eq.s32.totalorder %s34, 0
      %p223 = por %p221, %p222
      %s225 = sadd.s32 %s224, 1
      %p228 = scmp.eq.s32.totalorder %s28, 1
      %p229 = scmp.ne.s32.totalorder %s224, %s226
      %p230 = scmp.eq.s32.totalorder %s28, 0
      %p231 = por %p229, %p230
      %p232 = scmp.ne.s32.totalorder %s224, %s226
      %p233 = scmp.eq.s32.totalorder %s33, 1
      %p234 = por %p232, %p233
      %p235 = scmp.ne.s32.totalorder %s226, %s227
      %p236 = scmp.eq.s32.totalorder %s33, 0
      %p237 = por %p235, %p236
      %p238 = scmp.ne.s32.totalorder %s226, %s227
      %p239 = scmp.eq.s32.totalorder %s34, 1
      %p240 = por %p238, %p239
      %p242 = scmp.ne.s32.totalorder %s227, %s241
      %p243 = scmp.eq.s32.totalorder %s34, 0
      %p244 = por %p242, %p243
      %s246 = sadd.s32 %s245, 1
      %p249 = scmp.eq.s32.totalorder %s28, 1
      %p250 = scmp.ne.s32.totalorder %s245, %s247
      %p251 = scmp.eq.s32.totalorder %s28, 0
      %p252 = por %p250, %p251
      %p253 = scmp.ne.s32.totalorder %s245, %s247
      %p254 = scmp.eq.s32.totalorder %s33, 1
      %p255 = por %p253, %p254
      %p256 = scmp.ne.s32.totalorder %s247, %s248
      %p257 = scmp.eq.s32.totalorder %s33, 0
      %p258 = por %p256, %p257
      %p259 = scmp.ne.s32.totalorder %s247, %s248
      %p260 = scmp.eq.s32.totalorder %s34, 1
      %p261 = por %p259, %p260
      %p263 = scmp.ne.s32.totalorder %s248, %s262
      %p264 = scmp.eq.s32.totalorder %s34, 0
      %p265 = por %p263, %p264
      %s267 = sadd.s32 %s266, 1
      %p270 = scmp.eq.s32.totalorder %s28, 1
      %p271 = scmp.ne.s32.totalorder %s266, %s268
      %p272 = scmp.eq.s32.totalorder %s28, 0
      %p273 = por %p271, %p272
      %p274 = scmp.ne.s32.totalorder %s266, %s268
      %p275 = scmp.eq.s32.totalorder %s33, 1
      %p276 = por %p274, %p275
      %p277 = scmp.ne.s32.totalorder %s268, %s269
      %p278 = scmp.eq.s32.totalorder %s33, 0
      %p279 = por %p277, %p278
      %p280 = scmp.ne.s32.totalorder %s268, %s269
      %p281 = scmp.eq.s32.totalorder %s34, 1
      %p282 = por %p280, %p281
      %p284 = scmp.ne.s32.totalorder %s269, %s283
      %p285 = scmp.eq.s32.totalorder %s34, 0
      %p286 = por %p284, %p285
      %s288 = sadd.s32 %s287, 1
      %p291 = scmp.eq.s32.totalorder %s28, 1
      %p292 = scmp.ne.s32.totalorder %s287, %s289
      %p293 = scmp.eq.s32.totalorder %s28, 0
      %p294 = por %p292, %p293
      %p295 = scmp.ne.s32.totalorder %s287, %s289
      %p296 = scmp.eq.s32.totalorder %s33, 1
      %p297 = por %p295, %p296
      %p298 = scmp.ne.s32.totalorder %s289, %s290
      %p299 = scmp.eq.s32.totalorder %s33, 0
      %p300 = por %p298, %p299
      %p301 = scmp.ne.s32.totalorder %s289, %s290
      %p302 = scmp.eq.s32.totalorder %s34, 1
      %p303 = por %p301, %p302
      %p305 = scmp.ne.s32.totalorder %s290, %s304
      %p306 = scmp.eq.s32.totalorder %s34, 0
      %p307 = por %p305, %p306
      %s309 = sadd.s32 %s308, 1
      %p312 = scmp.eq.s32.totalorder %s28, 1
      %p313 = scmp.ne.s32.totalorder %s308, %s310
      %p314 = scmp.eq.s32.totalorder %s28, 0
      %p315 = por %p313, %p314
      %p316 = scmp.ne.s32.totalorder %s308, %s310
      %p317 = scmp.eq.s32.totalorder %s33, 1
      %p318 = por %p316, %p317
      %p319 = scmp.ne.s32.totalorder %s310, %s311
      %p320 = scmp.eq.s32.totalorder %s33, 0
      %p321 = por %p319, %p320
      %p322 = scmp.ne.s32.totalorder %s310, %s311
      %p323 = scmp.eq.s32.totalorder %s34, 1
      %p324 = por %p322, %p323
      %p326 = scmp.ne.s32.totalorder %s311, %s325
      %p327 = scmp.eq.s32.totalorder %s34, 0
      %p328 = por %p326, %p327
      %s330 = sadd.s32 %s329, 1
      %p333 = scmp.eq.s32.totalorder %s28, 1
      %p334 = scmp.ne.s32.totalorder %s329, %s331
      %p335 = scmp.eq.s32.totalorder %s28, 0
      %p336 = por %p334, %p335
      %p337 = scmp.ne.s32.totalorder %s329, %s331
      %p338 = scmp.eq.s32.totalorder %s33, 1
      %p339 = por %p337, %p338
      %p340 = scmp.ne.s32.totalorder %s331, %s332
      %p341 = scmp.eq.s32.totalorder %s33, 0
      %p342 = por %p340, %p341
      %p343 = scmp.ne.s32.totalorder %s331, %s332
      %p344 = scmp.eq.s32.totalorder %s34, 1
      %p345 = por %p343, %p344
      %p347 = scmp.ne.s32.totalorder %s332, %s346
      %p348 = scmp.eq.s32.totalorder %s34, 0
      %p349 = por %p347, %p348
      %s351 = sadd.s32 %s350, 1
      %p354 = scmp.eq.s32.totalorder %s28, 1
      %p355 = scmp.ne.s32.totalorder %s350, %s352
      %p356 = scmp.eq.s32.totalorder %s28, 0
      %p357 = por %p355, %p356
      %p358 = scmp.ne.s32.totalorder %s350, %s352
      %p359 = scmp.eq.s32.totalorder %s33, 1
      %p360 = por %p358, %p359
      %p361 = scmp.ne.s32.totalorder %s352, %s353
      %p362 = scmp.eq.s32.totalorder %s33, 0
      %p363 = por %p361, %p362
      %p364 = scmp.ne.s32.totalorder %s352, %s353
      %p365 = scmp.eq.s32.totalorder %s34, 1
      %p366 = por %p364, %p365
      %p368 = scmp.ne.s32.totalorder %s353, %s367
      %p369 = scmp.eq.s32.totalorder %s34, 0
      %p370 = por %p368, %p369
      %s372 = sadd.s32 %s371, 1
      %p375 = scmp.eq.s32.totalorder %s28, 1
      %p376 = scmp.ne.s32.totalorder %s371, %s373
      %p377 = scmp.eq.s32.totalorder %s28, 0
      %p378 = por %p376, %p377
      %p379 = scmp.ne.s32.totalorder %s371, %s373
      %p380 = scmp.eq.s32.totalorder %s33, 1
      %p381 = por %p379, %p380
      %p382 = scmp.ne.s32.totalorder %s373, %s374
      %p383 = scmp.eq.s32.totalorder %s33, 0
      %p384 = por %p382, %p383
      %p385 = scmp.ne.s32.totalorder %s373, %s374
      %p386 = scmp.eq.s32.totalorder %s34, 1
      %p387 = por %p385, %p386
      %p389 = scmp.ne.s32.totalorder %s374, %s388
      %p390 = scmp.eq.s32.totalorder %s34, 0
      %p391 = por %p389, %p390
      %s393 = sadd.s32 %s392, 1
      %p396 = scmp.eq.s32.totalorder %s28, 1
      %p397 = scmp.ne.s32.totalorder %s392, %s394
      %p398 = scmp.eq.s32.totalorder %s28, 0
      %p399 = por %p397, %p398
      %p400 = scmp.ne.s32.totalorder %s392, %s394
      %p401 = scmp.eq.s32.totalorder %s33, 1
      %p402 = por %p400, %p401
      %p403 = scmp.ne.s32.totalorder %s394, %s395
      %p404 = scmp.eq.s32.totalorder %s33, 0
      %p405 = por %p403, %p404
      %p406 = scmp.ne.s32.totalorder %s394, %s395
      %p407 = scmp.eq.s32.totalorder %s34, 1
      %p408 = por %p406, %p407
      %p410 = scmp.ne.s32.totalorder %s395, %s409
      %p411 = scmp.eq.s32.totalorder %s34, 0
      %p412 = por %p410, %p411
      %s414 = sadd.s32 %s413, 1
      %p417 = scmp.eq.s32.totalorder %s28, 1
      %p418 = scmp.ne.s32.totalorder %s413, %s415
      %p419 = scmp.eq.s32.totalorder %s28, 0
      %p420 = por %p418, %p419
      %p421 = scmp.ne.s32.totalorder %s413, %s415
      %p422 = scmp.eq.s32.totalorder %s33, 1
      %p423 = por %p421, %p422
      %p424 = scmp.ne.s32.totalorder %s415, %s416
      %p425 = scmp.eq.s32.totalorder %s33, 0
      %p426 = por %p424, %p425
      %p427 = scmp.ne.s32.totalorder %s415, %s416
      %p428 = scmp.eq.s32.totalorder %s34, 1
      %p429 = por %p427, %p428
      %p431 = scmp.ne.s32.totalorder %s416, %s430
      %p432 = scmp.eq.s32.totalorder %s34, 0
      %p433 = por %p431, %p432
      %s435 = sadd.s32 %s434, 1
      %p438 = scmp.eq.s32.totalorder %s28, 1
      %p439 = scmp.ne.s32.totalorder %s434, %s436
      %p440 = scmp.eq.s32.totalorder %s28, 0
      %p441 = por %p439, %p440
      %p442 = scmp.ne.s32.totalorder %s434, %s436
      %p443 = scmp.eq.s32.totalorder %s33, 1
      %p444 = por %p442, %p443
      %p445 = scmp.ne.s32.totalorder %s436, %s437
      %p446 = scmp.eq.s32.totalorder %s33, 0
      %p447 = por %p445, %p446
      %p448 = scmp.ne.s32.totalorder %s436, %s437
      %p449 = scmp.eq.s32.totalorder %s34, 1
      %p450 = por %p448, %p449
      %p452 = scmp.ne.s32.totalorder %s437, %s451
      %p453 = scmp.eq.s32.totalorder %s34, 0
      %p454 = por %p452, %p453
      %s455 = ssub.s32 %s28, %s35
      %p456 = scmp.eq.s32.totalorder %s455, 0
      %s458 = sadd.s32 %s457, 1
      %s459 = scalar_select %p456, %s457, %s458
      %p462 = pneg %p456
      %p463 = scmp.eq.s32.totalorder %s28, 1
      %p464 = por %p462, %p463
      %p465 = scmp.ne.s32.totalorder %s457, %s460
      %p466 = scmp.eq.s32.totalorder %s28, 0
      %p467 = por %p465, %p466
      %p468 = scmp.ne.s32.totalorder %s457, %s460
      %p469 = scmp.eq.s32.totalorder %s33, 1
      %p470 = por %p468, %p469
      %p471 = scmp.ne.s32.totalorder %s460, %s461
      %p472 = scmp.eq.s32.totalorder %s33, 0
      %p473 = por %p471, %p472
      %p474 = scmp.ne.s32.totalorder %s460, %s461
      %p475 = scmp.eq.s32.totalorder %s34, 1
      %p476 = por %p474, %p475
      %p478 = scmp.ne.s32.totalorder %s461, %s477
      %p479 = scmp.eq.s32.totalorder %s34, 0
      %p480 = por %p478, %p479
      %p481 = scmp.le.s32.totalorder 1, %s28
      %p482 = scmp.lt.s32.totalorder %s28, 3
      %p483 = pnand %p481, %p482
      %p484 = pneg %p483
      // Predicated region
      $region9: #{reprover_forward.1} parent=5 // pred_check
        _
      $region10: #{reprover_forward.1} parent=5 // pred_check_branch
        %486 = sbr.rel (%p483) target = $region12
      $region11: #{reprover_forward.1} parent=5 // pred_region
        %s487 = ssub.s32 %s28, 1
        // Predicated region
        $region13: #{reprover_forward.1} parent=11 // pred_check
          %p488 = pneg %p101
        $region14: #{reprover_forward.1} parent=11 // pred_check_branch
          %490 = sbr.rel (%p488) target = $region16
        $region15: #{reprover_forward.1} parent=11 // pred_region
          _
        $region16: #{reprover_forward.1} parent=11 // pred_fallthru
          _
        // Predicated region
        $region17: #{reprover_forward.1} parent=11 // pred_check
          %p491 = pneg %p122
        $region18: #{reprover_forward.1} parent=11 // pred_check_branch
          %493 = sbr.rel (%p491) target = $region20
        $region19: #{reprover_forward.1} parent=11 // pred_region
          _
        $region20: #{reprover_forward.1} parent=11 // pred_fallthru
          _
        // Predicated region
        $region21: #{reprover_forward.1} parent=11 // pred_check
          %p494 = pneg %p195
        $region22: #{reprover_forward.1} parent=11 // pred_check_branch
          %496 = sbr.rel (%p494) target = $region24
        $region23: #{reprover_forward.1} parent=11 // pred_region
          _
        $region24: #{reprover_forward.1} parent=11 // pred_fallthru
          _
        // Predicated region
        $region25: #{reprover_forward.1} parent=11 // pred_check
          %p497 = pneg %p216
        $region26: #{reprover_forward.1} parent=11 // pred_check_branch
          %499 = sbr.rel (%p497) target = $region28
        $region27: #{reprover_forward.1} parent=11 // pred_region
          _
        $region28: #{reprover_forward.1} parent=11 // pred_fallthru
          _
        // Predicated region
        $region29: #{reprover_forward.1} parent=11 // pred_check
          %p500 = pneg %p237
        $region30: #{reprover_forward.1} parent=11 // pred_check_branch
          %502 = sbr.rel (%p500) target = $region32
        $region31: #{reprover_forward.1} parent=11 // pred_region
          _
        $region32: #{reprover_forward.1} parent=11 // pred_fallthru
          _
        // Predicated region
        $region33: #{reprover_forward.1} parent=11 // pred_check
          %p503 = pneg %p258
        $region34: #{reprover_forward.1} parent=11 // pred_check_branch
          %505 = sbr.rel (%p503) target = $region36
        $region35: #{reprover_forward.1} parent=11 // pred_region
          _
        $region36: #{reprover_forward.1} parent=11 // pred_fallthru
          _
        // Predicated region
        $region37: #{reprover_forward.1} parent=11 // pred_check
          %p506 = pneg %p279
        $region38: #{reprover_forward.1} parent=11 // pred_check_branch
          %508 = sbr.rel (%p506) target = $region40
        $region39: #{reprover_forward.1} parent=11 // pred_region
          _
        $region40: #{reprover_forward.1} parent=11 // pred_fallthru
          _
        // Predicated region
        $region41: #{reprover_forward.1} parent=11 // pred_check
          %p509 = pneg %p300
        $region42: #{reprover_forward.1} parent=11 // pred_check_branch
          %511 = sbr.rel (%p509) target = $region44
        $region43: #{reprover_forward.1} parent=11 // pred_region
          _
        $region44: #{reprover_forward.1} parent=11 // pred_fallthru
          _
        // Predicated region
        $region45: #{reprover_forward.1} parent=11 // pred_check
          %p512 = pneg %p321
        $region46: #{reprover_forward.1} parent=11 // pred_check_branch
          %514 = sbr.rel (%p512) target = $region48
        $region47: #{reprover_forward.1} parent=11 // pred_region
          _
        $region48: #{reprover_forward.1} parent=11 // pred_fallthru
          _
        // Predicated region
        $region49: #{reprover_forward.1} parent=11 // pred_check
          %p515 = pneg %p342
        $region50: #{reprover_forward.1} parent=11 // pred_check_branch
          %517 = sbr.rel (%p515) target = $region52
        $region51: #{reprover_forward.1} parent=11 // pred_region
          _
        $region52: #{reprover_forward.1} parent=11 // pred_fallthru
          _
        // Predicated region
        $region53: #{reprover_forward.1} parent=11 // pred_check
          %p518 = pneg %p363
        $region54: #{reprover_forward.1} parent=11 // pred_check_branch
          %520 = sbr.rel (%p518) target = $region56
        $region55: #{reprover_forward.1} parent=11 // pred_region
          _
        $region56: #{reprover_forward.1} parent=11 // pred_fallthru
          _
        // Predicated region
        $region57: #{reprover_forward.1} parent=11 // pred_check
          %p521 = pneg %p384
        $region58: #{reprover_forward.1} parent=11 // pred_check_branch
          %523 = sbr.rel (%p521) target = $region60
        $region59: #{reprover_forward.1} parent=11 // pred_region
          _
        $region60: #{reprover_forward.1} parent=11 // pred_fallthru
          _
        // Predicated region
        $region61: #{reprover_forward.1} parent=11 // pred_check
          %p524 = pneg %p405
        $region62: #{reprover_forward.1} parent=11 // pred_check_branch
          %526 = sbr.rel (%p524) target = $region64
        $region63: #{reprover_forward.1} parent=11 // pred_region
          _
        $region64: #{reprover_forward.1} parent=11 // pred_fallthru
          _
        // Predicated region
        $region65: #{reprover_forward.1} parent=11 // pred_check
          %p527 = pneg %p426
        $region66: #{reprover_forward.1} parent=11 // pred_check_branch
          %529 = sbr.rel (%p527) target = $region68
        $region67: #{reprover_forward.1} parent=11 // pred_region
          _
        $region68: #{reprover_forward.1} parent=11 // pred_fallthru
          _
        // Predicated region
        $region69: #{reprover_forward.1} parent=11 // pred_check
          %p530 = pneg %p447
        $region70: #{reprover_forward.1} parent=11 // pred_check_branch
          %532 = sbr.rel (%p530) target = $region72
        $region71: #{reprover_forward.1} parent=11 // pred_region
          _
        $region72: #{reprover_forward.1} parent=11 // pred_fallthru
          _
      $region12: #{reprover_forward.1} parent=5 // pred_fallthru
        _
      %p533 = scmp.lt.s32.totalorder %s28, 2
      // Predicated region
      $region73: #{reprover_forward.1} parent=5 // pred_check
        %p534 = pneg %p533
      $region74: #{reprover_forward.1} parent=5 // pred_check_branch
        %536 = sbr.rel (%p534) target = $region76
      $region75: #{reprover_forward.1} parent=5 // pred_region
        // Predicated region
        $region77: #{reprover_forward.1} parent=75 // pred_check
          %p537 = pneg %p48
        $region78: #{reprover_forward.1} parent=75 // pred_check_branch
          %539 = sbr.rel (%p537) target = $region80
        $region79: #{reprover_forward.1} parent=75 // pred_region
          %p540 = scmp.lt.s32.totalorder %s28, 1
          %s541 = scalar_select %p540, %s28, 1
          %s542 = smul.addr %s541, 8
          %s543 = scalar_lea.vmem %s0, %s542
        $region80: #{reprover_forward.1} parent=75 // pred_fallthru
          _
        // Predicated region
        $region81: #{reprover_forward.1} parent=75 // pred_check
          %p544 = pneg %p74
        $region82: #{reprover_forward.1} parent=75 // pred_check_branch
          %546 = sbr.rel (%p544) target = $region84
        $region83: #{reprover_forward.1} parent=75 // pred_region
          %p547 = scmp.lt.s32.totalorder %s28, 1
          %s548 = scalar_select %p547, %s28, 1
          %s549 = smul.addr %s548, 8
          %s550 = scalar_lea.vmem %s1, %s549
        $region84: #{reprover_forward.1} parent=75 // pred_fallthru
          _
        // Predicated region
        $region85: #{reprover_forward.1} parent=75 // pred_check
          %p551 = pneg %p142
        $region86: #{reprover_forward.1} parent=75 // pred_check_branch
          %553 = sbr.rel (%p551) target = $region88
        $region87: #{reprover_forward.1} parent=75 // pred_region
          %p554 = scmp.lt.s32.totalorder %s28, 1
          %s555 = scalar_select %p554, %s28, 1
          %s556 = scalar_lea.vmem %s4, %s555
        $region88: #{reprover_forward.1} parent=75 // pred_fallthru
          _
        // Predicated region
        $region89: #{reprover_forward.1} parent=75 // pred_check
          %p557 = pneg %p168
        $region90: #{reprover_forward.1} parent=75 // pred_check_branch
          %559 = sbr.rel (%p557) target = $region92
        $region91: #{reprover_forward.1} parent=75 // pred_region
          %p560 = scmp.lt.s32.totalorder %s28, 1
          %s561 = scalar_select %p560, %s28, 1
          %s562 = scalar_lea.vmem %s5, %s561
        $region92: #{reprover_forward.1} parent=75 // pred_fallthru
          _
      $region76: #{reprover_forward.1} parent=5 // pred_fallthru
        _
      %p563 = scmp.le.s32.totalorder 1, %s28
      %p564 = scmp.lt.s32.totalorder %s28, 3
      %p565 = pnand %p563, %p564
      %p566 = pneg %p565
      // Predicated region
      $region93: #{reprover_forward.1} parent=5 // pred_check
        _
      $region94: #{reprover_forward.1} parent=5 // pred_check_branch
        %568 = sbr.rel (%p565) target = $region96
      $region95: #{reprover_forward.1} parent=5 // pred_region
        %s569 = ssub.s32 %s28, 1
        %p570 = scmp.lt.s32.totalorder %s33, 1
        %s571 = scalar_select %p570, %s33, 1
        %s572 = smul.addr %s571, 8
        %s573 = scalar_lea.vmem %s0, %s572
        %p574 = pneg %p54
        %p575 = pneg %p51
        %p576 = scmp.lt.s32.totalorder %s33, 1
        %s577 = scalar_select %p576, %s33, 1
        %s578 = smul.addr %s577, 8
        %s579 = scalar_lea.vmem %s1, %s578
        %p580 = pneg %p80
        %p581 = pneg %p77
        %p582 = pneg %p101
        %p583 = pneg %p98
        %p584 = pneg %p122
        %p585 = pneg %p119
        %p586 = scmp.lt.s32.totalorder %s33, 1
        %s587 = scalar_select %p586, %s33, 1
        %s588 = scalar_lea.vmem %s4, %s587
        %p589 = pneg %p148
        %p590 = pneg %p145
        %p591 = scmp.lt.s32.totalorder %s33, 1
        %s592 = scalar_select %p591, %s33, 1
        %s593 = scalar_lea.vmem %s5, %s592
        %p594 = pneg %p174
        %p595 = pneg %p171
        %p596 = pneg %p195
        %p597 = pneg %p192
        %p598 = pneg %p216
        %p599 = pneg %p213
        %p600 = pneg %p237
        %p601 = pneg %p234
        %p602 = pneg %p258
        %p603 = pneg %p255
        %p604 = pneg %p279
        %p605 = pneg %p276
        %p606 = pneg %p300
        %p607 = pneg %p297
        %p608 = pneg %p321
        %p609 = pneg %p318
        %p610 = pneg %p342
        %p611 = pneg %p339
        %p612 = pneg %p363
        %p613 = pneg %p360
        %p614 = pneg %p384
        %p615 = pneg %p381
        %p616 = pneg %p405
        %p617 = pneg %p402
        %p618 = pneg %p426
        %p619 = pneg %p423
        %p620 = pneg %p447
        %p621 = pneg %p444
        %p622 = pneg %p473
        %p623 = pneg %p470
        %s624 = sand.u32 %s460, 1
        %s625 = scalar_lea.sflag [#allocation3], %s624
        %s626 = sand.u32 %s460, 1
        %s627 = smul.addr %s626, 8
        %s628 = scalar_lea.vmem [#allocation2], %s627
        %p629 = scmp.lt.s32.totalorder %s33, 1
        %s630 = scalar_select %p629, %s33, 1
        %s631 = smul.addr %s630, 8
        %s632 = scalar_lea.vmem %s0, %s631
        %p633 = scmp.lt.s32.totalorder %s33, 1
        %s634 = scalar_select %p633, %s33, 1
        %s635 = smul.addr %s634, 8
        %s636 = scalar_lea.vmem %s1, %s635
        %p637 = scmp.lt.s32.totalorder %s33, 1
        %s638 = scalar_select %p637, %s33, 1
        %s639 = scalar_lea.vmem %s4, %s638
        %p640 = scmp.lt.s32.totalorder %s33, 1
        %s641 = scalar_select %p640, %s33, 1
        %s642 = scalar_lea.vmem %s5, %s641
        %v644 = vld [vmem:[%s639] sm:$0x1]
        %vm645 = vcmp.gt.f32.partialorder %v644, 0.5
        %v646 = vsel %vm645, 0.0, -3.4028235e+38
        %v647 = vld [vmem:[%s2] sm:$0xff]
        %v648 = vld [vmem:[%s2 + $0x8] sm:$0xff]
        %v649 = vld [vmem:[%s2 + $0x10] sm:$0xff]
        %v650 = vld [vmem:[%s2 + $0x18] sm:$0xff]
        %v652 = vperm.slane %v646, 0
        %v654 = vadd.f32 %v647, %v652
        %v655 = vadd.f32 %v648, %v652
        %v656 = vadd.f32 %v649, %v652
        %v657 = vadd.f32 %v650, %v652
        %v658 = vlaneseq
        %v659 = vshrl.u32 %v658, 7
        %v660 = vlaneseq
        %v661 = vand.u32 %v660, 127
        %vm662 = vcmp.le.s32.totalorder %v661, %v659
        %v663 = vld [vmem:[%s642] sm:$0x1]
        %vm664 = vcmp.gt.f32.partialorder %v663, 0.5
        %v665 = vsel %vm664, 1, 0
        %v666 = vperm.slane %v665, 0
        %vm667 = vcmp.eq.s32.totalorder %v666, 1
        %vm668 = vmand %vm662, %vm667
        %v669 = vld [vmem:[%s3] sm:$0xff]
        %v670 = vld [vmem:[%s3 + $0x8] sm:$0xff]
        %v671 = vld [vmem:[%s3 + $0x10] sm:$0xff]
        %v672 = vld [vmem:[%s3 + $0x18] sm:$0xff]
        %v673 = vsel %vm668, 0.0, -3.4028235e+38
        %v674 = vadd.f32 %v669, %v673
        %v675 = vadd.f32 %v670, %v673
        %v676 = vadd.f32 %v671, %v673
        %v677 = vadd.f32 %v672, %v673
        %v678 = vld [vmem:[%s632] sm:$0xff]
        %v679 = vld [vmem:[%s6] sm:$0x1]
        %v680 = vmul.f32 %v678, %v678
        %vm681 = vcmask 261120
        %v682 = vsel %vm681, %v680, 0.0
        %683 = vadd.xlane.f32.xlu0 %v682
        %v684 = vpop.xlane.xlu0 %683
        %v685 = vrcp.pop 32.0
        %v686 = vmul.f32 32.0, %v685
        %v687 = vsub.f32 1.0, %v686
        %v688 = vmul.f32 %v685, %v687
        %v689 = vadd.f32 %v685, %v688
        %vm690 = vweird.f32 %v685
        %v691 = vsel %vm690, %v685, %v689
        %v692 = vmul.f32 %v684, %v691
        %v693 = vadd.f32 %v692, 1e-06
        %v694 = vrsqrt.pop %v693
        %v695 = vmul.f32 %v694, %v693
        %v696 = vmul.f32 %v695, %v694
        %v697 = vmul.f32 0.5, %v696
        %v698 = vsub.f32 1.5, %v697
        %v699 = vmul.f32 %v694, %v698
        %vm700 = vweird.f32 %v693
        %vm701 = vweird.f32 %v694
        %vm702 = vmor %vm700, %vm701
        %v703 = vsel %vm702, %v694, %v699
        %v704 = vmul.f32 %v678, %v703
        %v705 = vperm.slane %v679, 0
        %v706 = vmul.f32 %v704, %v705
        %v707 = vld [vmem:[%s8] sm:$0xf]
        %v708 = vld [vmem:[%s8 + $0x4] sm:$0xf]
        %v709 = vld [vmem:[%s8 + $0x8] sm:$0xf]
        %v710 = vld [vmem:[%s8 + $0xc] sm:$0xf]
        %v711 = vpack.c.bf16 %v706, %v706
        %v716 = vunpack.c.l.b16 %v707
        %v717 = vunpack.c.l.b16 %v708
        %v718 = vunpack.c.l.b16 %v709
        %v719 = vunpack.c.l.b16 %v710
        %v720 = vpack.c.b16 %v717, %v716
        %v721 = vpack.c.b16 %v719, %v718
        %v725 = vsel %vm681, %v711, 0
        %727 = vmatpush.bf16.msra.mxu0 0
        %728 = vmatpush.bf16.msra.mxu0 0
        %729 = vmatpush.bf16.msra.mxu0 0
        %730 = vmatpush.bf16.msra.mxu0 0
        %731 = vmatpush.bf16.msra.mxu0 0
        %732 = vmatpush.bf16.msra.mxu0 0
        %733 = vmatpush.bf16.msra.mxu0 %v721
        %734 = vmatpush.bf16.msra.mxu0 %v720
        %735 = vmatmul.bf16.gmra.mxu0 %v725
        %v736 = vpop.f32.mrf.mxu0
        %v737 = vadd.f32 0.0, %v736
        %v738 = vpop.f32.mrf.mxu0
        %739 = vdwg.mxu0
        %v740 = vld [vmem:[%s9] sm:$0xf]
        %v741 = vld [vmem:[%s9 + $0x4] sm:$0xf]
        %v742 = vld [vmem:[%s9 + $0x8] sm:$0xf]
        %v743 = vld [vmem:[%s9 + $0xc] sm:$0xf]
        %745 = vrot.lane.b32.xlu0 %v737, 120
        %v746 = vpop.permute.xlu0 %745
        %748 = vrot.lane.b32.xlu0 %v737, 112
        %v749 = vpop.permute.xlu0 %748
        %751 = vrot.lane.b32.xlu0 %v737, 104
        %v752 = vpop.permute.xlu0 %751
        %v754 = vrot.slane %v749, 4
        %vm755 = vcmask 1047556
        %v756 = vsel %vm755, %v754, %v737
        %v757 = vrot.slane %v737, 4
        %v758 = vsel %vm755, %v749, %v757
        %v760 = vunpack.c.l.s4 1983009808
        %v761 = vunpack.c.0.s8 %v760
        %v762 = vperm.slane %v756, %v761
        %v764 = vunpack.c.l.s4 1983009808
        %v765 = vunpack.c.0.s8 %v764
        %v766 = vperm.slane %v758, %v765
        %v767 = vrot.slane %v752, 4
        %v768 = vsel %vm755, %v767, %v746
        %v769 = vrot.slane %v746, 4
        %v770 = vsel %vm755, %v752, %v769
        %v772 = vunpack.c.l.s4 1983009808
        %v773 = vunpack.c.0.s8 %v772
        %v774 = vperm.slane %v768, %v773
        %v776 = vunpack.c.l.s4 1983009808
        %v777 = vunpack.c.0.s8 %v776
        %v778 = vperm.slane %v770, %v777
        %v779 = vrot.slane %v774, 4
        %v780 = vsel %vm755, %v779, %v762
        %v781 = vrot.slane %v762, 4
        %v782 = vsel %vm755, %v774, %v781
        %v784 = vunpack.c.l.s4 1934713408
        %v785 = vunpack.c.0.s8 %v784
        %v786 = vperm.slane %v780, %v785
        %v788 = vunpack.c.l.s4 1934713408
        %v789 = vunpack.c.0.s8 %v788
        %v790 = vperm.slane %v782, %v789
        %v791 = vrot.slane %v778, 4
        %v792 = vsel %vm755, %v791, %v766
        %v793 = vrot.slane %v766, 4
        %v794 = vsel %vm755, %v778, %v793
        %v796 = vunpack.c.l.s4 1934713408
        %v797 = vunpack.c.0.s8 %v796
        %v798 = vperm.slane %v792, %v797
        %v800 = vunpack.c.l.s4 1934713408
        %v801 = vunpack.c.0.s8 %v800
        %v802 = vperm.slane %v794, %v801
        %v803 = vrot.slane %v786, 4
        %v804 = vsel %vm755, 0.0, %v803
        %v805 = vrot.slane %v790, 4
        %v806 = vsel %vm755, 0.0, %v805
        %v807 = vrot.slane %v798, 4
        %v808 = vsel %vm755, 0.0, %v807
        %v809 = vrot.slane %v802, 4
        %v810 = vsel %vm755, 0.0, %v809
        %v811 = vpack.c.bf16 %v786, %v786
        %v812 = vpack.c.bf16 %v804, %v804
        %v813 = vpack.c.bf16 %v790, %v790
        %v814 = vpack.c.bf16 %v806, %v806
        %v815 = vpack.c.bf16 %v798, %v798
        %v816 = vpack.c.bf16 %v808, %v808
        %v817 = vpack.c.bf16 %v802, %v802
        %v818 = vpack.c.bf16 %v810, %v810
        %819 = vrot.lane.b32.xlu0 %v737, 96
        %v820 = vpop.permute.xlu0 %819
        %821 = vrot.lane.b32.xlu0 %v746, 96
        %v822 = vpop.permute.xlu0 %821
        %823 = vrot.lane.b32.xlu0 %v749, 96
        %v824 = vpop.permute.xlu0 %823
        %825 = vrot.lane.b32.xlu0 %v752, 96
        %v826 = vpop.permute.xlu0 %825
        %v831 = vrot.slane %v824, 4
        %v832 = vsel %vm755, %v831, %v820
        %v833 = vrot.slane %v820, 4
        %v834 = vsel %vm755, %v824, %v833
        %v836 = vunpack.c.l.s4 1983009808
        %v837 = vunpack.c.0.s8 %v836
        %v838 = vperm.slane %v832, %v837
        %v840 = vunpack.c.l.s4 1983009808
        %v841 = vunpack.c.0.s8 %v840
        %v842 = vperm.slane %v834, %v841
        %v843 = vrot.slane %v826, 4
        %v844 = vsel %vm755, %v843, %v822
        %v845 = vrot.slane %v822, 4
        %v846 = vsel %vm755, %v826, %v845
        %v848 = vunpack.c.l.s4 1983009808
        %v849 = vunpack.c.0.s8 %v848
        %v850 = vperm.slane %v844, %v849
        %v852 = vunpack.c.l.s4 1983009808
        %v853 = vunpack.c.0.s8 %v852
        %v854 = vperm.slane %v846, %v853
        %v855 = vrot.slane %v850, 4
        %v856 = vsel %vm755, %v855, %v838
        %v857 = vrot.slane %v838, 4
        %v858 = vsel %vm755, %v850, %v857
        %v860 = vunpack.c.l.s4 1934713408
        %v861 = vunpack.c.0.s8 %v860
        %v862 = vperm.slane %v856, %v861
        %v864 = vunpack.c.l.s4 1934713408
        %v865 = vunpack.c.0.s8 %v864
        %v866 = vperm.slane %v858, %v865
        %v867 = vrot.slane %v854, 4
        %v868 = vsel %vm755, %v867, %v842
        %v869 = vrot.slane %v842, 4
        %v870 = vsel %vm755, %v854, %v869
        %v872 = vunpack.c.l.s4 1934713408
        %v873 = vunpack.c.0.s8 %v872
        %v874 = vperm.slane %v868, %v873
        %v876 = vunpack.c.l.s4 1934713408
        %v877 = vunpack.c.0.s8 %v876
        %v878 = vperm.slane %v870, %v877
        %v879 = vrot.slane %v862, 4
        %v880 = vsel %vm755, 0.0, %v879
        %v881 = vrot.slane %v866, 4
        %v882 = vsel %vm755, 0.0, %v881
        %v883 = vrot.slane %v874, 4
        %v884 = vsel %vm755, 0.0, %v883
        %v885 = vrot.slane %v878, 4
        %v886 = vsel %vm755, 0.0, %v885
        %v887 = vpack.c.bf16 %v862, %v862
        %v888 = vpack.c.bf16 %v880, %v880
        %v889 = vpack.c.bf16 %v866, %v866
        %v890 = vpack.c.bf16 %v882, %v882
        %v891 = vpack.c.bf16 %v874, %v874
        %v892 = vpack.c.bf16 %v884, %v884
        %v893 = vpack.c.bf16 %v878, %v878
        %v894 = vpack.c.bf16 %v886, %v886
        %895 = vrot.lane.b32.xlu0 %v737, 64
        %v896 = vpop.permute.xlu0 %895
        %897 = vrot.lane.b32.xlu0 %v746, 64
        %v898 = vpop.permute.xlu0 %897
        %899 = vrot.lane.b32.xlu0 %v749, 64
        %v900 = vpop.permute.xlu0 %899
        %901 = vrot.lane.b32.xlu0 %v752, 64
        %v902 = vpop.permute.xlu0 %901
        %v907 = vrot.slane %v900, 4
        %v908 = vsel %vm755, %v907, %v896
        %v909 = vrot.slane %v896, 4
        %v910 = vsel %vm755, %v900, %v909
        %v912 = vunpack.c.l.s4 1983009808
        %v913 = vunpack.c.0.s8 %v912
        %v914 = vperm.slane %v908, %v913
        %v916 = vunpack.c.l.s4 1983009808
        %v917 = vunpack.c.0.s8 %v916
        %v918 = vperm.slane %v910, %v917
        %v919 = vrot.slane %v902, 4
        %v920 = vsel %vm755, %v919, %v898
        %v921 = vrot.slane %v898, 4
        %v922 = vsel %vm755, %v902, %v921
        %v924 = vunpack.c.l.s4 1983009808
        %v925 = vunpack.c.0.s8 %v924
        %v926 = vperm.slane %v920, %v925
        %v928 = vunpack.c.l.s4 1983009808
        %v929 = vunpack.c.0.s8 %v928
        %v930 = vperm.slane %v922, %v929
        %v931 = vrot.slane %v926, 4
        %v932 = vsel %vm755, %v931, %v914
        %v933 = vrot.slane %v914, 4
        %v934 = vsel %vm755, %v926, %v933
        %v936 = vunpack.c.l.s4 1934713408
        %v937 = vunpack.c.0.s8 %v936
        %v938 = vperm.slane %v932, %v937
        %v940 = vunpack.c.l.s4 1934713408
        %v941 = vunpack.c.0.s8 %v940
        %v942 = vperm.slane %v934, %v941
        %v943 = vrot.slane %v930, 4
        %v944 = vsel %vm755, %v943, %v918
        %v945 = vrot.slane %v918, 4
        %v946 = vsel %vm755, %v930, %v945
        %v948 = vunpack.c.l.s4 1934713408
        %v949 = vunpack.c.0.s8 %v948
        %v950 = vperm.slane %v944, %v949
        %v952 = vunpack.c.l.s4 1934713408
        %v953 = vunpack.c.0.s8 %v952
        %v954 = vperm.slane %v946, %v953
        %v955 = vrot.slane %v938, 4
        %v956 = vsel %vm755, 0.0, %v955
        %v957 = vrot.slane %v942, 4
        %v958 = vsel %vm755, 0.0, %v957
        %v959 = vrot.slane %v950, 4
        %v960 = vsel %vm755, 0.0, %v959
        %v961 = vrot.slane %v954, 4
        %v962 = vsel %vm755, 0.0, %v961
        %v963 = vpack.c.bf16 %v938, %v938
        %v964 = vpack.c.bf16 %v956, %v956
        %v965 = vpack.c.bf16 %v942, %v942
        %v966 = vpack.c.bf16 %v958, %v958
        %v967 = vpack.c.bf16 %v950, %v950
        %v968 = vpack.c.bf16 %v960, %v960
        %v969 = vpack.c.bf16 %v954, %v954
        %v970 = vpack.c.bf16 %v962, %v962
        %v971 = vrot.slane %v815, 4
        %vm972 = vcmask 1047556
        %v973 = vsel %vm972, %v971, %v811
        %v975 = vunpack.c.l.s4 1983009808
        %v976 = vunpack.c.0.s8 %v975
        %v977 = vperm.slane %v973, %v976
        %v978 = vrot.slane %v817, 4
        %v979 = vsel %vm972, %v978, %v813
        %v981 = vunpack.c.l.s4 1983009808
        %v982 = vunpack.c.0.s8 %v981
        %v983 = vperm.slane %v979, %v982
        %v984 = vrot.slane %v983, 4
        %v985 = vsel %vm972, %v984, %v977
        %v987 = vunpack.c.l.s4 1934713408
        %v988 = vunpack.c.0.s8 %v987
        %v989 = vperm.slane %v985, %v988
        %v990 = vrot.slane %v989, 4
        %v991 = vsel %vm972, 0, %v990
        %v992 = vrot.slane %v816, 4
        %v993 = vsel %vm972, %v992, %v812
        %v995 = vunpack.c.l.s4 1983009808
        %v996 = vunpack.c.0.s8 %v995
        %v997 = vperm.slane %v993, %v996
        %v998 = vrot.slane %v818, 4
        %v999 = vsel %vm972, %v998, %v814
        %v1001 = vunpack.c.l.s4 1983009808
        %v1002 = vunpack.c.0.s8 %v1001
        %v1003 = vperm.slane %v999, %v1002
        %v1004 = vrot.slane %v1003, 4
        %v1005 = vsel %vm972, %v1004, %v997
        %v1007 = vunpack.c.l.s4 1934713408
        %v1008 = vunpack.c.0.s8 %v1007
        %v1009 = vperm.slane %v1005, %v1008
        %v1010 = vrot.slane %v1009, 4
        %v1011 = vsel %vm972, 0, %v1010
        %v1014 = vpack.i.b16 %v1009, %v989
        %v1015 = vshrl.u32 %v989, 16
        %v1016 = vshrl.u32 %v1009, 16
        %v1017 = vpack.i.b16 %v1016, %v1015
        %v1020 = vpack.i.b16 %v1011, %v991
        %v1021 = vshrl.u32 %v991, 16
        %v1022 = vshrl.u32 %v1011, 16
        %v1023 = vpack.i.b16 %v1022, %v1021
        %1024 = vxpose.xlu0.c.b16.start [1/8] %v887, 128
        %1025 = vxpose.xlu0.c.b16.cont [2/8] 0, 128
        %1026 = vxpose.xlu0.c.b16.cont [3/8] 0, 128
        %1027 = vxpose.xlu0.c.b16.cont [4/8] 0, 128
        %1028 = vxpose.xlu0.c.b16.cont [5/8] 0, 128
        %1029 = vxpose.xlu0.c.b16.cont [6/8] 0, 128
        %1030 = vxpose.xlu0.c.b16.cont [7/8] 0, 128
        %1031 = vxpose.xlu0.c.b16.end [8/8] 0, 128
        %v1032 = vpop.trf.xlu0
        %v1033 = vpop.trf.xlu0
        %v1034 = vpop.trf.xlu0
        %v1035 = vpop.trf.xlu0
        %v1036 = vpop.trf.xlu0
        %v1037 = vpop.trf.xlu0
        %v1038 = vpop.trf.xlu0
        %v1039 = vpop.trf.xlu0
        %1040 = vxpose.xlu0.c.b16.start [1/8] %v888, 128
        %1041 = vxpose.xlu0.c.b16.cont [2/8] 0, 128
        %1042 = vxpose.xlu0.c.b16.cont [3/8] 0, 128
        %1043 = vxpose.xlu0.c.b16.cont [4/8] 0, 128
        %1044 = vxpose.xlu0.c.b16.cont [5/8] 0, 128
        %1045 = vxpose.xlu0.c.b16.cont [6/8] 0, 128
        %1046 = vxpose.xlu0.c.b16.cont [7/8] 0, 128
        %1047 = vxpose.xlu0.c.b16.end [8/8] 0, 128
        %v1048 = vpop.trf.xlu0
        %v1049 = vpop.trf.xlu0
        %v1050 = vpop.trf.xlu0
        %v1051 = vpop.trf.xlu0
        %v1052 = vpop.trf.xlu0
        %v1053 = vpop.trf.xlu0
        %v1054 = vpop.trf.xlu0
        %v1055 = vpop.trf.xlu0
        %1056 = vxpose.xlu0.c.b16.start [1/8] %v889, 128
        %1057 = vxpose.xlu0.c.b16.cont [2/8] 0, 128
        %1058 = vxpose.xlu0.c.b16.cont [3/8] 0, 128
        %1059 = vxpose.xlu0.c.b16.cont [4/8] 0, 128
        %1060 = vxpose.xlu0.c.b16.cont [5/8] 0, 128
        %1061 = vxpose.xlu0.c.b16.cont [6/8] 0, 128
        %1062 = vxpose.xlu0.c.b16.cont [7/8] 0, 128
        %1063 = vxpose.xlu0.c.b16.end [8/8] 0, 128
        %v1064 = vpop.trf.xlu0
        %v1065 = vpop.trf.xlu0
        %v1066 = vpop.trf.xlu0
        %v1067 = vpop.trf.xlu0
        %v1068 = vpop.trf.xlu0
        %v1069 = vpop.trf.xlu0
        %v1070 = vpop.trf.xlu0
        %v1071 = vpop.trf.xlu0
        %1072 = vxpose.xlu0.c.b16.start [1/8] %v890, 128
        %1073 = vxpose.xlu0.c.b16.cont [2/8] 0, 128
        %1074 = vxpose.xlu0.c.b16.cont [3/8] 0, 128
        %1075 = vxpose.xlu0.c.b16.cont [4/8] 0, 128
        %1076 = vxpose.xlu0.c.b16.cont [5/8] 0, 128
        %1077 = vxpose.xlu0.c.b16.cont [6/8] 0, 128
        %1078 = vxpose.xlu0.c.b16.cont [7/8] 0, 128
        %1079 = vxpose.xlu0.c.b16.end [8/8] 0, 128
        %v1080 = vpop.trf.xlu0
        %v1081 = vpop.trf.xlu0
        %v1082 = vpop.trf.xlu0
        %v1083 = vpop.trf.xlu0
        %v1084 = vpop.trf.xlu0
        %v1085 = vpop.trf.xlu0
        %v1086 = vpop.trf.xlu0
        %v1087 = vpop.trf.xlu0
        %1088 = vxpose.xlu0.c.b16.start [1/8] %v891, 128
        %1089 = vxpose.xlu0.c.b16.cont [2/8] 0, 128
        %1090 = vxpose.xlu0.c.b16.cont [3/8] 0, 128
        %1091 = vxpose.xlu0.c.b16.cont [4/8] 0, 128
        %1092 = vxpose.xlu0.c.b16.cont [5/8] 0, 128
        %1093 = vxpose.xlu0.c.b16.cont [6/8] 0, 128
        %1094 = vxpose.xlu0.c.b16.cont [7/8] 0, 128
        %1095 = vxpose.xlu0.c.b16.end [8/8] 0, 128
        %v1096 = vpop.trf.xlu0
        %v1097 = vpop.trf.xlu0
        %v1098 = vpop.trf.xlu0
        %v1099 = vpop.trf.xlu0
        %v1100 = vpop.trf.xlu0
        %v1101 = vpop.trf.xlu0
        %v1102 = vpop.trf.xlu0
        %v1103 = vpop.trf.xlu0
        %1104 = vxpose.xlu0.c.b16.start [1/8] %v892, 128
        %1105 = vxpose.xlu0.c.b16.cont [2/8] 0, 128
        %1106 = vxpose.xlu0.c.b16.cont [3/8] 0, 128
        %1107 = vxpose.xlu0.c.b16.cont [4/8] 0, 128
        %1108 = vxpose.xlu0.c.b16.cont [5/8] 0, 128
        %1109 = vxpose.xlu0.c.b16.cont [6/8] 0, 128
        %1110 = vxpose.xlu0.c.b16.cont [7/8] 0, 128
        %1111 = vxpose.xlu0.c.b16.end [8/8] 0, 128
        %v1112 = vpop.trf.xlu0
        %v1113 = vpop.trf.xlu0
        %v1114 = vpop.trf.xlu0
        %v1115 = vpop.trf.xlu0
        %v1116 = vpop.trf.xlu0
        %v1117 = vpop.trf.xlu0
        %v1118 = vpop.trf.xlu0
        %v1119 = vpop.trf.xlu0
        %1120 = vxpose.xlu0.c.b16.start [1/8] %v893, 128
        %1121 = vxpose.xlu0.c.b16.cont [2/8] 0, 128
        %1122 = vxpose.xlu0.c.b16.cont [3/8] 0, 128
        %1123 = vxpose.xlu0.c.b16.cont [4/8] 0, 128
        %1124 = vxpose.xlu0.c.b16.cont [5/8] 0, 128
        %1125 = vxpose.xlu0.c.b16.cont [6/8] 0, 128
        %1126 = vxpose.xlu0.c.b16.cont [7/8] 0, 128
        %1127 = vxpose.xlu0.c.b16.end [8/8] 0, 128
        %v1128 = vpop.trf.xlu0
        %v1129 = vpop.trf.xlu0
        %v1130 = vpop.trf.xlu0
        %v1131 = vpop.trf.xlu0
        %v1132 = vpop.trf.xlu0
        %v1133 = vpop.trf.xlu0
        %v1134 = vpop.trf.xlu0
        %v1135 = vpop.trf.xlu0
        %1136 = vxpose.xlu0.c.b16.start [1/8] %v894, 128
        %1137 = vxpose.xlu0.c.b16.cont [2/8] 0, 128
        %1138 = vxpose.xlu0.c.b16.cont [3/8] 0, 128
        %1139 = vxpose.xlu0.c.b16.cont [4/8] 0, 128
        %1140 = vxpose.xlu0.c.b16.cont [5/8] 0, 128
        %1141 = vxpose.xlu0.c.b16.cont [6/8] 0, 128
        %1142 = vxpose.xlu0.c.b16.cont [7/8] 0, 128
        %1143 = vxpose.xlu0.c.b16.end [8/8] 0, 128
        %v1144 = vpop.trf.xlu0
        %v1145 = vpop.trf.xlu0
        %v1146 = vpop.trf.xlu0
        %v1147 = vpop.trf.xlu0
        %v1148 = vpop.trf.xlu0
        %v1149 = vpop.trf.xlu0
        %v1150 = vpop.trf.xlu0
        %v1151 = vpop.trf.xlu0
        %v1152 = vrot.slane %v1096, 4
        %v1153 = vsel %vm972, %v1152, %v1032
        %v1155 = vunpack.c.l.s4 1983009808
        %v1156 = vunpack.c.0.s8 %v1155
        %v1157 = vperm.slane %v1153, %v1156
        %v1158 = vrot.slane %v1128, 4
        %v1159 = vsel %vm972, %v1158, %v1064
        %v1161 = vunpack.c.l.s4 1983009808
        %v1162 = vunpack.c.0.s8 %v1161
        %v1163 = vperm.slane %v1159, %v1162
        %v1164 = vrot.slane %v1163, 4
        %v1165 = vsel %vm972, %v1164, %v1157
        %v1166 = vrot.slane %v1157, 4
        %v1167 = vsel %vm972, %v1163, %v1166
        %v1169 = vunpack.c.l.s4 1934713408
        %v1170 = vunpack.c.0.s8 %v1169
        %v1171 = vperm.slane %v1165, %v1170
        %v1173 = vunpack.c.l.s4 1934713408
        %v1174 = vunpack.c.0.s8 %v1173
        %v1175 = vperm.slane %v1167, %v1174
        %v1176 = vrot.slane %v1171, 4
        %v1177 = vsel %vm972, 0, %v1176
        %v1178 = vrot.slane %v1175, 4
        %v1179 = vsel %vm972, 0, %v1178
        %v1180 = vrot.slane %v1112, 4
        %v1181 = vsel %vm972, %v1180, %v1048
        %v1183 = vunpack.c.l.s4 1983009808
        %v1184 = vunpack.c.0.s8 %v1183
        %v1185 = vperm.slane %v1181, %v1184
        %v1186 = vrot.slane %v1144, 4
        %v1187 = vsel %vm972, %v1186, %v1080
        %v1189 = vunpack.c.l.s4 1983009808
        %v1190 = vunpack.c.0.s8 %v1189
        %v1191 = vperm.slane %v1187, %v1190
        %v1192 = vrot.slane %v1191, 4
        %v1193 = vsel %vm972, %v1192, %v1185
        %v1194 = vrot.slane %v1185, 4
        %v1195 = vsel %vm972, %v1191, %v1194
        %v1197 = vunpack.c.l.s4 1934713408
        %v1198 = vunpack.c.0.s8 %v1197
        %v1199 = vperm.slane %v1193, %v1198
        %v1201 = vunpack.c.l.s4 1934713408
        %v1202 = vunpack.c.0.s8 %v1201
        %v1203 = vperm.slane %v1195, %v1202
        %v1204 = vrot.slane %v1199, 4
        %v1205 = vsel %vm972, 0, %v1204
        %v1206 = vrot.slane %v1203, 4
        %v1207 = vsel %vm972, 0, %v1206
        %v1210 = vpack.i.b16 %v1199, %v1171
        %v1212 = vshrl.u32 %v1171, 16
        %v1213 = vshrl.u32 %v1199, 16
        %v1214 = vpack.i.b16 %v1213, %v1212
        %v1218 = vpack.i.b16 %v1205, %v1177
        %v1220 = vshrl.u32 %v1177, 16
        %v1221 = vshrl.u32 %v1205, 16
        %v1222 = vpack.i.b16 %v1221, %v1220
        %v1226 = vpack.i.b16 %v1203, %v1175
        %v1228 = vshrl.u32 %v1175, 16
        %v1229 = vshrl.u32 %v1203, 16
        %v1230 = vpack.i.b16 %v1229, %v1228
        %v1234 = vpack.i.b16 %v1207, %v1179
        %v1236 = vshrl.u32 %v1179, 16
        %v1237 = vshrl.u32 %v1207, 16
        %v1238 = vpack.i.b16 %v1237, %v1236
        %1240 = vxpose.xlu0.c.b16.start [1/8] %v1210, 128
        %1241 = vxpose.xlu0.c.b16.cont [2/8] 0, 128
        %1242 = vxpose.xlu0.c.b16.cont [3/8] 0, 128
        %1243 = vxpose.xlu0.c.b16.cont [4/8] 0, 128
        %1244 = vxpose.xlu0.c.b16.cont [5/8] 0, 128
        %1245 = vxpose.xlu0.c.b16.cont [6/8] 0, 128
        %1246 = vxpose.xlu0.c.b16.cont [7/8] 0, 128
        %1247 = vxpose.xlu0.c.b16.end [8/8] 0, 128
        %v1248 = vpop.trf.xlu0
        %v1249 = vpop.trf.xlu0
        %v1250 = vpop.trf.xlu0
        %v1251 = vpop.trf.xlu0
        %v1252 = vpop.trf.xlu0
        %v1253 = vpop.trf.xlu0
        %v1254 = vpop.trf.xlu0
        %v1255 = vpop.trf.xlu0
        %1256 = vxpose.xlu0.c.b16.start [1/8] %v1214, 128
        %1257 = vxpose.xlu0.c.b16.cont [2/8] 0, 128
        %1258 = vxpose.xlu0.c.b16.cont [3/8] 0, 128
        %1259 = vxpose.xlu0.c.b16.cont [4/8] 0, 128
        %1260 = vxpose.xlu0.c.b16.cont [5/8] 0, 128
        %1261 = vxpose.xlu0.c.b16.cont [6/8] 0, 128
        %1262 = vxpose.xlu0.c.b16.cont [7/8] 0, 128
        %1263 = vxpose.xlu0.c.b16.end [8/8] 0, 128
        %v1264 = vpop.trf.xlu0
        %v1265 = vpop.trf.xlu0
        %v1266 = vpop.trf.xlu0
        %v1267 = vpop.trf.xlu0
        %v1268 = vpop.trf.xlu0
        %v1269 = vpop.trf.xlu0
        %v1270 = vpop.trf.xlu0
        %v1271 = vpop.trf.xlu0
        %1272 = vxpose.xlu0.c.b16.start [1/8] %v1218, 128
        %1273 = vxpose.xlu0.c.b16.cont [2/8] 0, 128
        %1274 = vxpose.xlu0.c.b16.cont [3/8] 0, 128
        %1275 = vxpose.xlu0.c.b16.cont [4/8] 0, 128
        %1276 = vxpose.xlu0.c.b16.cont [5/8] 0, 128
        %1277 = vxpose.xlu0.c.b16.cont [6/8] 0, 128
        %1278 = vxpose.xlu0.c.b16.cont [7/8] 0, 128
        %1279 = vxpose.xlu0.c.b16.end [8/8] 0, 128
        %v1280 = vpop.trf.xlu0
        %v1281 = vpop.trf.xlu0
        %v1282 = vpop.trf.xlu0
        %v1283 = vpop.trf.xlu0
        %v1284 = vpop.trf.xlu0
        %v1285 = vpop.trf.xlu0
        %v1286 = vpop.trf.xlu0
        %v1287 = vpop.trf.xlu0
        %1288 = vxpose.xlu0.c.b16.start [1/8] %v1222, 128
        %1289 = vxpose.xlu0.c.b16.cont [2/8] 0, 128
        %1290 = vxpose.xlu0.c.b16.cont [3/8] 0, 128
        %1291 = vxpose.xlu0.c.b16.cont [4/8] 0, 128
        %1292 = vxpose.xlu0.c.b16.cont [5/8] 0, 128
        %1293 = vxpose.xlu0.c.b16.cont [6/8] 0, 128
        %1294 = vxpose.xlu0.c.b16.cont [7/8] 0, 128
        %1295 = vxpose.xlu0.c.b16.end [8/8] 0, 128
        %v1296 = vpop.trf.xlu0
        %v1297 = vpop.trf.xlu0
        %v1298 = vpop.trf.xlu0
        %v1299 = vpop.trf.xlu0
        %v1300 = vpop.trf.xlu0
        %v1301 = vpop.trf.xlu0
        %v1302 = vpop.trf.xlu0
        %v1303 = vpop.trf.xlu0
        %1304 = vxpose.xlu0.c.b16.start [1/8] %v1226, 128
        %1305 = vxpose.xlu0.c.b16.cont [2/8] 0, 128
        %1306 = vxpose.xlu0.c.b16.cont [3/8] 0, 128
        %1307 = vxpose.xlu0.c.b16.cont [4/8] 0, 128
        %1308 = vxpose.xlu0.c.b16.cont [5/8] 0, 128
        %1309 = vxpose.xlu0.c.b16.cont [6/8] 0, 128
        %1310 = vxpose.xlu0.c.b16.cont [7/8] 0, 128
        %1311 = vxpose.xlu0.c.b16.end [8/8] 0, 128
        %v1312 = vpop.trf.xlu0
        %v1313 = vpop.trf.xlu0
        %v1314 = vpop.trf.xlu0
        %v1315 = vpop.trf.xlu0
        %v1316 = vpop.trf.xlu0
        %v1317 = vpop.trf.xlu0
        %v1318 = vpop.trf.xlu0
        %v1319 = vpop.trf.xlu0
        %1320 = vxpose.xlu0.c.b16.start [1/8] %v1230, 128
        %1321 = vxpose.xlu0.c.b16.cont [2/8] 0, 128
        %1322 = vxpose.xlu0.c.b16.cont [3/8] 0, 128
        %1323 = vxpose.xlu0.c.b16.cont [4/8] 0, 128
        %1324 = vxpose.xlu0.c.b16.cont [5/8] 0, 128
        %1325 = vxpose.xlu0.c.b16.cont [6/8] 0, 128
        %1326 = vxpose.xlu0.c.b16.cont [7/8] 0, 128
        %1327 = vxpose.xlu0.c.b16.end [8/8] 0, 128
        %v1328 = vpop.trf.xlu0
        %v1329 = vpop.trf.xlu0
        %v1330 = vpop.trf.xlu0
        %v1331 = vpop.trf.xlu0
        %v1332 = vpop.trf.xlu0
        %v1333 = vpop.trf.xlu0
        %v1334 = vpop.trf.xlu0
        %v1335 = vpop.trf.xlu0
        %1336 = vxpose.xlu0.c.b16.start [1/8] %v1234, 128
        %1337 = vxpose.xlu0.c.b16.cont [2/8] 0, 128
        %1338 = vxpose.xlu0.c.b16.cont [3/8] 0, 128
        %1339 = vxpose.xlu0.c.b16.cont [4/8] 0, 128
        %1340 = vxpose.xlu0.c.b16.cont [5/8] 0, 128
        %1341 = vxpose.xlu0.c.b16.cont [6/8] 0, 128
        %1342 = vxpose.xlu0.c.b16.cont [7/8] 0, 128
        %1343 = vxpose.xlu0.c.b16.end [8/8] 0, 128
        %v1344 = vpop.trf.xlu0
        %v1345 = vpop.trf.xlu0
        %v1346 = vpop.trf.xlu0
        %v1347 = vpop.trf.xlu0
        %v1348 = vpop.trf.xlu0
        %v1349 = vpop.trf.xlu0
        %v1350 = vpop.trf.xlu0
        %v1351 = vpop.trf.xlu0
        %1352 = vxpose.xlu0.c.b16.start [1/8] %v1238, 128
        %1353 = vxpose.xlu0.c.b16.cont [2/8] 0, 128
        %1354 = vxpose.xlu0.c.b16.cont [3/8] 0, 128
        %1355 = vxpose.xlu0.c.b16.cont [4/8] 0, 128
        %1356 = vxpose.xlu0.c.b16.cont [5/8] 0, 128
        %1357 = vxpose.xlu0.c.b16.cont [6/8] 0, 128
        %1358 = vxpose.xlu0.c.b16.cont [7/8] 0, 128
        %1359 = vxpose.xlu0.c.b16.end [8/8] 0, 128
        %v1360 = vpop.trf.xlu0
        %v1361 = vpop.trf.xlu0
        %v1362 = vpop.trf.xlu0
        %v1363 = vpop.trf.xlu0
        %v1364 = vpop.trf.xlu0
        %v1365 = vpop.trf.xlu0
        %v1366 = vpop.trf.xlu0
        %v1367 = vpop.trf.xlu0
        %v1368 = vrot.slane %v1312, 4
        %v1369 = vsel %vm972, %v1368, %v1248
        %v1371 = vunpack.c.l.s4 1983009808
        %v1372 = vunpack.c.0.s8 %v1371
        %v1373 = vperm.slane %v1369, %v1372
        %v1374 = vrot.slane %v1344, 4
        %v1375 = vsel %vm972, %v1374, %v1280
        %v1377 = vunpack.c.l.s4 1983009808
        %v1378 = vunpack.c.0.s8 %v1377
        %v1379 = vperm.slane %v1375, %v1378
        %v1380 = vrot.slane %v1379, 4
        %v1381 = vsel %vm972, %v1380, %v1373
        %v1383 = vunpack.c.l.s4 1934713408
        %v1384 = vunpack.c.0.s8 %v1383
        %v1385 = vperm.slane %v1381, %v1384
        %v1386 = vrot.slane %v1385, 4
        %v1387 = vsel %vm972, 0, %v1386
        %v1388 = vrot.slane %v1328, 4
        %v1389 = vsel %vm972, %v1388, %v1264
        %v1391 = vunpack.c.l.s4 1983009808
        %v1392 = vunpack.c.0.s8 %v1391
        %v1393 = vperm.slane %v1389, %v1392
        %v1394 = vrot.slane %v1360, 4
        %v1395 = vsel %vm972, %v1394, %v1296
        %v1397 = vunpack.c.l.s4 1983009808
        %v1398 = vunpack.c.0.s8 %v1397
        %v1399 = vperm.slane %v1395, %v1398
        %v1400 = vrot.slane %v1399, 4
        %v1401 = vsel %vm972, %v1400, %v1393
        %v1403 = vunpack.c.l.s4 1934713408
        %v1404 = vunpack.c.0.s8 %v1403
        %v1405 = vperm.slane %v1401, %v1404
        %v1406 = vrot.slane %v1405, 4
        %v1407 = vsel %vm972, 0, %v1406
        %v1410 = vpack.i.b16 %v1405, %v1385
        %v1411 = vshrl.u32 %v1385, 16
        %v1412 = vshrl.u32 %v1405, 16
        %v1413 = vpack.i.b16 %v1412, %v1411
        %v1416 = vpack.i.b16 %v1407, %v1387
        %v1417 = vshrl.u32 %v1387, 16
        %v1418 = vshrl.u32 %v1407, 16
        %v1419 = vpack.i.b16 %v1418, %v1417
        %vm1420 = vcmask 64512
        %v1422 = vsel %vm1420, %v1014, 0
        %vm1424 = vcmask 1043456
        %v1426 = vsel %vm1424, %v1410, 0
        %1428 = vmatpush.bf16.msra.mxu0 0
        %1429 = vmatpush.bf16.msra.mxu0 0
        %1430 = vmatpush.bf16.msra.mxu0 0
        %1431 = vmatpush.bf16.msra.mxu0 0
        %1432 = vmatpush.bf16.msra.mxu0 0
        %1433 = vmatpush.bf16.msra.mxu0 0
        %1434 = vmatpush.bf16.msra.mxu0 0
        %1435 = vmatpush.bf16.msra.mxu0 %v1426
        %1436 = vmatmul.bf16.gmra.mxu0 %v1422
        %v1437 = vpop.f32.mrf.mxu0
        %v1438 = vadd.f32 %v654, %v1437
        %v1439 = vpop.f32.mrf.mxu0
        %1440 = vdwg.mxu0
        %v1442 = vsel %vm1420, %v1017, 0
        %v1445 = vsel %vm1424, %v1413, 0
        %1447 = vmatpush.bf16.msra.mxu0 0
        %1448 = vmatpush.bf16.msra.mxu0 0
        %1449 = vmatpush.bf16.msra.mxu0 0
        %1450 = vmatpush.bf16.msra.mxu0 0
        %1451 = vmatpush.bf16.msra.mxu0 0
        %1452 = vmatpush.bf16.msra.mxu0 0
        %1453 = vmatpush.bf16.msra.mxu0 0
        %1454 = vmatpush.bf16.msra.mxu0 %v1445
        %1455 = vmatmul.bf16.gmra.mxu0 %v1442
        %v1456 = vpop.f32.mrf.mxu0
        %v1457 = vadd.f32 %v655, %v1456
        %v1458 = vpop.f32.mrf.mxu0
        %1459 = vdwg.mxu0
        %v1461 = vsel %vm1420, %v1020, 0
        %v1464 = vsel %vm1424, %v1416, 0
        %1466 = vmatpush.bf16.msra.mxu0 0
        %1467 = vmatpush.bf16.msra.mxu0 0
        %1468 = vmatpush.bf16.msra.mxu0 0
        %1469 = vmatpush.bf16.msra.mxu0 0
        %1470 = vmatpush.bf16.msra.mxu0 0
        %1471 = vmatpush.bf16.msra.mxu0 0
        %1472 = vmatpush.bf16.msra.mxu0 0
        %1473 = vmatpush.bf16.msra.mxu0 %v1464
        %1474 = vmatmul.bf16.gmra.mxu0 %v1461
        %v1475 = vpop.f32.mrf.mxu0
        %v1476 = vadd.f32 %v656, %v1475
        %v1477 = vpop.f32.mrf.mxu0
        %1478 = vdwg.mxu0
        %v1480 = vsel %vm1420, %v1023, 0
        %v1483 = vsel %vm1424, %v1419, 0
        %1485 = vmatpush.bf16.msra.mxu0 0
        %1486 = vmatpush.bf16.msra.mxu0 0
        %1487 = vmatpush.bf16.msra.mxu0 0
        %1488 = vmatpush.bf16.msra.mxu0 0
        %1489 = vmatpush.bf16.msra.mxu0 0
        %1490 = vmatpush.bf16.msra.mxu0 0
        %1491 = vmatpush.bf16.msra.mxu0 0
        %1492 = vmatpush.bf16.msra.mxu0 %v1483
        %1493 = vmatmul.bf16.gmra.mxu0 %v1480
        %v1494 = vpop.f32.mrf.mxu0
        %v1495 = vadd.f32 %v657, %v1494
        %v1496 = vpop.f32.mrf.mxu0
        %1497 = vdwg.mxu0
        %v1498 = vsel %vm1420, %v1438, -inf
        %1499 = vmax.xlane.f32.xlu0 %v1498
        %v1500 = vpop.xlane.xlu0 %1499
        %v1501 = vsel %vm1420, %v1457, -inf
        %1502 = vmax.xlane.f32.xlu0 %v1501
        %v1503 = vpop.xlane.xlu0 %1502
        %v1504 = vsel %vm1420, %v1476, -inf
        %1505 = vmax.xlane.f32.xlu0 %v1504
        %v1506 = vpop.xlane.xlu0 %1505
        %v1507 = vsel %vm1420, %v1495, -inf
        %1508 = vmax.xlane.f32.xlu0 %v1507
        %v1509 = vpop.xlane.xlu0 %1508
        %v1510 = vsub.f32 %v1438, %v1500
        %v1511 = vsub.f32 %v1457, %v1503
        %v1512 = vsub.f32 %v1476, %v1506
        %v1513 = vsub.f32 %v1495, %v1509
        %v1514 = vmul.f32 %v1510, 1.442695
        %v1515 = vpow.pop %v1514
        %v1516 = vmul.f32 %v1511, 1.442695
        %v1517 = vpow.pop %v1516
        %v1518 = vmul.f32 %v1512, 1.442695
        %v1519 = vpow.pop %v1518
        %v1520 = vmul.f32 %v1513, 1.442695
        %v1521 = vpow.pop %v1520
        %v1522 = vsel %vm1420, %v1515, 0.0
        %1523 = vadd.xlane.f32.xlu0 %v1522
        %v1524 = vpop.xlane.xlu0 %1523
        %v1525 = vsel %vm1420, %v1517, 0.0
        %1526 = vadd.xlane.f32.xlu0 %v1525
        %v1527 = vpop.xlane.xlu0 %1526
        %v1528 = vsel %vm1420, %v1519, 0.0
        %1529 = vadd.xlane.f32.xlu0 %v1528
        %v1530 = vpop.xlane.xlu0 %1529
        %v1531 = vsel %vm1420, %v1521, 0.0
        %1532 = vadd.xlane.f32.xlu0 %v1531
        %v1533 = vpop.xlane.xlu0 %1532
        %v1534 = vrcp.pop %v1524
        %v1535 = vrcp.pop %v1527
        %v1536 = vrcp.pop %v1530
        %v1537 = vrcp.pop %v1533
        %v1538 = vmul.f32 %v1515, %v1534
        %v1539 = vmul.f32 %v1517, %v1535
        %v1540 = vmul.f32 %v1519, %v1536
        %v1541 = vmul.f32 %v1521, %v1537
        %v1542 = vpack.c.bf16 %v1538, %v1538
        %v1543 = vpack.c.bf16 %v1539, %v1539
        %v1544 = vpack.c.bf16 %v1540, %v1540
        %v1545 = vpack.c.bf16 %v1541, %v1541
        %1546 = vxpose.xlu0.c.b16.start [1/8] %v963, 128
        %1547 = vxpose.xlu0.c.b16.cont [2/8] 0, 128
        %1548 = vxpose.xlu0.c.b16.cont [3/8] 0, 128
        %1549 = vxpose.xlu0.c.b16.cont [4/8] 0, 128
        %1550 = vxpose.xlu0.c.b16.cont [5/8] 0, 128
        %1551 = vxpose.xlu0.c.b16.cont [6/8] 0, 128
        %1552 = vxpose.xlu0.c.b16.cont [7/8] 0, 128
        %1553 = vxpose.xlu0.c.b16.end [8/8] 0, 128
        %v1554 = vpop.trf.xlu0
        %v1555 = vpop.trf.xlu0
        %v1556 = vpop.trf.xlu0
        %v1557 = vpop.trf.xlu0
        %v1558 = vpop.trf.xlu0
        %v1559 = vpop.trf.xlu0
        %v1560 = vpop.trf.xlu0
        %v1561 = vpop.trf.xlu0
        %1562 = vxpose.xlu0.c.b16.start [1/8] %v964, 128
        %1563 = vxpose.xlu0.c.b16.cont [2/8] 0, 128
        %1564 = vxpose.xlu0.c.b16.cont [3/8] 0, 128
        %1565 = vxpose.xlu0.c.b16.cont [4/8] 0, 128
        %1566 = vxpose.xlu0.c.b16.cont [5/8] 0, 128
        %1567 = vxpose.xlu0.c.b16.cont [6/8] 0, 128
        %1568 = vxpose.xlu0.c.b16.cont [7/8] 0, 128
        %1569 = vxpose.xlu0.c.b16.end [8/8] 0, 128
        %v1570 = vpop.trf.xlu0
        %v1571 = vpop.trf.xlu0
        %v1572 = vpop.trf.xlu0
        %v1573 = vpop.trf.xlu0
        %v1574 = vpop.trf.xlu0
        %v1575 = vpop.trf.xlu0
        %v1576 = vpop.trf.xlu0
        %v1577 = vpop.trf.xlu0
        %1578 = vxpose.xlu0.c.b16.start [1/8] %v965, 128
        %1579 = vxpose.xlu0.c.b16.cont [2/8] 0, 128
        %1580 = vxpose.xlu0.c.b16.cont [3/8] 0, 128
        %1581 = vxpose.xlu0.c.b16.cont [4/8] 0, 128
        %1582 = vxpose.xlu0.c.b16.cont [5/8] 0, 128
        %1583 = vxpose.xlu0.c.b16.cont [6/8] 0, 128
        %1584 = vxpose.xlu0.c.b16.cont [7/8] 0, 128
        %1585 = vxpose.xlu0.c.b16.end [8/8] 0, 128
        %v1586 = vpop.trf.xlu0
        %v1587 = vpop.trf.xlu0
        %v1588 = vpop.trf.xlu0
        %v1589 = vpop.trf.xlu0
        %v1590 = vpop.trf.xlu0
        %v1591 = vpop.trf.xlu0
        %v1592 = vpop.trf.xlu0
        %v1593 = vpop.trf.xlu0
        %1594 = vxpose.xlu0.c.b16.start [1/8] %v966, 128
        %1595 = vxpose.xlu0.c.b16.cont [2/8] 0, 128
        %1596 = vxpose.xlu0.c.b16.cont [3/8] 0, 128
        %1597 = vxpose.xlu0.c.b16.cont [4/8] 0, 128
        %1598 = vxpose.xlu0.c.b16.cont [5/8] 0, 128
        %1599 = vxpose.xlu0.c.b16.cont [6/8] 0, 128
        %1600 = vxpose.xlu0.c.b16.cont [7/8] 0, 128
        %1601 = vxpose.xlu0.c.b16.end [8/8] 0, 128
        %v1602 = vpop.trf.xlu0
        %v1603 = vpop.trf.xlu0
        %v1604 = vpop.trf.xlu0
        %v1605 = vpop.trf.xlu0
        %v1606 = vpop.trf.xlu0
        %v1607 = vpop.trf.xlu0
        %v1608 = vpop.trf.xlu0
        %v1609 = vpop.trf.xlu0
        %1610 = vxpose.xlu0.c.b16.start [1/8] %v967, 128
        %1611 = vxpose.xlu0.c.b16.cont [2/8] 0, 128
        %1612 = vxpose.xlu0.c.b16.cont [3/8] 0, 128
        %1613 = vxpose.xlu0.c.b16.cont [4/8] 0, 128
        %1614 = vxpose.xlu0.c.b16.cont [5/8] 0, 128
        %1615 = vxpose.xlu0.c.b16.cont [6/8] 0, 128
        %1616 = vxpose.xlu0.c.b16.cont [7/8] 0, 128
        %1617 = vxpose.xlu0.c.b16.end [8/8] 0, 128
        %v1618 = vpop.trf.xlu0
        %v1619 = vpop.trf.xlu0
        %v1620 = vpop.trf.xlu0
        %v1621 = vpop.trf.xlu0
        %v1622 = vpop.trf.xlu0
        %v1623 = vpop.trf.xlu0
        %v1624 = vpop.trf.xlu0
        %v1625 = vpop.trf.xlu0
        %1626 = vxpose.xlu0.c.b16.start [1/8] %v968, 128
        %1627 = vxpose.xlu0.c.b16.cont [2/8] 0, 128
        %1628 = vxpose.xlu0.c.b16.cont [3/8] 0, 128
        %1629 = vxpose.xlu0.c.b16.cont [4/8] 0, 128
        %1630 = vxpose.xlu0.c.b16.cont [5/8] 0, 128
        %1631 = vxpose.xlu0.c.b16.cont [6/8] 0, 128
        %1632 = vxpose.xlu0.c.b16.cont [7/8] 0, 128
        %1633 = vxpose.xlu0.c.b16.end [8/8] 0, 128
        %v1634 = vpop.trf.xlu0
        %v1635 = vpop.trf.xlu0
        %v1636 = vpop.trf.xlu0
        %v1637 = vpop.trf.xlu0
        %v1638 = vpop.trf.xlu0
        %v1639 = vpop.trf.xlu0
        %v1640 = vpop.trf.xlu0
        %v1641 = vpop.trf.xlu0
        %1642 = vxpose.xlu0.c.b16.start [1/8] %v969, 128
        %1643 = vxpose.xlu0.c.b16.cont [2/8] 0, 128
        %1644 = vxpose.xlu0.c.b16.cont [3/8] 0, 128
        %1645 = vxpose.xlu0.c.b16.cont [4/8] 0, 128
        %1646 = vxpose.xlu0.c.b16.cont [5/8] 0, 128
        %1647 = vxpose.xlu0.c.b16.cont [6/8] 0, 128
        %1648 = vxpose.xlu0.c.b16.cont [7/8] 0, 128
        %1649 = vxpose.xlu0.c.b16.end [8/8] 0, 128
        %v1650 = vpop.trf.xlu0
        %v1651 = vpop.trf.xlu0
        %v1652 = vpop.trf.xlu0
        %v1653 = vpop.trf.xlu0
        %v1654 = vpop.trf.xlu0
        %v1655 = vpop.trf.xlu0
        %v1656 = vpop.trf.xlu0
        %v1657 = vpop.trf.xlu0
        %1658 = vxpose.xlu0.c.b16.start [1/8] %v970, 128
        %1659 = vxpose.xlu0.c.b16.cont [2/8] 0, 128
        %1660 = vxpose.xlu0.c.b16.cont [3/8] 0, 128
        %1661 = vxpose.xlu0.c.b16.cont [4/8] 0, 128
        %1662 = vxpose.xlu0.c.b16.cont [5/8] 0, 128
        %1663 = vxpose.xlu0.c.b16.cont [6/8] 0, 128
        %1664 = vxpose.xlu0.c.b16.cont [7/8] 0, 128
        %1665 = vxpose.xlu0.c.b16.end [8/8] 0, 128
        %v1666 = vpop.trf.xlu0
        %v1667 = vpop.trf.xlu0
        %v1668 = vpop.trf.xlu0
        %v1669 = vpop.trf.xlu0
        %v1670 = vpop.trf.xlu0
        %v1671 = vpop.trf.xlu0
        %v1672 = vpop.trf.xlu0
        %v1673 = vpop.trf.xlu0
        %v1674 = vrot.slane %v1618, 4
        %v1675 = vsel %vm972, %v1674, %v1554
        %v1677 = vunpack.c.l.s4 1983009808
        %v1678 = vunpack.c.0.s8 %v1677
        %v1679 = vperm.slane %v1675, %v1678
        %v1680 = vrot.slane %v1650, 4
        %v1681 = vsel %vm972, %v1680, %v1586
        %v1683 = vunpack.c.l.s4 1983009808
        %v1684 = vunpack.c.0.s8 %v1683
        %v1685 = vperm.slane %v1681, %v1684
        %v1686 = vrot.slane %v1685, 4
        %v1687 = vsel %vm972, %v1686, %v1679
        %v1688 = vrot.slane %v1679, 4
        %v1689 = vsel %vm972, %v1685, %v1688
        %v1691 = vunpack.c.l.s4 1934713408
        %v1692 = vunpack.c.0.s8 %v1691
        %v1693 = vperm.slane %v1687, %v1692
        %v1695 = vunpack.c.l.s4 1934713408
        %v1696 = vunpack.c.0.s8 %v1695
        %v1697 = vperm.slane %v1689, %v1696
        %v1698 = vrot.slane %v1693, 4
        %v1699 = vsel %vm972, 0, %v1698
        %v1700 = vrot.slane %v1697, 4
        %v1701 = vsel %vm972, 0, %v1700
        %v1702 = vrot.slane %v1634, 4
        %v1703 = vsel %vm972, %v1702, %v1570
        %v1705 = vunpack.c.l.s4 1983009808
        %v1706 = vunpack.c.0.s8 %v1705
        %v1707 = vperm.slane %v1703, %v1706
        %v1708 = vrot.slane %v1666, 4
        %v1709 = vsel %vm972, %v1708, %v1602
        %v1711 = vunpack.c.l.s4 1983009808
        %v1712 = vunpack.c.0.s8 %v1711
        %v1713 = vperm.slane %v1709, %v1712
        %v1714 = vrot.slane %v1713, 4
        %v1715 = vsel %vm972, %v1714, %v1707
        %v1716 = vrot.slane %v1707, 4
        %v1717 = vsel %vm972, %v1713, %v1716
        %v1719 = vunpack.c.l.s4 1934713408
        %v1720 = vunpack.c.0.s8 %v1719
        %v1721 = vperm.slane %v1715, %v1720
        %v1723 = vunpack.c.l.s4 1934713408
        %v1724 = vunpack.c.0.s8 %v1723
        %v1725 = vperm.slane %v1717, %v1724
        %v1726 = vrot.slane %v1721, 4
        %v1727 = vsel %vm972, 0, %v1726
        %v1728 = vrot.slane %v1725, 4
        %v1729 = vsel %vm972, 0, %v1728
        %v1732 = vpack.i.b16 %v1721, %v1693
        %v1734 = vshrl.u32 %v1693, 16
        %v1735 = vshrl.u32 %v1721, 16
        %v1736 = vpack.i.b16 %v1735, %v1734
        %v1740 = vpack.i.b16 %v1727, %v1699
        %v1742 = vshrl.u32 %v1699, 16
        %v1743 = vshrl.u32 %v1727, 16
        %v1744 = vpack.i.b16 %v1743, %v1742
        %v1748 = vpack.i.b16 %v1725, %v1697
        %v1750 = vshrl.u32 %v1697, 16
        %v1751 = vshrl.u32 %v1725, 16
        %v1752 = vpack.i.b16 %v1751, %v1750
        %v1756 = vpack.i.b16 %v1729, %v1701
        %v1758 = vshrl.u32 %v1701, 16
        %v1759 = vshrl.u32 %v1729, 16
        %v1760 = vpack.i.b16 %v1759, %v1758
        %1762 = vxpose.xlu0.c.b16.start [1/8] %v1732, 128
        %1763 = vxpose.xlu0.c.b16.cont [2/8] 0, 128
        %1764 = vxpose.xlu0.c.b16.cont [3/8] 0, 128
        %1765 = vxpose.xlu0.c.b16.cont [4/8] 0, 128
        %1766 = vxpose.xlu0.c.b16.cont [5/8] 0, 128
        %1767 = vxpose.xlu0.c.b16.cont [6/8] 0, 128
        %1768 = vxpose.xlu0.c.b16.cont [7/8] 0, 128
        %1769 = vxpose.xlu0.c.b16.end [8/8] 0, 128
        %v1770 = vpop.trf.xlu0
        %v1771 = vpop.trf.xlu0
        %v1772 = vpop.trf.xlu0
        %v1773 = vpop.trf.xlu0
        %v1774 = vpop.trf.xlu0
        %v1775 = vpop.trf.xlu0
        %v1776 = vpop.trf.xlu0
        %v1777 = vpop.trf.xlu0
        %1778 = vxpose.xlu0.c.b16.start [1/8] %v1736, 128
        %1779 = vxpose.xlu0.c.b16.cont [2/8] 0, 128
        %1780 = vxpose.xlu0.c.b16.cont [3/8] 0, 128
        %1781 = vxpose.xlu0.c.b16.cont [4/8] 0, 128
        %1782 = vxpose.xlu0.c.b16.cont [5/8] 0, 128
        %1783 = vxpose.xlu0.c.b16.cont [6/8] 0, 128
        %1784 = vxpose.xlu0.c.b16.cont [7/8] 0, 128
        %1785 = vxpose.xlu0.c.b16.end [8/8] 0, 128
        %v1786 = vpop.trf.xlu0
        %v1787 = vpop.trf.xlu0
        %v1788 = vpop.trf.xlu0
        %v1789 = vpop.trf.xlu0
        %v1790 = vpop.trf.xlu0
        %v1791 = vpop.trf.xlu0
        %v1792 = vpop.trf.xlu0
        %v1793 = vpop.trf.xlu0
        %1794 = vxpose.xlu0.c.b16.start [1/8] %v1740, 128
        %1795 = vxpose.xlu0.c.b16.cont [2/8] 0, 128
        %1796 = vxpose.xlu0.c.b16.cont [3/8] 0, 128
        %1797 = vxpose.xlu0.c.b16.cont [4/8] 0, 128
        %1798 = vxpose.xlu0.c.b16.cont [5/8] 0, 128
        %1799 = vxpose.xlu0.c.b16.cont [6/8] 0, 128
        %1800 = vxpose.xlu0.c.b16.cont [7/8] 0, 128
        %1801 = vxpose.xlu0.c.b16.end [8/8] 0, 128
        %v1802 = vpop.trf.xlu0
        %v1803 = vpop.trf.xlu0
        %v1804 = vpop.trf.xlu0
        %v1805 = vpop.trf.xlu0
        %v1806 = vpop.trf.xlu0
        %v1807 = vpop.trf.xlu0
        %v1808 = vpop.trf.xlu0
        %v1809 = vpop.trf.xlu0
        %1810 = vxpose.xlu0.c.b16.start [1/8] %v1744, 128
        %1811 = vxpose.xlu0.c.b16.cont [2/8] 0, 128
        %1812 = vxpose.xlu0.c.b16.cont [3/8] 0, 128
        %1813 = vxpose.xlu0.c.b16.cont [4/8] 0, 128
        %1814 = vxpose.xlu0.c.b16.cont [5/8] 0, 128
        %1815 = vxpose.xlu0.c.b16.cont [6/8] 0, 128
        %1816 = vxpose.xlu0.c.b16.cont [7/8] 0, 128
        %1817 = vxpose.xlu0.c.b16.end [8/8] 0, 128
        %v1818 = vpop.trf.xlu0
        %v1819 = vpop.trf.xlu0
        %v1820 = vpop.trf.xlu0
        %v1821 = vpop.trf.xlu0
        %v1822 = vpop.trf.xlu0
        %v1823 = vpop.trf.xlu0
        %v1824 = vpop.trf.xlu0
        %v1825 = vpop.trf.xlu0
        %1826 = vxpose.xlu0.c.b16.start [1/8] %v1748, 128
        %1827 = vxpose.xlu0.c.b16.cont [2/8] 0, 128
        %1828 = vxpose.xlu0.c.b16.cont [3/8] 0, 128
        %1829 = vxpose.xlu0.c.b16.cont [4/8] 0, 128
        %1830 = vxpose.xlu0.c.b16.cont [5/8] 0, 128
        %1831 = vxpose.xlu0.c.b16.cont [6/8] 0, 128
        %1832 = vxpose.xlu0.c.b16.cont [7/8] 0, 128
        %1833 = vxpose.xlu0.c.b16.end [8/8] 0, 128
        %v1834 = vpop.trf.xlu0
        %v1835 = vpop.trf.xlu0
        %v1836 = vpop.trf.xlu0
        %v1837 = vpop.trf.xlu0
        %v1838 = vpop.trf.xlu0
        %v1839 = vpop.trf.xlu0
        %v1840 = vpop.trf.xlu0
        %v1841 = vpop.trf.xlu0
        %1842 = vxpose.xlu0.c.b16.start [1/8] %v1752, 128
        %1843 = vxpose.xlu0.c.b16.cont [2/8] 0, 128
        %1844 = vxpose.xlu0.c.b16.cont [3/8] 0, 128
        %1845 = vxpose.xlu0.c.b16.cont [4/8] 0, 128
        %1846 = vxpose.xlu0.c.b16.cont [5/8] 0, 128
        %1847 = vxpose.xlu0.c.b16.cont [6/8] 0, 128
        %1848 = vxpose.xlu0.c.b16.cont [7/8] 0, 128
        %1849 = vxpose.xlu0.c.b16.end [8/8] 0, 128
        %v1850 = vpop.trf.xlu0
        %v1851 = vpop.trf.xlu0
        %v1852 = vpop.trf.xlu0
        %v1853 = vpop.trf.xlu0
        %v1854 = vpop.trf.xlu0
        %v1855 = vpop.trf.xlu0
        %v1856 = vpop.trf.xlu0
        %v1857 = vpop.trf.xlu0
        %1858 = vxpose.xlu0.c.b16.start [1/8] %v1756, 128
        %1859 = vxpose.xlu0.c.b16.cont [2/8] 0, 128
        %1860 = vxpose.xlu0.c.b16.cont [3/8] 0, 128
        %1861 = vxpose.xlu0.c.b16.cont [4/8] 0, 128
        %1862 = vxpose.xlu0.c.b16.cont [5/8] 0, 128
        %1863 = vxpose.xlu0.c.b16.cont [6/8] 0, 128
        %1864 = vxpose.xlu0.c.b16.cont [7/8] 0, 128
        %1865 = vxpose.xlu0.c.b16.end [8/8] 0, 128
        %v1866 = vpop.trf.xlu0
        %v1867 = vpop.trf.xlu0
        %v1868 = vpop.trf.xlu0
        %v1869 = vpop.trf.xlu0
        %v1870 = vpop.trf.xlu0
        %v1871 = vpop.trf.xlu0
        %v1872 = vpop.trf.xlu0
        %v1873 = vpop.trf.xlu0
        %1874 = vxpose.xlu0.c.b16.start [1/8] %v1760, 128
        %1875 = vxpose.xlu0.c.b16.cont [2/8] 0, 128
        %1876 = vxpose.xlu0.c.b16.cont [3/8] 0, 128
        %1877 = vxpose.xlu0.c.b16.cont [4/8] 0, 128
        %1878 = vxpose.xlu0.c.b16.cont [5/8] 0, 128
        %1879 = vxpose.xlu0.c.b16.cont [6/8] 0, 128
        %1880 = vxpose.xlu0.c.b16.cont [7/8] 0, 128
        %1881 = vxpose.xlu0.c.b16.end [8/8] 0, 128
        %v1882 = vpop.trf.xlu0
        %v1883 = vpop.trf.xlu0
        %v1884 = vpop.trf.xlu0
        %v1885 = vpop.trf.xlu0
        %v1886 = vpop.trf.xlu0
        %v1887 = vpop.trf.xlu0
        %v1888 = vpop.trf.xlu0
        %v1889 = vpop.trf.xlu0
        %v1890 = vrot.slane %v1834, 4
        %v1891 = vsel %vm972, %v1890, %v1770
        %v1893 = vunpack.c.l.s4 1983009808
        %v1894 = vunpack.c.0.s8 %v1893
        %v1895 = vperm.slane %v1891, %v1894
        %v1896 = vrot.slane %v1866, 4
        %v1897 = vsel %vm972, %v1896, %v1802
        %v1899 = vunpack.c.l.s4 1983009808
        %v1900 = vunpack.c.0.s8 %v1899
        %v1901 = vperm.slane %v1897, %v1900
        %v1902 = vrot.slane %v1901, 4
        %v1903 = vsel %vm972, %v1902, %v1895
        %v1905 = vunpack.c.l.s4 1934713408
        %v1906 = vunpack.c.0.s8 %v1905
        %v1907 = vperm.slane %v1903, %v1906
        %v1908 = vrot.slane %v1907, 4
        %v1909 = vsel %vm972, 0, %v1908
        %v1910 = vrot.slane %v1850, 4
        %v1911 = vsel %vm972, %v1910, %v1786
        %v1913 = vunpack.c.l.s4 1983009808
        %v1914 = vunpack.c.0.s8 %v1913
        %v1915 = vperm.slane %v1911, %v1914
        %v1916 = vrot.slane %v1882, 4
        %v1917 = vsel %vm972, %v1916, %v1818
        %v1919 = vunpack.c.l.s4 1983009808
        %v1920 = vunpack.c.0.s8 %v1919
        %v1921 = vperm.slane %v1917, %v1920
        %v1922 = vrot.slane %v1921, 4
        %v1923 = vsel %vm972, %v1922, %v1915
        %v1925 = vunpack.c.l.s4 1934713408
        %v1926 = vunpack.c.0.s8 %v1925
        %v1927 = vperm.slane %v1923, %v1926
        %v1928 = vrot.slane %v1927, 4
        %v1929 = vsel %vm972, 0, %v1928
        %v1932 = vpack.i.b16 %v1927, %v1907
        %v1933 = vshrl.u32 %v1907, 16
        %v1934 = vshrl.u32 %v1927, 16
        %v1935 = vpack.i.b16 %v1934, %v1933
        %v1938 = vpack.i.b16 %v1929, %v1909
        %v1939 = vshrl.u32 %v1909, 16
        %v1940 = vshrl.u32 %v1929, 16
        %v1941 = vpack.i.b16 %v1940, %v1939
        %v1943 = vsel %vm1420, %v1932, 0
        %v1946 = vsel %vm1420, %v1542, 0
        %1948 = vmatpush.bf16.xpose.msra.mxu0 0
        %1949 = vmatpush.bf16.xpose.msra.mxu0 0
        %1950 = vmatpush.bf16.xpose.msra.mxu0 0
        %1951 = vmatpush.bf16.xpose.msra.mxu0 0
        %1952 = vmatpush.bf16.xpose.msra.mxu0 0
        %1953 = vmatpush.bf16.xpose.msra.mxu0 0
        %1954 = vmatpush.bf16.xpose.msra.mxu0 0
        %1955 = vmatpush.bf16.xpose.msra.mxu0 %v1946
        %1956 = vmatmul.bf16.gmra.mxu0 %v1943
        %v1957 = vpop.f32.mrf.mxu0
        %v1958 = vadd.f32 0.0, %v1957
        %v1959 = vpop.f32.mrf.mxu0
        %1960 = vdwg.mxu0
        %v1962 = vsel %vm1420, %v1935, 0
        %v1965 = vsel %vm1420, %v1543, 0
        %1967 = vmatpush.bf16.xpose.msra.mxu0 0
        %1968 = vmatpush.bf16.xpose.msra.mxu0 0
        %1969 = vmatpush.bf16.xpose.msra.mxu0 0
        %1970 = vmatpush.bf16.xpose.msra.mxu0 0
        %1971 = vmatpush.bf16.xpose.msra.mxu0 0
        %1972 = vmatpush.bf16.xpose.msra.mxu0 0
        %1973 = vmatpush.bf16.xpose.msra.mxu0 0
        %1974 = vmatpush.bf16.xpose.msra.mxu0 %v1965
        %1975 = vmatmul.bf16.gmra.mxu0 %v1962
        %v1976 = vpop.f32.mrf.mxu0
        %v1977 = vadd.f32 0.0, %v1976
        %v1978 = vpop.f32.mrf.mxu0
        %1979 = vdwg.mxu0
        %v1981 = vsel %vm1420, %v1938, 0
        %v1984 = vsel %vm1420, %v1544, 0
        %1986 = vmatpush.bf16.xpose.msra.mxu0 0
        %1987 = vmatpush.bf16.xpose.msra.mxu0 0
        %1988 = vmatpush.bf16.xpose.msra.mxu0 0
        %1989 = vmatpush.bf16.xpose.msra.mxu0 0
        %1990 = vmatpush.bf16.xpose.msra.mxu0 0
        %1991 = vmatpush.bf16.xpose.msra.mxu0 0
        %1992 = vmatpush.bf16.xpose.msra.mxu0 0
        %1993 = vmatpush.bf16.xpose.msra.mxu0 %v1984
        %1994 = vmatmul.bf16.gmra.mxu0 %v1981
        %v1995 = vpop.f32.mrf.mxu0
        %v1996 = vadd.f32 0.0, %v1995
        %v1997 = vpop.f32.mrf.mxu0
        %1998 = vdwg.mxu0
        %v2000 = vsel %vm1420, %v1941, 0
        %v2003 = vsel %vm1420, %v1545, 0
        %2005 = vmatpush.bf16.xpose.msra.mxu0 0
        %2006 = vmatpush.bf16.xpose.msra.mxu0 0
        %2007 = vmatpush.bf16.xpose.msra.mxu0 0
        %2008 = vmatpush.bf16.xpose.msra.mxu0 0
        %2009 = vmatpush.bf16.xpose.msra.mxu0 0
        %2010 = vmatpush.bf16.xpose.msra.mxu0 0
        %2011 = vmatpush.bf16.xpose.msra.mxu0 0
        %2012 = vmatpush.bf16.xpose.msra.mxu0 %v2003
        %2013 = vmatmul.bf16.gmra.mxu0 %v2000
        %v2014 = vpop.f32.mrf.mxu0
        %v2015 = vadd.f32 0.0, %v2014
        %v2016 = vpop.f32.mrf.mxu0
        %2017 = vdwg.mxu0
        %2018 = vxpose.xlu0.b32.start [1/16] %v1958, 128
        %2019 = vxpose.xlu0.b32.cont [2/16] 0.0, 128
        %2020 = vxpose.xlu0.b32.cont [3/16] 0.0, 128
        %2021 = vxpose.xlu0.b32.cont [4/16] 0.0, 128
        %2022 = vxpose.xlu0.b32.cont [5/16] 0.0, 128
        %2023 = vxpose.xlu0.b32.cont [6/16] 0.0, 128
        %2024 = vxpose.xlu0.b32.cont [7/16] 0.0, 128
        %2025 = vxpose.xlu0.b32.cont [8/16] 0.0, 128
        %2026 = vxpose.xlu0.b32.cont [9/16] 0.0, 128
        %2027 = vxpose.xlu0.b32.cont [10/16] 0.0, 128
        %2028 = vxpose.xlu0.b32.cont [11/16] 0.0, 128
        %2029 = vxpose.xlu0.b32.cont [12/16] 0.0, 128
        %2030 = vxpose.xlu0.b32.cont [13/16] 0.0, 128
        %2031 = vxpose.xlu0.b32.cont [14/16] 0.0, 128
        %2032 = vxpose.xlu0.b32.cont [15/16] 0.0, 128
        %2033 = vxpose.xlu0.b32.end [16/16] 0.0, 128
        %v2034 = vpop.trf.xlu0
        %v2035 = vpop.trf.xlu0
        %v2036 = vpop.trf.xlu0
        %v2037 = vpop.trf.xlu0
        %v2038 = vpop.trf.xlu0
        %v2039 = vpop.trf.xlu0
        %v2040 = vpop.trf.xlu0
        %v2041 = vpop.trf.xlu0
        %v2042 = vpop.trf.xlu0
        %v2043 = vpop.trf.xlu0
        %v2044 = vpop.trf.xlu0
        %v2045 = vpop.trf.xlu0
        %v2046 = vpop.trf.xlu0
        %v2047 = vpop.trf.xlu0
        %v2048 = vpop.trf.xlu0
        %v2049 = vpop.trf.xlu0
        %2050 = vxpose.xlu0.b32.start [1/16] %v1977, 128
        %2051 = vxpose.xlu0.b32.cont [2/16] 0.0, 128
        %2052 = vxpose.xlu0.b32.cont [3/16] 0.0, 128
        %2053 = vxpose.xlu0.b32.cont [4/16] 0.0, 128
        %2054 = vxpose.xlu0.b32.cont [5/16] 0.0, 128
        %2055 = vxpose.xlu0.b32.cont [6/16] 0.0, 128
        %2056 = vxpose.xlu0.b32.cont [7/16] 0.0, 128
        %2057 = vxpose.xlu0.b32.cont [8/16] 0.0, 128
        %2058 = vxpose.xlu0.b32.cont [9/16] 0.0, 128
        %2059 = vxpose.xlu0.b32.cont [10/16] 0.0, 128
        %2060 = vxpose.xlu0.b32.cont [11/16] 0.0, 128
        %2061 = vxpose.xlu0.b32.cont [12/16] 0.0, 128
        %2062 = vxpose.xlu0.b32.cont [13/16] 0.0, 128
        %2063 = vxpose.xlu0.b32.cont [14/16] 0.0, 128
        %2064 = vxpose.xlu0.b32.cont [15/16] 0.0, 128
        %2065 = vxpose.xlu0.b32.end [16/16] 0.0, 128
        %v2066 = vpop.trf.xlu0
        %v2067 = vpop.trf.xlu0
        %v2068 = vpop.trf.xlu0
        %v2069 = vpop.trf.xlu0
        %v2070 = vpop.trf.xlu0
        %v2071 = vpop.trf.xlu0
        %v2072 = vpop.trf.xlu0
        %v2073 = vpop.trf.xlu0
        %v2074 = vpop.trf.xlu0
        %v2075 = vpop.trf.xlu0
        %v2076 = vpop.trf.xlu0
        %v2077 = vpop.trf.xlu0
        %v2078 = vpop.trf.xlu0
        %v2079 = vpop.trf.xlu0
        %v2080 = vpop.trf.xlu0
        %v2081 = vpop.trf.xlu0
        %2082 = vxpose.xlu0.b32.start [1/16] %v1996, 128
        %2083 = vxpose.xlu0.b32.cont [2/16] 0.0, 128
        %2084 = vxpose.xlu0.b32.cont [3/16] 0.0, 128
        %2085 = vxpose.xlu0.b32.cont [4/16] 0.0, 128
        %2086 = vxpose.xlu0.b32.cont [5/16] 0.0, 128
        %2087 = vxpose.xlu0.b32.cont [6/16] 0.0, 128
        %2088 = vxpose.xlu0.b32.cont [7/16] 0.0, 128
        %2089 = vxpose.xlu0.b32.cont [8/16] 0.0, 128
        %2090 = vxpose.xlu0.b32.cont [9/16] 0.0, 128
        %2091 = vxpose.xlu0.b32.cont [10/16] 0.0, 128
        %2092 = vxpose.xlu0.b32.cont [11/16] 0.0, 128
        %2093 = vxpose.xlu0.b32.cont [12/16] 0.0, 128
        %2094 = vxpose.xlu0.b32.cont [13/16] 0.0, 128
        %2095 = vxpose.xlu0.b32.cont [14/16] 0.0, 128
        %2096 = vxpose.xlu0.b32.cont [15/16] 0.0, 128
        %2097 = vxpose.xlu0.b32.end [16/16] 0.0, 128
        %v2098 = vpop.trf.xlu0
        %v2099 = vpop.trf.xlu0
        %v2100 = vpop.trf.xlu0
        %v2101 = vpop.trf.xlu0
        %v2102 = vpop.trf.xlu0
        %v2103 = vpop.trf.xlu0
        %v2104 = vpop.trf.xlu0
        %v2105 = vpop.trf.xlu0
        %v2106 = vpop.trf.xlu0
        %v2107 = vpop.trf.xlu0
        %v2108 = vpop.trf.xlu0
        %v2109 = vpop.trf.xlu0
        %v2110 = vpop.trf.xlu0
        %v2111 = vpop.trf.xlu0
        %v2112 = vpop.trf.xlu0
        %v2113 = vpop.trf.xlu0
        %2114 = vxpose.xlu0.b32.start [1/16] %v2015, 128
        %2115 = vxpose.xlu0.b32.cont [2/16] 0.0, 128
        %2116 = vxpose.xlu0.b32.cont [3/16] 0.0, 128
        %2117 = vxpose.xlu0.b32.cont [4/16] 0.0, 128
        %2118 = vxpose.xlu0.b32.cont [5/16] 0.0, 128
        %2119 = vxpose.xlu0.b32.cont [6/16] 0.0, 128
        %2120 = vxpose.xlu0.b32.cont [7/16] 0.0, 128
        %2121 = vxpose.xlu0.b32.cont [8/16] 0.0, 128
        %2122 = vxpose.xlu0.b32.cont [9/16] 0.0, 128
        %2123 = vxpose.xlu0.b32.cont [10/16] 0.0, 128
        %2124 = vxpose.xlu0.b32.cont [11/16] 0.0, 128
        %2125 = vxpose.xlu0.b32.cont [12/16] 0.0, 128
        %2126 = vxpose.xlu0.b32.cont [13/16] 0.0, 128
        %2127 = vxpose.xlu0.b32.cont [14/16] 0.0, 128
        %2128 = vxpose.xlu0.b32.cont [15/16] 0.0, 128
        %2129 = vxpose.xlu0.b32.end [16/16] 0.0, 128
        %v2130 = vpop.trf.xlu0
        %v2131 = vpop.trf.xlu0
        %v2132 = vpop.trf.xlu0
        %v2133 = vpop.trf.xlu0
        %v2134 = vpop.trf.xlu0
        %v2135 = vpop.trf.xlu0
        %v2136 = vpop.trf.xlu0
        %v2137 = vpop.trf.xlu0
        %v2138 = vpop.trf.xlu0
        %v2139 = vpop.trf.xlu0
        %v2140 = vpop.trf.xlu0
        %v2141 = vpop.trf.xlu0
        %v2142 = vpop.trf.xlu0
        %v2143 = vpop.trf.xlu0
        %v2144 = vpop.trf.xlu0
        %v2145 = vpop.trf.xlu0
        %v2146 = vrot.slane %v2098, 4
        %v2147 = vsel %vm755, %v2146, %v2034
        %v2148 = vrot.slane %v2034, 4
        %v2149 = vsel %vm755, %v2098, %v2148
        %v2151 = vunpack.c.l.s4 1983009808
        %v2152 = vunpack.c.0.s8 %v2151
        %v2153 = vperm.slane %v2147, %v2152
        %v2155 = vunpack.c.l.s4 1983009808
        %v2156 = vunpack.c.0.s8 %v2155
        %v2157 = vperm.slane %v2149, %v2156
        %v2158 = vrot.slane %v2130, 4
        %v2159 = vsel %vm755, %v2158, %v2066
        %v2160 = vrot.slane %v2066, 4
        %v2161 = vsel %vm755, %v2130, %v2160
        %v2163 = vunpack.c.l.s4 1983009808
        %v2164 = vunpack.c.0.s8 %v2163
        %v2165 = vperm.slane %v2159, %v2164
        %v2167 = vunpack.c.l.s4 1983009808
        %v2168 = vunpack.c.0.s8 %v2167
        %v2169 = vperm.slane %v2161, %v2168
        %v2170 = vrot.slane %v2165, 4
        %v2171 = vsel %vm755, %v2170, %v2153
        %v2172 = vrot.slane %v2153, 4
        %v2173 = vsel %vm755, %v2165, %v2172
        %v2175 = vunpack.c.l.s4 1934713408
        %v2176 = vunpack.c.0.s8 %v2175
        %v2177 = vperm.slane %v2171, %v2176
        %v2179 = vunpack.c.l.s4 1934713408
        %v2180 = vunpack.c.0.s8 %v2179
        %v2181 = vperm.slane %v2173, %v2180
        %v2182 = vrot.slane %v2169, 4
        %v2183 = vsel %vm755, %v2182, %v2157
        %v2184 = vrot.slane %v2157, 4
        %v2185 = vsel %vm755, %v2169, %v2184
        %v2187 = vunpack.c.l.s4 1934713408
        %v2188 = vunpack.c.0.s8 %v2187
        %v2189 = vperm.slane %v2183, %v2188
        %v2191 = vunpack.c.l.s4 1934713408
        %v2192 = vunpack.c.0.s8 %v2191
        %v2193 = vperm.slane %v2185, %v2192
        %v2194 = vrot.slane %v2177, 4
        %v2195 = vsel %vm755, 0.0, %v2194
        %v2196 = vrot.slane %v2181, 4
        %v2197 = vsel %vm755, 0.0, %v2196
        %v2198 = vrot.slane %v2189, 4
        %v2199 = vsel %vm755, 0.0, %v2198
        %v2200 = vrot.slane %v2193, 4
        %v2201 = vsel %vm755, 0.0, %v2200
        %v2202 = vsel %vm755, %v2196, %v2177
        %v2204 = vunpack.c.l.s4 1983009808
        %v2205 = vunpack.c.0.s8 %v2204
        %v2206 = vperm.slane %v2202, %v2205
        %v2207 = vrot.slane %v2197, 4
        %v2208 = vsel %vm755, %v2207, %v2195
        %v2210 = vunpack.c.l.s4 1983009808
        %v2211 = vunpack.c.0.s8 %v2210
        %v2212 = vperm.slane %v2208, %v2211
        %v2213 = vsel %vm755, %v2200, %v2189
        %v2215 = vunpack.c.l.s4 1983009808
        %v2216 = vunpack.c.0.s8 %v2215
        %v2217 = vperm.slane %v2213, %v2216
        %v2218 = vrot.slane %v2201, 4
        %v2219 = vsel %vm755, %v2218, %v2199
        %v2221 = vunpack.c.l.s4 1983009808
        %v2222 = vunpack.c.0.s8 %v2221
        %v2223 = vperm.slane %v2219, %v2222
        %v2224 = vrot.slane %v2212, 4
        %v2225 = vsel %vm755, %v2224, %v2206
        %v2226 = vrot.slane %v2206, 4
        %v2227 = vsel %vm755, %v2212, %v2226
        %v2229 = vunpack.c.l.s4 1934713408
        %v2230 = vunpack.c.0.s8 %v2229
        %v2231 = vperm.slane %v2225, %v2230
        %v2233 = vunpack.c.l.s4 1934713408
        %v2234 = vunpack.c.0.s8 %v2233
        %v2235 = vperm.slane %v2227, %v2234
        %v2236 = vrot.slane %v2223, 4
        %v2237 = vsel %vm755, %v2236, %v2217
        %v2238 = vrot.slane %v2217, 4
        %v2239 = vsel %vm755, %v2223, %v2238
        %v2241 = vunpack.c.l.s4 1934713408
        %v2242 = vunpack.c.0.s8 %v2241
        %v2243 = vperm.slane %v2237, %v2242
        %v2245 = vunpack.c.l.s4 1934713408
        %v2246 = vunpack.c.0.s8 %v2245
        %v2247 = vperm.slane %v2239, %v2246
        %v2248 = vrot.slane %v2243, 4
        %v2249 = vsel %vm755, %v2248, %v2231
        %v2250 = vrot.slane %v2231, 4
        %v2251 = vsel %vm755, %v2243, %v2250
        %v2252 = vrot.slane %v2247, 4
        %v2253 = vsel %vm755, %v2252, %v2235
        %v2254 = vrot.slane %v2235, 4
        %v2255 = vsel %vm755, %v2247, %v2254
        %2257 = vrot.lane.b32.xlu0 %v2251, 8
        %v2258 = vpop.permute.xlu0 %2257
        %2261 = vrot.lane.b32.xlu0 %v2253, 16
        %v2262 = vpop.permute.xlu0 %2261
        %2265 = vrot.lane.b32.xlu0 %v2255, 24
        %v2266 = vpop.permute.xlu0 %2265
        %v2268 = vsel %vm1420, %v2249, %v2258
        %vm2269 = vcmask 130048
        %v2270 = vsel %vm2269, %v2268, %v2262
        %vm2271 = vcmask 195584
        %v2272 = vsel %vm2271, %v2270, %v2266
        %v2273 = vpack.c.bf16 %v2272, %v2272
        %v2278 = vunpack.c.l.b16 %v740
        %v2279 = vunpack.c.l.b16 %v741
        %v2280 = vunpack.c.l.b16 %v742
        %v2281 = vunpack.c.l.b16 %v743
        %v2282 = vpack.c.b16 %v2279, %v2278
        %v2283 = vpack.c.b16 %v2281, %v2280
        %v2287 = vsel %vm681, %v2273, 0
        %2289 = vmatpush.bf16.msra.mxu0 0
        %2290 = vmatpush.bf16.msra.mxu0 0
        %2291 = vmatpush.bf16.msra.mxu0 0
        %2292 = vmatpush.bf16.msra.mxu0 0
        %2293 = vmatpush.bf16.msra.mxu0 0
        %2294 = vmatpush.bf16.msra.mxu0 0
        %2295 = vmatpush.bf16.msra.mxu0 %v2283
        %2296 = vmatpush.bf16.msra.mxu0 %v2282
        %2297 = vmatmul.bf16.gmra.mxu0 %v2287
        %v2298 = vpop.f32.mrf.mxu0
        %v2299 = vadd.f32 0.0, %v2298
        %v2300 = vpop.f32.mrf.mxu0
        %2301 = vdwg.mxu0
        %v2302 = vadd.f32 %v678, %v2299
        %v2303 = vld [vmem:[%s6 + $0x1] sm:$0x1]
        %v2304 = vmul.f32 %v2302, %v2302
        %v2305 = vsel %vm681, %v2304, 0.0
        %2306 = vadd.xlane.f32.xlu0 %v2305
        %v2307 = vpop.xlane.xlu0 %2306
        %v2308 = vmul.f32 %v2307, %v691
        %v2309 = vadd.f32 %v2308, 1e-06
        %v2310 = vrsqrt.pop %v2309
        %v2311 = vmul.f32 %v2310, %v2309
        %v2312 = vmul.f32 %v2311, %v2310
        %v2313 = vmul.f32 0.5, %v2312
        %v2314 = vsub.f32 1.5, %v2313
        %v2315 = vmul.f32 %v2310, %v2314
        %vm2316 = vweird.f32 %v2309
        %vm2317 = vweird.f32 %v2310
        %vm2318 = vmor %vm2316, %vm2317
        %v2319 = vsel %vm2318, %v2310, %v2315
        %v2320 = vmul.f32 %v2302, %v2319
        %v2321 = vperm.slane %v2303, 0
        %v2322 = vmul.f32 %v2320, %v2321
        %v2323 = vld [vmem:[%s10] sm:$0xf]
        %v2324 = vld [vmem:[%s10 + $0x4] sm:$0xf]
        %v2325 = vld [vmem:[%s10 + $0x8] sm:$0xf]
        %v2326 = vld [vmem:[%s10 + $0xc] sm:$0xf]
        %v2327 = vpack.c.bf16 %v2322, %v2322
        %v2332 = vunpack.c.l.b16 %v2323
        %v2333 = vunpack.c.l.b16 %v2324
        %v2334 = vunpack.c.l.b16 %v2325
        %v2335 = vunpack.c.l.b16 %v2326
        %v2336 = vpack.c.b16 %v2333, %v2332
        %v2337 = vpack.c.b16 %v2335, %v2334
        %v2341 = vsel %vm681, %v2327, 0
        %2343 = vmatpush.bf16.msra.mxu0 0
        %2344 = vmatpush.bf16.msra.mxu0 0
        %2345 = vmatpush.bf16.msra.mxu0 0
        %2346 = vmatpush.bf16.msra.mxu0 0
        %2347 = vmatpush.bf16.msra.mxu0 0
        %2348 = vmatpush.bf16.msra.mxu0 0
        %2349 = vmatpush.bf16.msra.mxu0 %v2337
        %2350 = vmatpush.bf16.msra.mxu0 %v2336
        %2351 = vmatmul.bf16.gmra.mxu0 %v2341
        %v2352 = vpop.f32.mrf.mxu0
        %v2353 = vadd.f32 0.0, %v2352
        %v2354 = vpop.f32.mrf.mxu0
        %2355 = vdwg.mxu0
        %v2356 = vmax.f32 %v2353, 0.0
        %v2357 = vld [vmem:[%s11] sm:$0xf]
        %v2358 = vld [vmem:[%s11 + $0x4] sm:$0xf]
        %v2359 = vld [vmem:[%s11 + $0x8] sm:$0xf]
        %v2360 = vld [vmem:[%s11 + $0xc] sm:$0xf]
        %v2361 = vld [vmem:[%s11 + $0x10] sm:$0xf]
        %v2362 = vld [vmem:[%s11 + $0x14] sm:$0xf]
        %v2363 = vld [vmem:[%s11 + $0x18] sm:$0xf]
        %v2364 = vld [vmem:[%s11 + $0x1c] sm:$0xf]
        %v2365 = vpack.c.bf16 %v2356, %v2356
        %v2374 = vunpack.c.l.b16 %v2357
        %v2375 = vunpack.c.l.b16 %v2358
        %v2376 = vunpack.c.l.b16 %v2359
        %v2377 = vunpack.c.l.b16 %v2360
        %v2378 = vunpack.c.l.b16 %v2361
        %v2379 = vunpack.c.l.b16 %v2362
        %v2380 = vunpack.c.l.b16 %v2363
        %v2381 = vunpack.c.l.b16 %v2364
        %v2382 = vpack.c.b16 %v2375, %v2374
        %v2383 = vpack.c.b16 %v2377, %v2376
        %v2384 = vpack.c.b16 %v2379, %v2378
        %v2385 = vpack.c.b16 %v2381, %v2380
        %vm2390 = vcmask 523264
        %v2392 = vsel %vm2390, %v2365, 0
        %2394 = vmatpush.bf16.msra.mxu0 0
        %2395 = vmatpush.bf16.msra.mxu0 0
        %2396 = vmatpush.bf16.msra.mxu0 0
        %2397 = vmatpush.bf16.msra.mxu0 0
        %2398 = vmatpush.bf16.msra.mxu0 %v2385
        %2399 = vmatpush.bf16.msra.mxu0 %v2384
        %2400 = vmatpush.bf16.msra.mxu0 %v2383
        %2401 = vmatpush.bf16.msra.mxu0 %v2382
        %2402 = vmatmul.bf16.gmra.mxu0 %v2392
        %v2403 = vpop.f32.mrf.mxu0
        %v2404 = vadd.f32 0.0, %v2403
        %v2405 = vpop.f32.mrf.mxu0
        %2406 = vdwg.mxu0
        %v2407 = vadd.f32 %v2302, %v2404
        %v2408 = vld [vmem:[%s6 + $0x2] sm:$0x1]
        %v2409 = vmul.f32 %v2407, %v2407
        %v2410 = vsel %vm681, %v2409, 0.0
        %2411 = vadd.xlane.f32.xlu0 %v2410
        %v2412 = vpop.xlane.xlu0 %2411
        %v2413 = vmul.f32 %v2412, %v691
        %v2414 = vadd.f32 %v2413, 1e-06
        %v2415 = vrsqrt.pop %v2414
        %v2416 = vmul.f32 %v2415, %v2414
        %v2417 = vmul.f32 %v2416, %v2415
        %v2418 = vmul.f32 0.5, %v2417
        %v2419 = vsub.f32 1.5, %v2418
        %v2420 = vmul.f32 %v2415, %v2419
        %vm2421 = vweird.f32 %v2414
        %vm2422 = vweird.f32 %v2415
        %vm2423 = vmor %vm2421, %vm2422
        %v2424 = vsel %vm2423, %v2415, %v2420
        %v2425 = vmul.f32 %v2407, %v2424
        %v2426 = vperm.slane %v2408, 0
        %v2427 = vmul.f32 %v2425, %v2426
        %v2428 = vld [vmem:[%s636] sm:$0xff]
        %v2429 = vld [vmem:[%s6 + $0x3] sm:$0x1]
        %v2430 = vmul.f32 %v2428, %v2428
        %v2431 = vsel %vm681, %v2430, 0.0
        %2432 = vadd.xlane.f32.xlu0 %v2431
        %v2433 = vpop.xlane.xlu0 %2432
        %v2434 = vmul.f32 %v2433, %v691
        %v2435 = vadd.f32 %v2434, 1e-06
        %v2436 = vrsqrt.pop %v2435
        %v2437 = vmul.f32 %v2436, %v2435
        %v2438 = vmul.f32 %v2437, %v2436
        %v2439 = vmul.f32 0.5, %v2438
        %v2440 = vsub.f32 1.5, %v2439
        %v2441 = vmul.f32 %v2436, %v2440
        %vm2442 = vweird.f32 %v2435
        %vm2443 = vweird.f32 %v2436
        %vm2444 = vmor %vm2442, %vm2443
        %v2445 = vsel %vm2444, %v2436, %v2441
        %v2446 = vmul.f32 %v2428, %v2445
        %v2447 = vperm.slane %v2429, 0
        %v2448 = vmul.f32 %v2446, %v2447
        %v2449 = vld [vmem:[%s12] sm:$0xf]
        %v2450 = vld [vmem:[%s12 + $0x4] sm:$0xf]
        %v2451 = vld [vmem:[%s12 + $0x8] sm:$0xf]
        %v2452 = vld [vmem:[%s12 + $0xc] sm:$0xf]
        %v2453 = vpack.c.bf16 %v2448, %v2448
        %v2458 = vunpack.c.l.b16 %v2449
        %v2459 = vunpack.c.l.b16 %v2450
        %v2460 = vunpack.c.l.b16 %v2451
        %v2461 = vunpack.c.l.b16 %v2452
        %v2462 = vpack.c.b16 %v2459, %v2458
        %v2463 = vpack.c.b16 %v2461, %v2460
        %v2467 = vsel %vm681, %v2453, 0
        %2469 = vmatpush.bf16.msra.mxu0 0
        %2470 = vmatpush.bf16.msra.mxu0 0
        %2471 = vmatpush.bf16.msra.mxu0 0
        %2472 = vmatpush.bf16.msra.mxu0 0
        %2473 = vmatpush.bf16.msra.mxu0 0
        %2474 = vmatpush.bf16.msra.mxu0 0
        %2475 = vmatpush.bf16.msra.mxu0 %v2463
        %2476 = vmatpush.bf16.msra.mxu0 %v2462
        %2477 = vmatmul.bf16.gmra.mxu0 %v2467
        %v2478 = vpop.f32.mrf.mxu0
        %v2479 = vadd.f32 0.0, %v2478
        %v2480 = vpop.f32.mrf.mxu0
        %2481 = vdwg.mxu0
        %v2482 = vld [vmem:[%s13] sm:$0xf]
        %v2483 = vld [vmem:[%s13 + $0x4] sm:$0xf]
        %v2484 = vld [vmem:[%s13 + $0x8] sm:$0xf]
        %v2485 = vld [vmem:[%s13 + $0xc] sm:$0xf]
        %2487 = vrot.lane.b32.xlu0 %v2479, 120
        %v2488 = vpop.permute.xlu0 %2487
        %2490 = vrot.lane.b32.xlu0 %v2479, 112
        %v2491 = vpop.permute.xlu0 %2490
        %2493 = vrot.lane.b32.xlu0 %v2479, 104
        %v2494 = vpop.permute.xlu0 %2493
        %v2496 = vrot.slane %v2491, 4
        %v2497 = vsel %vm755, %v2496, %v2479
        %v2498 = vrot.slane %v2479, 4
        %v2499 = vsel %vm755, %v2491, %v2498
        %v2501 = vunpack.c.l.s4 1983009808
        %v2502 = vunpack.c.0.s8 %v2501
        %v2503 = vperm.slane %v2497, %v2502
        %v2505 = vunpack.c.l.s4 1983009808
        %v2506 = vunpack.c.0.s8 %v2505
        %v2507 = vperm.slane %v2499, %v2506
        %v2508 = vrot.slane %v2494, 4
        %v2509 = vsel %vm755, %v2508, %v2488
        %v2510 = vrot.slane %v2488, 4
        %v2511 = vsel %vm755, %v2494, %v2510
        %v2513 = vunpack.c.l.s4 1983009808
        %v2514 = vunpack.c.0.s8 %v2513
        %v2515 = vperm.slane %v2509, %v2514
        %v2517 = vunpack.c.l.s4 1983009808
        %v2518 = vunpack.c.0.s8 %v2517
        %v2519 = vperm.slane %v2511, %v2518
        %v2520 = vrot.slane %v2515, 4
        %v2521 = vsel %vm755, %v2520, %v2503
        %v2522 = vrot.slane %v2503, 4
        %v2523 = vsel %vm755, %v2515, %v2522
        %v2525 = vunpack.c.l.s4 1934713408
        %v2526 = vunpack.c.0.s8 %v2525
        %v2527 = vperm.slane %v2521, %v2526
        %v2529 = vunpack.c.l.s4 1934713408
        %v2530 = vunpack.c.0.s8 %v2529
        %v2531 = vperm.slane %v2523, %v2530
        %v2532 = vrot.slane %v2519, 4
        %v2533 = vsel %vm755, %v2532, %v2507
        %v2534 = vrot.slane %v2507, 4
        %v2535 = vsel %vm755, %v2519, %v2534
        %v2537 = vunpack.c.l.s4 1934713408
        %v2538 = vunpack.c.0.s8 %v2537
        %v2539 = vperm.slane %v2533, %v2538
        %v2541 = vunpack.c.l.s4 1934713408
        %v2542 = vunpack.c.0.s8 %v2541
        %v2543 = vperm.slane %v2535, %v2542
        %v2544 = vrot.slane %v2527, 4
        %v2545 = vsel %vm755, 0.0, %v2544
        %v2546 = vrot.slane %v2531, 4
        %v2547 = vsel %vm755, 0.0, %v2546
        %v2548 = vrot.slane %v2539, 4
        %v2549 = vsel %vm755, 0.0, %v2548
        %v2550 = vrot.slane %v2543, 4
        %v2551 = vsel %vm755, 0.0, %v2550
        %v2552 = vpack.c.bf16 %v2527, %v2527
        %v2553 = vpack.c.bf16 %v2545, %v2545
        %v2554 = vpack.c.bf16 %v2531, %v2531
        %v2555 = vpack.c.bf16 %v2547, %v2547
        %v2556 = vpack.c.bf16 %v2539, %v2539
        %v2557 = vpack.c.bf16 %v2549, %v2549
        %v2558 = vpack.c.bf16 %v2543, %v2543
        %v2559 = vpack.c.bf16 %v2551, %v2551
        %2560 = vrot.lane.b32.xlu0 %v2479, 96
        %v2561 = vpop.permute.xlu0 %2560
        %2562 = vrot.lane.b32.xlu0 %v2488, 96
        %v2563 = vpop.permute.xlu0 %2562
        %2564 = vrot.lane.b32.xlu0 %v2491, 96
        %v2565 = vpop.permute.xlu0 %2564
        %2566 = vrot.lane.b32.xlu0 %v2494, 96
        %v2567 = vpop.permute.xlu0 %2566
        %v2572 = vrot.slane %v2565, 4
        %v2573 = vsel %vm755, %v2572, %v2561
        %v2574 = vrot.slane %v2561, 4
        %v2575 = vsel %vm755, %v2565, %v2574
        %v2577 = vunpack.c.l.s4 1983009808
        %v2578 = vunpack.c.0.s8 %v2577
        %v2579 = vperm.slane %v2573, %v2578
        %v2581 = vunpack.c.l.s4 1983009808
        %v2582 = vunpack.c.0.s8 %v2581
        %v2583 = vperm.slane %v2575, %v2582
        %v2584 = vrot.slane %v2567, 4
        %v2585 = vsel %vm755, %v2584, %v2563
        %v2586 = vrot.slane %v2563, 4
        %v2587 = vsel %vm755, %v2567, %v2586
        %v2589 = vunpack.c.l.s4 1983009808
        %v2590 = vunpack.c.0.s8 %v2589
        %v2591 = vperm.slane %v2585, %v2590
        %v2593 = vunpack.c.l.s4 1983009808
        %v2594 = vunpack.c.0.s8 %v2593
        %v2595 = vperm.slane %v2587, %v2594
        %v2596 = vrot.slane %v2591, 4
        %v2597 = vsel %vm755, %v2596, %v2579
        %v2598 = vrot.slane %v2579, 4
        %v2599 = vsel %vm755, %v2591, %v2598
        %v2601 = vunpack.c.l.s4 1934713408
        %v2602 = vunpack.c.0.s8 %v2601
        %v2603 = vperm.slane %v2597, %v2602
        %v2605 = vunpack.c.l.s4 1934713408
        %v2606 = vunpack.c.0.s8 %v2605
        %v2607 = vperm.slane %v2599, %v2606
        %v2608 = vrot.slane %v2595, 4
        %v2609 = vsel %vm755, %v2608, %v2583
        %v2610 = vrot.slane %v2583, 4
        %v2611 = vsel %vm755, %v2595, %v2610
        %v2613 = vunpack.c.l.s4 1934713408
        %v2614 = vunpack.c.0.s8 %v2613
        %v2615 = vperm.slane %v2609, %v2614
        %v2617 = vunpack.c.l.s4 1934713408
        %v2618 = vunpack.c.0.s8 %v2617
        %v2619 = vperm.slane %v2611, %v2618
        %v2620 = vrot.slane %v2603, 4
        %v2621 = vsel %vm755, 0.0, %v2620
        %v2622 = vrot.slane %v2607, 4
        %v2623 = vsel %vm755, 0.0, %v2622
        %v2624 = vrot.slane %v2615, 4
        %v2625 = vsel %vm755, 0.0, %v2624
        %v2626 = vrot.slane %v2619, 4
        %v2627 = vsel %vm755, 0.0, %v2626
        %v2628 = vpack.c.bf16 %v2603, %v2603
        %v2629 = vpack.c.bf16 %v2621, %v2621
        %v2630 = vpack.c.bf16 %v2607, %v2607
        %v2631 = vpack.c.bf16 %v2623, %v2623
        %v2632 = vpack.c.bf16 %v2615, %v2615
        %v2633 = vpack.c.bf16 %v2625, %v2625
        %v2634 = vpack.c.bf16 %v2619, %v2619
        %v2635 = vpack.c.bf16 %v2627, %v2627
        %2636 = vrot.lane.b32.xlu0 %v2479, 64
        %v2637 = vpop.permute.xlu0 %2636
        %2638 = vrot.lane.b32.xlu0 %v2488, 64
        %v2639 = vpop.permute.xlu0 %2638
        %2640 = vrot.lane.b32.xlu0 %v2491, 64
        %v2641 = vpop.permute.xlu0 %2640
        %2642 = vrot.lane.b32.xlu0 %v2494, 64
        %v2643 = vpop.permute.xlu0 %2642
        %v2648 = vrot.slane %v2641, 4
        %v2649 = vsel %vm755, %v2648, %v2637
        %v2650 = vrot.slane %v2637, 4
        %v2651 = vsel %vm755, %v2641, %v2650
        %v2653 = vunpack.c.l.s4 1983009808
        %v2654 = vunpack.c.0.s8 %v2653
        %v2655 = vperm.slane %v2649, %v2654
        %v2657 = vunpack.c.l.s4 1983009808
        %v2658 = vunpack.c.0.s8 %v2657
        %v2659 = vperm.slane %v2651, %v2658
        %v2660 = vrot.slane %v2643, 4
        %v2661 = vsel %vm755, %v2660, %v2639
        %v2662 = vrot.slane %v2639, 4
        %v2663 = vsel %vm755, %v2643, %v2662
        %v2665 = vunpack.c.l.s4 1983009808
        %v2666 = vunpack.c.0.s8 %v2665
        %v2667 = vperm.slane %v2661, %v2666
        %v2669 = vunpack.c.l.s4 1983009808
        %v2670 = vunpack.c.0.s8 %v2669
        %v2671 = vperm.slane %v2663, %v2670
        %v2672 = vrot.slane %v2667, 4
        %v2673 = vsel %vm755, %v2672, %v2655
        %v2674 = vrot.slane %v2655, 4
        %v2675 = vsel %vm755, %v2667, %v2674
        %v2677 = vunpack.c.l.s4 1934713408
        %v2678 = vunpack.c.0.s8 %v2677
        %v2679 = vperm.slane %v2673, %v2678
        %v2681 = vunpack.c.l.s4 1934713408
        %v2682 = vunpack.c.0.s8 %v2681
        %v2683 = vperm.slane %v2675, %v2682
        %v2684 = vrot.slane %v2671, 4
        %v2685 = vsel %vm755, %v2684, %v2659
        %v2686 = vrot.slane %v2659, 4
        %v2687 = vsel %vm755, %v2671, %v2686
        %v2689 = vunpack.c.l.s4 1934713408
        %v2690 = vunpack.c.0.s8 %v2689
        %v2691 = vperm.slane %v2685, %v2690
        %v2693 = vunpack.c.l.s4 1934713408
        %v2694 = vunpack.c.0.s8 %v2693
        %v2695 = vperm.slane %v2687, %v2694
        %v2696 = vrot.slane %v2679, 4
        %v2697 = vsel %vm755, 0.0, %v2696
        %v2698 = vrot.slane %v2683, 4
        %v2699 = vsel %vm755, 0.0, %v2698
        %v2700 = vrot.slane %v2691, 4
        %v2701 = vsel %vm755, 0.0, %v2700
        %v2702 = vrot.slane %v2695, 4
        %v2703 = vsel %vm755, 0.0, %v2702
        %v2704 = vpack.c.bf16 %v2679, %v2679
        %v2705 = vpack.c.bf16 %v2697, %v2697
        %v2706 = vpack.c.bf16 %v2683, %v2683
        %v2707 = vpack.c.bf16 %v2699, %v2699
        %v2708 = vpack.c.bf16 %v2691, %v2691
        %v2709 = vpack.c.bf16 %v2701, %v2701
        %v2710 = vpack.c.bf16 %v2695, %v2695
        %v2711 = vpack.c.bf16 %v2703, %v2703
        %v2712 = vrot.slane %v2556, 4
        %v2713 = vsel %vm972, %v2712, %v2552
        %v2715 = vunpack.c.l.s4 1983009808
        %v2716 = vunpack.c.0.s8 %v2715
        %v2717 = vperm.slane %v2713, %v2716
        %v2718 = vrot.slane %v2558, 4
        %v2719 = vsel %vm972, %v2718, %v2554
        %v2721 = vunpack.c.l.s4 1983009808
        %v2722 = vunpack.c.0.s8 %v2721
        %v2723 = vperm.slane %v2719, %v2722
        %v2724 = vrot.slane %v2723, 4
        %v2725 = vsel %vm972, %v2724, %v2717
        %v2727 = vunpack.c.l.s4 1934713408
        %v2728 = vunpack.c.0.s8 %v2727
        %v2729 = vperm.slane %v2725, %v2728
        %v2730 = vrot.slane %v2729, 4
        %v2731 = vsel %vm972, 0, %v2730
        %v2732 = vrot.slane %v2557, 4
        %v2733 = vsel %vm972, %v2732, %v2553
        %v2735 = vunpack.c.l.s4 1983009808
        %v2736 = vunpack.c.0.s8 %v2735
        %v2737 = vperm.slane %v2733, %v2736
        %v2738 = vrot.slane %v2559, 4
        %v2739 = vsel %vm972, %v2738, %v2555
        %v2741 = vunpack.c.l.s4 1983009808
        %v2742 = vunpack.c.0.s8 %v2741
        %v2743 = vperm.slane %v2739, %v2742
        %v2744 = vrot.slane %v2743, 4
        %v2745 = vsel %vm972, %v2744, %v2737
        %v2747 = vunpack.c.l.s4 1934713408
        %v2748 = vunpack.c.0.s8 %v2747
        %v2749 = vperm.slane %v2745, %v2748
        %v2750 = vrot.slane %v2749, 4
        %v2751 = vsel %vm972, 0, %v2750
        %v2754 = vpack.i.b16 %v2749, %v2729
        %v2755 = vshrl.u32 %v2729, 16
        %v2756 = vshrl.u32 %v2749, 16
        %v2757 = vpack.i.b16 %v2756, %v2755
        %v2760 = vpack.i.b16 %v2751, %v2731
        %v2761 = vshrl.u32 %v2731, 16
        %v2762 = vshrl.u32 %v2751, 16
        %v2763 = vpack.i.b16 %v2762, %v2761
        %2764 = vxpose.xlu0.c.b16.start [1/8] %v2628, 128
        %2765 = vxpose.xlu0.c.b16.cont [2/8] 0, 128
        %2766 = vxpose.xlu0.c.b16.cont [3/8] 0, 128
        %2767 = vxpose.xlu0.c.b16.cont [4/8] 0, 128
        %2768 = vxpose.xlu0.c.b16.cont [5/8] 0, 128
        %2769 = vxpose.xlu0.c.b16.cont [6/8] 0, 128
        %2770 = vxpose.xlu0.c.b16.cont [7/8] 0, 128
        %2771 = vxpose.xlu0.c.b16.end [8/8] 0, 128
        %v2772 = vpop.trf.xlu0
        %v2773 = vpop.trf.xlu0
        %v2774 = vpop.trf.xlu0
        %v2775 = vpop.trf.xlu0
        %v2776 = vpop.trf.xlu0
        %v2777 = vpop.trf.xlu0
        %v2778 = vpop.trf.xlu0
        %v2779 = vpop.trf.xlu0
        %2780 = vxpose.xlu0.c.b16.start [1/8] %v2629, 128
        %2781 = vxpose.xlu0.c.b16.cont [2/8] 0, 128
        %2782 = vxpose.xlu0.c.b16.cont [3/8] 0, 128
        %2783 = vxpose.xlu0.c.b16.cont [4/8] 0, 128
        %2784 = vxpose.xlu0.c.b16.cont [5/8] 0, 128
        %2785 = vxpose.xlu0.c.b16.cont [6/8] 0, 128
        %2786 = vxpose.xlu0.c.b16.cont [7/8] 0, 128
        %2787 = vxpose.xlu0.c.b16.end [8/8] 0, 128
        %v2788 = vpop.trf.xlu0
        %v2789 = vpop.trf.xlu0
        %v2790 = vpop.trf.xlu0
        %v2791 = vpop.trf.xlu0
        %v2792 = vpop.trf.xlu0
        %v2793 = vpop.trf.xlu0
        %v2794 = vpop.trf.xlu0
        %v2795 = vpop.trf.xlu0
        %2796 = vxpose.xlu0.c.b16.start [1/8] %v2630, 128
        %2797 = vxpose.xlu0.c.b16.cont [2/8] 0, 128
        %2798 = vxpose.xlu0.c.b16.cont [3/8] 0, 128
        %2799 = vxpose.xlu0.c.b16.cont [4/8] 0, 128
        %2800 = vxpose.xlu0.c.b16.cont [5/8] 0, 128
        %2801 = vxpose.xlu0.c.b16.cont [6/8] 0, 128
        %2802 = vxpose.xlu0.c.b16.cont [7/8] 0, 128
        %2803 = vxpose.xlu0.c.b16.end [8/8] 0, 128
        %v2804 = vpop.trf.xlu0
        %v2805 = vpop.trf.xlu0
        %v2806 = vpop.trf.xlu0
        %v2807 = vpop.trf.xlu0
        %v2808 = vpop.trf.xlu0
        %v2809 = vpop.trf.xlu0
        %v2810 = vpop.trf.xlu0
        %v2811 = vpop.trf.xlu0
        %2812 = vxpose.xlu0.c.b16.start [1/8] %v2631, 128
        %2813 = vxpose.xlu0.c.b16.cont [2/8] 0, 128
        %2814 = vxpose.xlu0.c.b16.cont [3/8] 0, 128
        %2815 = vxpose.xlu0.c.b16.cont [4/8] 0, 128
        %2816 = vxpose.xlu0.c.b16.cont [5/8] 0, 128
        %2817 = vxpose.xlu0.c.b16.cont [6/8] 0, 128
        %2818 = vxpose.xlu0.c.b16.cont [7/8] 0, 128
        %2819 = vxpose.xlu0.c.b16.end [8/8] 0, 128
        %v2820 = vpop.trf.xlu0
        %v2821 = vpop.trf.xlu0
        %v2822 = vpop.trf.xlu0
        %v2823 = vpop.trf.xlu0
        %v2824 = vpop.trf.xlu0
        %v2825 = vpop.trf.xlu0
        %v2826 = vpop.trf.xlu0
        %v2827 = vpop.trf.xlu0
        %2828 = vxpose.xlu0.c.b16.start [1/8] %v2632, 128
        %2829 = vxpose.xlu0.c.b16.cont [2/8] 0, 128
        %2830 = vxpose.xlu0.c.b16.cont [3/8] 0, 128
        %2831 = vxpose.xlu0.c.b16.cont [4/8] 0, 128
        %2832 = vxpose.xlu0.c.b16.cont [5/8] 0, 128
        %2833 = vxpose.xlu0.c.b16.cont [6/8] 0, 128
        %2834 = vxpose.xlu0.c.b16.cont [7/8] 0, 128
        %2835 = vxpose.xlu0.c.b16.end [8/8] 0, 128
        %v2836 = vpop.trf.xlu0
        %v2837 = vpop.trf.xlu0
        %v2838 = vpop.trf.xlu0
        %v2839 = vpop.trf.xlu0
        %v2840 = vpop.trf.xlu0
        %v2841 = vpop.trf.xlu0
        %v2842 = vpop.trf.xlu0
        %v2843 = vpop.trf.xlu0
        %2844 = vxpose.xlu0.c.b16.start [1/8] %v2633, 128
        %2845 = vxpose.xlu0.c.b16.cont [2/8] 0, 128
        %2846 = vxpose.xlu0.c.b16.cont [3/8] 0, 128
        %2847 = vxpose.xlu0.c.b16.cont [4/8] 0, 128
        %2848 = vxpose.xlu0.c.b16.cont [5/8] 0, 128
        %2849 = vxpose.xlu0.c.b16.cont [6/8] 0, 128
        %2850 = vxpose.xlu0.c.b16.cont [7/8] 0, 128
        %2851 = vxpose.xlu0.c.b16.end [8/8] 0, 128
        %v2852 = vpop.trf.xlu0
        %v2853 = vpop.trf.xlu0
        %v2854 = vpop.trf.xlu0
        %v2855 = vpop.trf.xlu0
        %v2856 = vpop.trf.xlu0
        %v2857 = vpop.trf.xlu0
        %v2858 = vpop.trf.xlu0
        %v2859 = vpop.trf.xlu0
        %2860 = vxpose.xlu0.c.b16.start [1/8] %v2634, 128
        %2861 = vxpose.xlu0.c.b16.cont [2/8] 0, 128
        %2862 = vxpose.xlu0.c.b16.cont [3/8] 0, 128
        %2863 = vxpose.xlu0.c.b16.cont [4/8] 0, 128
        %2864 = vxpose.xlu0.c.b16.cont [5/8] 0, 128
        %2865 = vxpose.xlu0.c.b16.cont [6/8] 0, 128
        %2866 = vxpose.xlu0.c.b16.cont [7/8] 0, 128
        %2867 = vxpose.xlu0.c.b16.end [8/8] 0, 128
        %v2868 = vpop.trf.xlu0
        %v2869 = vpop.trf.xlu0
        %v2870 = vpop.trf.xlu0
        %v2871 = vpop.trf.xlu0
        %v2872 = vpop.trf.xlu0
        %v2873 = vpop.trf.xlu0
        %v2874 = vpop.trf.xlu0
        %v2875 = vpop.trf.xlu0
        %2876 = vxpose.xlu0.c.b16.start [1/8] %v2635, 128
        %2877 = vxpose.xlu0.c.b16.cont [2/8] 0, 128
        %2878 = vxpose.xlu0.c.b16.cont [3/8] 0, 128
        %2879 = vxpose.xlu0.c.b16.cont [4/8] 0, 128
        %2880 = vxpose.xlu0.c.b16.cont [5/8] 0, 128
        %2881 = vxpose.xlu0.c.b16.cont [6/8] 0, 128
        %2882 = vxpose.xlu0.c.b16.cont [7/8] 0, 128
        %2883 = vxpose.xlu0.c.b16.end [8/8] 0, 128
        %v2884 = vpop.trf.xlu0
        %v2885 = vpop.trf.xlu0
        %v2886 = vpop.trf.xlu0
        %v2887 = vpop.trf.xlu0
        %v2888 = vpop.trf.xlu0
        %v2889 = vpop.trf.xlu0
        %v2890 = vpop.trf.xlu0
        %v2891 = vpop.trf.xlu0
        %v2892 = vrot.slane %v2836, 4
        %v2893 = vsel %vm972, %v2892, %v2772
        %v2895 = vunpack.c.l.s4 1983009808
        %v2896 = vunpack.c.0.s8 %v2895
        %v2897 = vperm.slane %v2893, %v2896
        %v2898 = vrot.slane %v2868, 4
        %v2899 = vsel %vm972, %v2898, %v2804
        %v2901 = vunpack.c.l.s4 1983009808
        %v2902 = vunpack.c.0.s8 %v2901
        %v2903 = vperm.slane %v2899, %v2902
        %v2904 = vrot.slane %v2903, 4
        %v2905 = vsel %vm972, %v2904, %v2897
        %v2906 = vrot.slane %v2897, 4
        %v2907 = vsel %vm972, %v2903, %v2906
        %v2909 = vunpack.c.l.s4 1934713408
        %v2910 = vunpack.c.0.s8 %v2909
        %v2911 = vperm.slane %v2905, %v2910
        %v2913 = vunpack.c.l.s4 1934713408
        %v2914 = vunpack.c.0.s8 %v2913
        %v2915 = vperm.slane %v2907, %v2914
        %v2916 = vrot.slane %v2911, 4
        %v2917 = vsel %vm972, 0, %v2916
        %v2918 = vrot.slane %v2915, 4
        %v2919 = vsel %vm972, 0, %v2918
        %v2920 = vrot.slane %v2852, 4
        %v2921 = vsel %vm972, %v2920, %v2788
        %v2923 = vunpack.c.l.s4 1983009808
        %v2924 = vunpack.c.0.s8 %v2923
        %v2925 = vperm.slane %v2921, %v2924
        %v2926 = vrot.slane %v2884, 4
        %v2927 = vsel %vm972, %v2926, %v2820
        %v2929 = vunpack.c.l.s4 1983009808
        %v2930 = vunpack.c.0.s8 %v2929
        %v2931 = vperm.slane %v2927, %v2930
        %v2932 = vrot.slane %v2931, 4
        %v2933 = vsel %vm972, %v2932, %v2925
        %v2934 = vrot.slane %v2925, 4
        %v2935 = vsel %vm972, %v2931, %v2934
        %v2937 = vunpack.c.l.s4 1934713408
        %v2938 = vunpack.c.0.s8 %v2937
        %v2939 = vperm.slane %v2933, %v2938
        %v2941 = vunpack.c.l.s4 1934713408
        %v2942 = vunpack.c.0.s8 %v2941
        %v2943 = vperm.slane %v2935, %v2942
        %v2944 = vrot.slane %v2939, 4
        %v2945 = vsel %vm972, 0, %v2944
        %v2946 = vrot.slane %v2943, 4
        %v2947 = vsel %vm972, 0, %v2946
        %v2950 = vpack.i.b16 %v2939, %v2911
        %v2952 = vshrl.u32 %v2911, 16
        %v2953 = vshrl.u32 %v2939, 16
        %v2954 = vpack.i.b16 %v2953, %v2952
        %v2958 = vpack.i.b16 %v2945, %v2917
        %v2960 = vshrl.u32 %v2917, 16
        %v2961 = vshrl.u32 %v2945, 16
        %v2962 = vpack.i.b16 %v2961, %v2960
        %v2966 = vpack.i.b16 %v2943, %v2915
        %v2968 = vshrl.u32 %v2915, 16
        %v2969 = vshrl.u32 %v2943, 16
        %v2970 = vpack.i.b16 %v2969, %v2968
        %v2974 = vpack.i.b16 %v2947, %v2919
        %v2976 = vshrl.u32 %v2919, 16
        %v2977 = vshrl.u32 %v2947, 16
        %v2978 = vpack.i.b16 %v2977, %v2976
        %2980 = vxpose.xlu0.c.b16.start [1/8] %v2950, 128
        %2981 = vxpose.xlu0.c.b16.cont [2/8] 0, 128
        %2982 = vxpose.xlu0.c.b16.cont [3/8] 0, 128
        %2983 = vxpose.xlu0.c.b16.cont [4/8] 0, 128
        %2984 = vxpose.xlu0.c.b16.cont [5/8] 0, 128
        %2985 = vxpose.xlu0.c.b16.cont [6/8] 0, 128
        %2986 = vxpose.xlu0.c.b16.cont [7/8] 0, 128
        %2987 = vxpose.xlu0.c.b16.end [8/8] 0, 128
        %v2988 = vpop.trf.xlu0
        %v2989 = vpop.trf.xlu0
        %v2990 = vpop.trf.xlu0
        %v2991 = vpop.trf.xlu0
        %v2992 = vpop.trf.xlu0
        %v2993 = vpop.trf.xlu0
        %v2994 = vpop.trf.xlu0
        %v2995 = vpop.trf.xlu0
        %2996 = vxpose.xlu0.c.b16.start [1/8] %v2954, 128
        %2997 = vxpose.xlu0.c.b16.cont [2/8] 0, 128
        %2998 = vxpose.xlu0.c.b16.cont [3/8] 0, 128
        %2999 = vxpose.xlu0.c.b16.cont [4/8] 0, 128
        %3000 = vxpose.xlu0.c.b16.cont [5/8] 0, 128
        %3001 = vxpose.xlu0.c.b16.cont [6/8] 0, 128
        %3002 = vxpose.xlu0.c.b16.cont [7/8] 0, 128
        %3003 = vxpose.xlu0.c.b16.end [8/8] 0, 128
        %v3004 = vpop.trf.xlu0
        %v3005 = vpop.trf.xlu0
        %v3006 = vpop.trf.xlu0
        %v3007 = vpop.trf.xlu0
        %v3008 = vpop.trf.xlu0
        %v3009 = vpop.trf.xlu0
        %v3010 = vpop.trf.xlu0
        %v3011 = vpop.trf.xlu0
        %3012 = vxpose.xlu0.c.b16.start [1/8] %v2958, 128
        %3013 = vxpose.xlu0.c.b16.cont [2/8] 0, 128
        %3014 = vxpose.xlu0.c.b16.cont [3/8] 0, 128
        %3015 = vxpose.xlu0.c.b16.cont [4/8] 0, 128
        %3016 = vxpose.xlu0.c.b16.cont [5/8] 0, 128
        %3017 = vxpose.xlu0.c.b16.cont [6/8] 0, 128
        %3018 = vxpose.xlu0.c.b16.cont [7/8] 0, 128
        %3019 = vxpose.xlu0.c.b16.end [8/8] 0, 128
        %v3020 = vpop.trf.xlu0
        %v3021 = vpop.trf.xlu0
        %v3022 = vpop.trf.xlu0
        %v3023 = vpop.trf.xlu0
        %v3024 = vpop.trf.xlu0
        %v3025 = vpop.trf.xlu0
        %v3026 = vpop.trf.xlu0
        %v3027 = vpop.trf.xlu0
        %3028 = vxpose.xlu0.c.b16.start [1/8] %v2962, 128
        %3029 = vxpose.xlu0.c.b16.cont [2/8] 0, 128
        %3030 = vxpose.xlu0.c.b16.cont [3/8] 0, 128
        %3031 = vxpose.xlu0.c.b16.cont [4/8] 0, 128
        %3032 = vxpose.xlu0.c.b16.cont [5/8] 0, 128
        %3033 = vxpose.xlu0.c.b16.cont [6/8] 0, 128
        %3034 = vxpose.xlu0.c.b16.cont [7/8] 0, 128
        %3035 = vxpose.xlu0.c.b16.end [8/8] 0, 128
        %v3036 = vpop.trf.xlu0
        %v3037 = vpop.trf.xlu0
        %v3038 = vpop.trf.xlu0
        %v3039 = vpop.trf.xlu0
        %v3040 = vpop.trf.xlu0
        %v3041 = vpop.trf.xlu0
        %v3042 = vpop.trf.xlu0
        %v3043 = vpop.trf.xlu0
        %3044 = vxpose.xlu0.c.b16.start [1/8] %v2966, 128
        %3045 = vxpose.xlu0.c.b16.cont [2/8] 0, 128
        %3046 = vxpose.xlu0.c.b16.cont [3/8] 0, 128
        %3047 = vxpose.xlu0.c.b16.cont [4/8] 0, 128
        %3048 = vxpose.xlu0.c.b16.cont [5/8] 0, 128
        %3049 = vxpose.xlu0.c.b16.cont [6/8] 0, 128
        %3050 = vxpose.xlu0.c.b16.cont [7/8] 0, 128
        %3051 = vxpose.xlu0.c.b16.end [8/8] 0, 128
        %v3052 = vpop.trf.xlu0
        %v3053 = vpop.trf.xlu0
        %v3054 = vpop.trf.xlu0
        %v3055 = vpop.trf.xlu0
        %v3056 = vpop.trf.xlu0
        %v3057 = vpop.trf.xlu0
        %v3058 = vpop.trf.xlu0
        %v3059 = vpop.trf.xlu0
        %3060 = vxpose.xlu0.c.b16.start [1/8] %v2970, 128
        %3061 = vxpose.xlu0.c.b16.cont [2/8] 0, 128
        %3062 = vxpose.xlu0.c.b16.cont [3/8] 0, 128
        %3063 = vxpose.xlu0.c.b16.cont [4/8] 0, 128
        %3064 = vxpose.xlu0.c.b16.cont [5/8] 0, 128
        %3065 = vxpose.xlu0.c.b16.cont [6/8] 0, 128
        %3066 = vxpose.xlu0.c.b16.cont [7/8] 0, 128
        %3067 = vxpose.xlu0.c.b16.end [8/8] 0, 128
        %v3068 = vpop.trf.xlu0
        %v3069 = vpop.trf.xlu0
        %v3070 = vpop.trf.xlu0
        %v3071 = vpop.trf.xlu0
        %v3072 = vpop.trf.xlu0
        %v3073 = vpop.trf.xlu0
        %v3074 = vpop.trf.xlu0
        %v3075 = vpop.trf.xlu0
        %3076 = vxpose.xlu0.c.b16.start [1/8] %v2974, 128
        %3077 = vxpose.xlu0.c.b16.cont [2/8] 0, 128
        %3078 = vxpose.xlu0.c.b16.cont [3/8] 0, 128
        %3079 = vxpose.xlu0.c.b16.cont [4/8] 0, 128
        %3080 = vxpose.xlu0.c.b16.cont [5/8] 0, 128
        %3081 = vxpose.xlu0.c.b16.cont [6/8] 0, 128
        %3082 = vxpose.xlu0.c.b16.cont [7/8] 0, 128
        %3083 = vxpose.xlu0.c.b16.end [8/8] 0, 128
        %v3084 = vpop.trf.xlu0
        %v3085 = vpop.trf.xlu0
        %v3086 = vpop.trf.xlu0
        %v3087 = vpop.trf.xlu0
        %v3088 = vpop.trf.xlu0
        %v3089 = vpop.trf.xlu0
        %v3090 = vpop.trf.xlu0
        %v3091 = vpop.trf.xlu0
        %3092 = vxpose.xlu0.c.b16.start [1/8] %v2978, 128
        %3093 = vxpose.xlu0.c.b16.cont [2/8] 0, 128
        %3094 = vxpose.xlu0.c.b16.cont [3/8] 0, 128
        %3095 = vxpose.xlu0.c.b16.cont [4/8] 0, 128
        %3096 = vxpose.xlu0.c.b16.cont [5/8] 0, 128
        %3097 = vxpose.xlu0.c.b16.cont [6/8] 0, 128
        %3098 = vxpose.xlu0.c.b16.cont [7/8] 0, 128
        %3099 = vxpose.xlu0.c.b16.end [8/8] 0, 128
        %v3100 = vpop.trf.xlu0
        %v3101 = vpop.trf.xlu0
        %v3102 = vpop.trf.xlu0
        %v3103 = vpop.trf.xlu0
        %v3104 = vpop.trf.xlu0
        %v3105 = vpop.trf.xlu0
        %v3106 = vpop.trf.xlu0
        %v3107 = vpop.trf.xlu0
        %v3108 = vrot.slane %v3052, 4
        %v3109 = vsel %vm972, %v3108, %v2988
        %v3111 = vunpack.c.l.s4 1983009808
        %v3112 = vunpack.c.0.s8 %v3111
        %v3113 = vperm.slane %v3109, %v3112
        %v3114 = vrot.slane %v3084, 4
        %v3115 = vsel %vm972, %v3114, %v3020
        %v3117 = vunpack.c.l.s4 1983009808
        %v3118 = vunpack.c.0.s8 %v3117
        %v3119 = vperm.slane %v3115, %v3118
        %v3120 = vrot.slane %v3119, 4
        %v3121 = vsel %vm972, %v3120, %v3113
        %v3123 = vunpack.c.l.s4 1934713408
        %v3124 = vunpack.c.0.s8 %v3123
        %v3125 = vperm.slane %v3121, %v3124
        %v3126 = vrot.slane %v3125, 4
        %v3127 = vsel %vm972, 0, %v3126
        %v3128 = vrot.slane %v3068, 4
        %v3129 = vsel %vm972, %v3128, %v3004
        %v3131 = vunpack.c.l.s4 1983009808
        %v3132 = vunpack.c.0.s8 %v3131
        %v3133 = vperm.slane %v3129, %v3132
        %v3134 = vrot.slane %v3100, 4
        %v3135 = vsel %vm972, %v3134, %v3036
        %v3137 = vunpack.c.l.s4 1983009808
        %v3138 = vunpack.c.0.s8 %v3137
        %v3139 = vperm.slane %v3135, %v3138
        %v3140 = vrot.slane %v3139, 4
        %v3141 = vsel %vm972, %v3140, %v3133
        %v3143 = vunpack.c.l.s4 1934713408
        %v3144 = vunpack.c.0.s8 %v3143
        %v3145 = vperm.slane %v3141, %v3144
        %v3146 = vrot.slane %v3145, 4
        %v3147 = vsel %vm972, 0, %v3146
        %v3150 = vpack.i.b16 %v3145, %v3125
        %v3151 = vshrl.u32 %v3125, 16
        %v3152 = vshrl.u32 %v3145, 16
        %v3153 = vpack.i.b16 %v3152, %v3151
        %v3156 = vpack.i.b16 %v3147, %v3127
        %v3157 = vshrl.u32 %v3127, 16
        %v3158 = vshrl.u32 %v3147, 16
        %v3159 = vpack.i.b16 %v3158, %v3157
        %v3161 = vsel %vm1420, %v2754, 0
        %v3164 = vsel %vm1424, %v3150, 0
        %3166 = vmatpush.bf16.msra.mxu0 0
        %3167 = vmatpush.bf16.msra.mxu0 0
        %3168 = vmatpush.bf16.msra.mxu0 0
        %3169 = vmatpush.bf16.msra.mxu0 0
        %3170 = vmatpush.bf16.msra.mxu0 0
        %3171 = vmatpush.bf16.msra.mxu0 0
        %3172 = vmatpush.bf16.msra.mxu0 0
        %3173 = vmatpush.bf16.msra.mxu0 %v3164
        %3174 = vmatmul.bf16.gmra.mxu0 %v3161
        %v3175 = vpop.f32.mrf.mxu0
        %v3176 = vadd.f32 %v674, %v3175
        %v3177 = vpop.f32.mrf.mxu0
        %3178 = vdwg.mxu0
        %v3180 = vsel %vm1420, %v2757, 0
        %v3183 = vsel %vm1424, %v3153, 0
        %3185 = vmatpush.bf16.msra.mxu0 0
        %3186 = vmatpush.bf16.msra.mxu0 0
        %3187 = vmatpush.bf16.msra.mxu0 0
        %3188 = vmatpush.bf16.msra.mxu0 0
        %3189 = vmatpush.bf16.msra.mxu0 0
        %3190 = vmatpush.bf16.msra.mxu0 0
        %3191 = vmatpush.bf16.msra.mxu0 0
        %3192 = vmatpush.bf16.msra.mxu0 %v3183
        %3193 = vmatmul.bf16.gmra.mxu0 %v3180
        %v3194 = vpop.f32.mrf.mxu0
        %v3195 = vadd.f32 %v675, %v3194
        %v3196 = vpop.f32.mrf.mxu0
        %3197 = vdwg.mxu0
        %v3199 = vsel %vm1420, %v2760, 0
        %v3202 = vsel %vm1424, %v3156, 0
        %3204 = vmatpush.bf16.msra.mxu0 0
        %3205 = vmatpush.bf16.msra.mxu0 0
        %3206 = vmatpush.bf16.msra.mxu0 0
        %3207 = vmatpush.bf16.msra.mxu0 0
        %3208 = vmatpush.bf16.msra.mxu0 0
        %3209 = vmatpush.bf16.msra.mxu0 0
        %3210 = vmatpush.bf16.msra.mxu0 0
        %3211 = vmatpush.bf16.msra.mxu0 %v3202
        %3212 = vmatmul.bf16.gmra.mxu0 %v3199
        %v3213 = vpop.f32.mrf.mxu0
        %v3214 = vadd.f32 %v676, %v3213
        %v3215 = vpop.f32.mrf.mxu0
        %3216 = vdwg.mxu0
        %v3218 = vsel %vm1420, %v2763, 0
        %v3221 = vsel %vm1424, %v3159, 0
        %3223 = vmatpush.bf16.msra.mxu0 0
        %3224 = vmatpush.bf16.msra.mxu0 0
        %3225 = vmatpush.bf16.msra.mxu0 0
        %3226 = vmatpush.bf16.msra.mxu0 0
        %3227 = vmatpush.bf16.msra.mxu0 0
        %3228 = vmatpush.bf16.msra.mxu0 0
        %3229 = vmatpush.bf16.msra.mxu0 0
        %3230 = vmatpush.bf16.msra.mxu0 %v3221
        %3231 = vmatmul.bf16.gmra.mxu0 %v3218
        %v3232 = vpop.f32.mrf.mxu0
        %v3233 = vadd.f32 %v677, %v3232
        %v3234 = vpop.f32.mrf.mxu0
        %3235 = vdwg.mxu0
        %v3236 = vsel %vm1420, %v3176, -inf
        %3237 = vmax.xlane.f32.xlu0 %v3236
        %v3238 = vpop.xlane.xlu0 %3237
        %v3239 = vsel %vm1420, %v3195, -inf
        %3240 = vmax.xlane.f32.xlu0 %v3239
        %v3241 = vpop.xlane.xlu0 %3240
        %v3242 = vsel %vm1420, %v3214, -inf
        %3243 = vmax.xlane.f32.xlu0 %v3242
        %v3244 = vpop.xlane.xlu0 %3243
        %v3245 = vsel %vm1420, %v3233, -inf
        %3246 = vmax.xlane.f32.xlu0 %v3245
        %v3247 = vpop.xlane.xlu0 %3246
        %v3248 = vsub.f32 %v3176, %v3238
        %v3249 = vsub.f32 %v3195, %v3241
        %v3250 = vsub.f32 %v3214, %v3244
        %v3251 = vsub.f32 %v3233, %v3247
        %v3252 = vmul.f32 %v3248, 1.442695
        %v3253 = vpow.pop %v3252
        %v3254 = vmul.f32 %v3249, 1.442695
        %v3255 = vpow.pop %v3254
        %v3256 = vmul.f32 %v3250, 1.442695
        %v3257 = vpow.pop %v3256
        %v3258 = vmul.f32 %v3251, 1.442695
        %v3259 = vpow.pop %v3258
        %v3260 = vsel %vm1420, %v3253, 0.0
        %3261 = vadd.xlane.f32.xlu0 %v3260
        %v3262 = vpop.xlane.xlu0 %3261
        %v3263 = vsel %vm1420, %v3255, 0.0
        %3264 = vadd.xlane.f32.xlu0 %v3263
        %v3265 = vpop.xlane.xlu0 %3264
        %v3266 = vsel %vm1420, %v3257, 0.0
        %3267 = vadd.xlane.f32.xlu0 %v3266
        %v3268 = vpop.xlane.xlu0 %3267
        %v3269 = vsel %vm1420, %v3259, 0.0
        %3270 = vadd.xlane.f32.xlu0 %v3269
        %v3271 = vpop.xlane.xlu0 %3270
        %v3272 = vrcp.pop %v3262
        %v3273 = vrcp.pop %v3265
        %v3274 = vrcp.pop %v3268
        %v3275 = vrcp.pop %v3271
        %v3276 = vmul.f32 %v3253, %v3272
        %v3277 = vmul.f32 %v3255, %v3273
        %v3278 = vmul.f32 %v3257, %v3274
        %v3279 = vmul.f32 %v3259, %v3275
        %v3280 = vpack.c.bf16 %v3276, %v3276
        %v3281 = vpack.c.bf16 %v3277, %v3277
        %v3282 = vpack.c.bf16 %v3278, %v3278
        %v3283 = vpack.c.bf16 %v3279, %v3279
        %3284 = vxpose.xlu0.c.b16.start [1/8] %v2704, 128
        %3285 = vxpose.xlu0.c.b16.cont [2/8] 0, 128
        %3286 = vxpose.xlu0.c.b16.cont [3/8] 0, 128
        %3287 = vxpose.xlu0.c.b16.cont [4/8] 0, 128
        %3288 = vxpose.xlu0.c.b16.cont [5/8] 0, 128
        %3289 = vxpose.xlu0.c.b16.cont [6/8] 0, 128
        %3290 = vxpose.xlu0.c.b16.cont [7/8] 0, 128
        %3291 = vxpose.xlu0.c.b16.end [8/8] 0, 128
        %v3292 = vpop.trf.xlu0
        %v3293 = vpop.trf.xlu0
        %v3294 = vpop.trf.xlu0
        %v3295 = vpop.trf.xlu0
        %v3296 = vpop.trf.xlu0
        %v3297 = vpop.trf.xlu0
        %v3298 = vpop.trf.xlu0
        %v3299 = vpop.trf.xlu0
        %3300 = vxpose.xlu0.c.b16.start [1/8] %v2705, 128
        %3301 = vxpose.xlu0.c.b16.cont [2/8] 0, 128
        %3302 = vxpose.xlu0.c.b16.cont [3/8] 0, 128
        %3303 = vxpose.xlu0.c.b16.cont [4/8] 0, 128
        %3304 = vxpose.xlu0.c.b16.cont [5/8] 0, 128
        %3305 = vxpose.xlu0.c.b16.cont [6/8] 0, 128
        %3306 = vxpose.xlu0.c.b16.cont [7/8] 0, 128
        %3307 = vxpose.xlu0.c.b16.end [8/8] 0, 128
        %v3308 = vpop.trf.xlu0
        %v3309 = vpop.trf.xlu0
        %v3310 = vpop.trf.xlu0
        %v3311 = vpop.trf.xlu0
        %v3312 = vpop.trf.xlu0
        %v3313 = vpop.trf.xlu0
        %v3314 = vpop.trf.xlu0
        %v3315 = vpop.trf.xlu0
        %3316 = vxpose.xlu0.c.b16.start [1/8] %v2706, 128
        %3317 = vxpose.xlu0.c.b16.cont [2/8] 0, 128
        %3318 = vxpose.xlu0.c.b16.cont [3/8] 0, 128
        %3319 = vxpose.xlu0.c.b16.cont [4/8] 0, 128
        %3320 = vxpose.xlu0.c.b16.cont [5/8] 0, 128
        %3321 = vxpose.xlu0.c.b16.cont [6/8] 0, 128
        %3322 = vxpose.xlu0.c.b16.cont [7/8] 0, 128
        %3323 = vxpose.xlu0.c.b16.end [8/8] 0, 128
        %v3324 = vpop.trf.xlu0
        %v3325 = vpop.trf.xlu0
        %v3326 = vpop.trf.xlu0
        %v3327 = vpop.trf.xlu0
        %v3328 = vpop.trf.xlu0
        %v3329 = vpop.trf.xlu0
        %v3330 = vpop.trf.xlu0
        %v3331 = vpop.trf.xlu0
        %3332 = vxpose.xlu0.c.b16.start [1/8] %v2707, 128
        %3333 = vxpose.xlu0.c.b16.cont [2/8] 0, 128
        %3334 = vxpose.xlu0.c.b16.cont [3/8] 0, 128
        %3335 = vxpose.xlu0.c.b16.cont [4/8] 0, 128
        %3336 = vxpose.xlu0.c.b16.cont [5/8] 0, 128
        %3337 = vxpose.xlu0.c.b16.cont [6/8] 0, 128
        %3338 = vxpose.xlu0.c.b16.cont [7/8] 0, 128
        %3339 = vxpose.xlu0.c.b16.end [8/8] 0, 128
        %v3340 = vpop.trf.xlu0
        %v3341 = vpop.trf.xlu0
        %v3342 = vpop.trf.xlu0
        %v3343 = vpop.trf.xlu0
        %v3344 = vpop.trf.xlu0
        %v3345 = vpop.trf.xlu0
        %v3346 = vpop.trf.xlu0
        %v3347 = vpop.trf.xlu0
        %3348 = vxpose.xlu0.c.b16.start [1/8] %v2708, 128
        %3349 = vxpose.xlu0.c.b16.cont [2/8] 0, 128
        %3350 = vxpose.xlu0.c.b16.cont [3/8] 0, 128
        %3351 = vxpose.xlu0.c.b16.cont [4/8] 0, 128
        %3352 = vxpose.xlu0.c.b16.cont [5/8] 0, 128
        %3353 = vxpose.xlu0.c.b16.cont [6/8] 0, 128
        %3354 = vxpose.xlu0.c.b16.cont [7/8] 0, 128
        %3355 = vxpose.xlu0.c.b16.end [8/8] 0, 128
        %v3356 = vpop.trf.xlu0
        %v3357 = vpop.trf.xlu0
        %v3358 = vpop.trf.xlu0
        %v3359 = vpop.trf.xlu0
        %v3360 = vpop.trf.xlu0
        %v3361 = vpop.trf.xlu0
        %v3362 = vpop.trf.xlu0
        %v3363 = vpop.trf.xlu0
        %3364 = vxpose.xlu0.c.b16.start [1/8] %v2709, 128
        %3365 = vxpose.xlu0.c.b16.cont [2/8] 0, 128
        %3366 = vxpose.xlu0.c.b16.cont [3/8] 0, 128
        %3367 = vxpose.xlu0.c.b16.cont [4/8] 0, 128
        %3368 = vxpose.xlu0.c.b16.cont [5/8] 0, 128
        %3369 = vxpose.xlu0.c.b16.cont [6/8] 0, 128
        %3370 = vxpose.xlu0.c.b16.cont [7/8] 0, 128
        %3371 = vxpose.xlu0.c.b16.end [8/8] 0, 128
        %v3372 = vpop.trf.xlu0
        %v3373 = vpop.trf.xlu0
        %v3374 = vpop.trf.xlu0
        %v3375 = vpop.trf.xlu0
        %v3376 = vpop.trf.xlu0
        %v3377 = vpop.trf.xlu0
        %v3378 = vpop.trf.xlu0
        %v3379 = vpop.trf.xlu0
        %3380 = vxpose.xlu0.c.b16.start [1/8] %v2710, 128
        %3381 = vxpose.xlu0.c.b16.cont [2/8] 0, 128
        %3382 = vxpose.xlu0.c.b16.cont [3/8] 0, 128
        %3383 = vxpose.xlu0.c.b16.cont [4/8] 0, 128
        %3384 = vxpose.xlu0.c.b16.cont [5/8] 0, 128
        %3385 = vxpose.xlu0.c.b16.cont [6/8] 0, 128
        %3386 = vxpose.xlu0.c.b16.cont [7/8] 0, 128
        %3387 = vxpose.xlu0.c.b16.end [8/8] 0, 128
        %v3388 = vpop.trf.xlu0
        %v3389 = vpop.trf.xlu0
        %v3390 = vpop.trf.xlu0
        %v3391 = vpop.trf.xlu0
        %v3392 = vpop.trf.xlu0
        %v3393 = vpop.trf.xlu0
        %v3394 = vpop.trf.xlu0
        %v3395 = vpop.trf.xlu0
        %3396 = vxpose.xlu0.c.b16.start [1/8] %v2711, 128
        %3397 = vxpose.xlu0.c.b16.cont [2/8] 0, 128
        %3398 = vxpose.xlu0.c.b16.cont [3/8] 0, 128
        %3399 = vxpose.xlu0.c.b16.cont [4/8] 0, 128
        %3400 = vxpose.xlu0.c.b16.cont [5/8] 0, 128
        %3401 = vxpose.xlu0.c.b16.cont [6/8] 0, 128
        %3402 = vxpose.xlu0.c.b16.cont [7/8] 0, 128
        %3403 = vxpose.xlu0.c.b16.end [8/8] 0, 128
        %v3404 = vpop.trf.xlu0
        %v3405 = vpop.trf.xlu0
        %v3406 = vpop.trf.xlu0
        %v3407 = vpop.trf.xlu0
        %v3408 = vpop.trf.xlu0
        %v3409 = vpop.trf.xlu0
        %v3410 = vpop.trf.xlu0
        %v3411 = vpop.trf.xlu0
        %v3412 = vrot.slane %v3356, 4
        %v3413 = vsel %vm972, %v3412, %v3292
        %v3415 = vunpack.c.l.s4 1983009808
        %v3416 = vunpack.c.0.s8 %v3415
        %v3417 = vperm.slane %v3413, %v3416
        %v3418 = vrot.slane %v3388, 4
        %v3419 = vsel %vm972, %v3418, %v3324
        %v3421 = vunpack.c.l.s4 1983009808
        %v3422 = vunpack.c.0.s8 %v3421
        %v3423 = vperm.slane %v3419, %v3422
        %v3424 = vrot.slane %v3423, 4
        %v3425 = vsel %vm972, %v3424, %v3417
        %v3426 = vrot.slane %v3417, 4
        %v3427 = vsel %vm972, %v3423, %v3426
        %v3429 = vunpack.c.l.s4 1934713408
        %v3430 = vunpack.c.0.s8 %v3429
        %v3431 = vperm.slane %v3425, %v3430
        %v3433 = vunpack.c.l.s4 1934713408
        %v3434 = vunpack.c.0.s8 %v3433
        %v3435 = vperm.slane %v3427, %v3434
        %v3436 = vrot.slane %v3431, 4
        %v3437 = vsel %vm972, 0, %v3436
        %v3438 = vrot.slane %v3435, 4
        %v3439 = vsel %vm972, 0, %v3438
        %v3440 = vrot.slane %v3372, 4
        %v3441 = vsel %vm972, %v3440, %v3308
        %v3443 = vunpack.c.l.s4 1983009808
        %v3444 = vunpack.c.0.s8 %v3443
        %v3445 = vperm.slane %v3441, %v3444
        %v3446 = vrot.slane %v3404, 4
        %v3447 = vsel %vm972, %v3446, %v3340
        %v3449 = vunpack.c.l.s4 1983009808
        %v3450 = vunpack.c.0.s8 %v3449
        %v3451 = vperm.slane %v3447, %v3450
        %v3452 = vrot.slane %v3451, 4
        %v3453 = vsel %vm972, %v3452, %v3445
        %v3454 = vrot.slane %v3445, 4
        %v3455 = vsel %vm972, %v3451, %v3454
        %v3457 = vunpack.c.l.s4 1934713408
        %v3458 = vunpack.c.0.s8 %v3457
        %v3459 = vperm.slane %v3453, %v3458
        %v3461 = vunpack.c.l.s4 1934713408
        %v3462 = vunpack.c.0.s8 %v3461
        %v3463 = vperm.slane %v3455, %v3462
        %v3464 = vrot.slane %v3459, 4
        %v3465 = vsel %vm972, 0, %v3464
        %v3466 = vrot.slane %v3463, 4
        %v3467 = vsel %vm972, 0, %v3466
        %v3470 = vpack.i.b16 %v3459, %v3431
        %v3472 = vshrl.u32 %v3431, 16
        %v3473 = vshrl.u32 %v3459, 16
        %v3474 = vpack.i.b16 %v3473, %v3472
        %v3478 = vpack.i.b16 %v3465, %v3437
        %v3480 = vshrl.u32 %v3437, 16
        %v3481 = vshrl.u32 %v3465, 16
        %v3482 = vpack.i.b16 %v3481, %v3480
        %v3486 = vpack.i.b16 %v3463, %v3435
        %v3488 = vshrl.u32 %v3435, 16
        %v3489 = vshrl.u32 %v3463, 16
        %v3490 = vpack.i.b16 %v3489, %v3488
        %v3494 = vpack.i.b16 %v3467, %v3439
        %v3496 = vshrl.u32 %v3439, 16
        %v3497 = vshrl.u32 %v3467, 16
        %v3498 = vpack.i.b16 %v3497, %v3496
        %3500 = vxpose.xlu0.c.b16.start [1/8] %v3470, 128
        %3501 = vxpose.xlu0.c.b16.cont [2/8] 0, 128
        %3502 = vxpose.xlu0.c.b16.cont [3/8] 0, 128
        %3503 = vxpose.xlu0.c.b16.cont [4/8] 0, 128
        %3504 = vxpose.xlu0.c.b16.cont [5/8] 0, 128
        %3505 = vxpose.xlu0.c.b16.cont [6/8] 0, 128
        %3506 = vxpose.xlu0.c.b16.cont [7/8] 0, 128
        %3507 = vxpose.xlu0.c.b16.end [8/8] 0, 128
        %v3508 = vpop.trf.xlu0
        %v3509 = vpop.trf.xlu0
        %v3510 = vpop.trf.xlu0
        %v3511 = vpop.trf.xlu0
        %v3512 = vpop.trf.xlu0
        %v3513 = vpop.trf.xlu0
        %v3514 = vpop.trf.xlu0
        %v3515 = vpop.trf.xlu0
        %3516 = vxpose.xlu0.c.b16.start [1/8] %v3474, 128
        %3517 = vxpose.xlu0.c.b16.cont [2/8] 0, 128
        %3518 = vxpose.xlu0.c.b16.cont [3/8] 0, 128
        %3519 = vxpose.xlu0.c.b16.cont [4/8] 0, 128
        %3520 = vxpose.xlu0.c.b16.cont [5/8] 0, 128
        %3521 = vxpose.xlu0.c.b16.cont [6/8] 0, 128
        %3522 = vxpose.xlu0.c.b16.cont [7/8] 0, 128
        %3523 = vxpose.xlu0.c.b16.end [8/8] 0, 128
        %v3524 = vpop.trf.xlu0
        %v3525 = vpop.trf.xlu0
        %v3526 = vpop.trf.xlu0
        %v3527 = vpop.trf.xlu0
        %v3528 = vpop.trf.xlu0
        %v3529 = vpop.trf.xlu0
        %v3530 = vpop.trf.xlu0
        %v3531 = vpop.trf.xlu0
        %3532 = vxpose.xlu0.c.b16.start [1/8] %v3478, 128
        %3533 = vxpose.xlu0.c.b16.cont [2/8] 0, 128
        %3534 = vxpose.xlu0.c.b16.cont [3/8] 0, 128
        %3535 = vxpose.xlu0.c.b16.cont [4/8] 0, 128
        %3536 = vxpose.xlu0.c.b16.cont [5/8] 0, 128
        %3537 = vxpose.xlu0.c.b16.cont [6/8] 0, 128
        %3538 = vxpose.xlu0.c.b16.cont [7/8] 0, 128
        %3539 = vxpose.xlu0.c.b16.end [8/8] 0, 128
        %v3540 = vpop.trf.xlu0
        %v3541 = vpop.trf.xlu0
        %v3542 = vpop.trf.xlu0
        %v3543 = vpop.trf.xlu0
        %v3544 = vpop.trf.xlu0
        %v3545 = vpop.trf.xlu0
        %v3546 = vpop.trf.xlu0
        %v3547 = vpop.trf.xlu0
        %3548 = vxpose.xlu0.c.b16.start [1/8] %v3482, 128
        %3549 = vxpose.xlu0.c.b16.cont [2/8] 0, 128
        %3550 = vxpose.xlu0.c.b16.cont [3/8] 0, 128
        %3551 = vxpose.xlu0.c.b16.cont [4/8] 0, 128
        %3552 = vxpose.xlu0.c.b16.cont [5/8] 0, 128
        %3553 = vxpose.xlu0.c.b16.cont [6/8] 0, 128
        %3554 = vxpose.xlu0.c.b16.cont [7/8] 0, 128
        %3555 = vxpose.xlu0.c.b16.end [8/8] 0, 128
        %v3556 = vpop.trf.xlu0
        %v3557 = vpop.trf.xlu0
        %v3558 = vpop.trf.xlu0
        %v3559 = vpop.trf.xlu0
        %v3560 = vpop.trf.xlu0
        %v3561 = vpop.trf.xlu0
        %v3562 = vpop.trf.xlu0
        %v3563 = vpop.trf.xlu0
        %3564 = vxpose.xlu0.c.b16.start [1/8] %v3486, 128
        %3565 = vxpose.xlu0.c.b16.cont [2/8] 0, 128
        %3566 = vxpose.xlu0.c.b16.cont [3/8] 0, 128
        %3567 = vxpose.xlu0.c.b16.cont [4/8] 0, 128
        %3568 = vxpose.xlu0.c.b16.cont [5/8] 0, 128
        %3569 = vxpose.xlu0.c.b16.cont [6/8] 0, 128
        %3570 = vxpose.xlu0.c.b16.cont [7/8] 0, 128
        %3571 = vxpose.xlu0.c.b16.end [8/8] 0, 128
        %v3572 = vpop.trf.xlu0
        %v3573 = vpop.trf.xlu0
        %v3574 = vpop.trf.xlu0
        %v3575 = vpop.trf.xlu0
        %v3576 = vpop.trf.xlu0
        %v3577 = vpop.trf.xlu0
        %v3578 = vpop.trf.xlu0
        %v3579 = vpop.trf.xlu0
        %3580 = vxpose.xlu0.c.b16.start [1/8] %v3490, 128
        %3581 = vxpose.xlu0.c.b16.cont [2/8] 0, 128
        %3582 = vxpose.xlu0.c.b16.cont [3/8] 0, 128
        %3583 = vxpose.xlu0.c.b16.cont [4/8] 0, 128
        %3584 = vxpose.xlu0.c.b16.cont [5/8] 0, 128
        %3585 = vxpose.xlu0.c.b16.cont [6/8] 0, 128
        %3586 = vxpose.xlu0.c.b16.cont [7/8] 0, 128
        %3587 = vxpose.xlu0.c.b16.end [8/8] 0, 128
        %v3588 = vpop.trf.xlu0
        %v3589 = vpop.trf.xlu0
        %v3590 = vpop.trf.xlu0
        %v3591 = vpop.trf.xlu0
        %v3592 = vpop.trf.xlu0
        %v3593 = vpop.trf.xlu0
        %v3594 = vpop.trf.xlu0
        %v3595 = vpop.trf.xlu0
        %3596 = vxpose.xlu0.c.b16.start [1/8] %v3494, 128
        %3597 = vxpose.xlu0.c.b16.cont [2/8] 0, 128
        %3598 = vxpose.xlu0.c.b16.cont [3/8] 0, 128
        %3599 = vxpose.xlu0.c.b16.cont [4/8] 0, 128
        %3600 = vxpose.xlu0.c.b16.cont [5/8] 0, 128
        %3601 = vxpose.xlu0.c.b16.cont [6/8] 0, 128
        %3602 = vxpose.xlu0.c.b16.cont [7/8] 0, 128
        %3603 = vxpose.xlu0.c.b16.end [8/8] 0, 128
        %v3604 = vpop.trf.xlu0
        %v3605 = vpop.trf.xlu0
        %v3606 = vpop.trf.xlu0
        %v3607 = vpop.trf.xlu0
        %v3608 = vpop.trf.xlu0
        %v3609 = vpop.trf.xlu0
        %v3610 = vpop.trf.xlu0
        %v3611 = vpop.trf.xlu0
        %3612 = vxpose.xlu0.c.b16.start [1/8] %v3498, 128
        %3613 = vxpose.xlu0.c.b16.cont [2/8] 0, 128
        %3614 = vxpose.xlu0.c.b16.cont [3/8] 0, 128
        %3615 = vxpose.xlu0.c.b16.cont [4/8] 0, 128
        %3616 = vxpose.xlu0.c.b16.cont [5/8] 0, 128
        %3617 = vxpose.xlu0.c.b16.cont [6/8] 0, 128
        %3618 = vxpose.xlu0.c.b16.cont [7/8] 0, 128
        %3619 = vxpose.xlu0.c.b16.end [8/8] 0, 128
        %v3620 = vpop.trf.xlu0
        %v3621 = vpop.trf.xlu0
        %v3622 = vpop.trf.xlu0
        %v3623 = vpop.trf.xlu0
        %v3624 = vpop.trf.xlu0
        %v3625 = vpop.trf.xlu0
        %v3626 = vpop.trf.xlu0
        %v3627 = vpop.trf.xlu0
        %v3628 = vrot.slane %v3572, 4
        %v3629 = vsel %vm972, %v3628, %v3508
        %v3631 = vunpack.c.l.s4 1983009808
        %v3632 = vunpack.c.0.s8 %v3631
        %v3633 = vperm.slane %v3629, %v3632
        %v3634 = vrot.slane %v3604, 4
        %v3635 = vsel %vm972, %v3634, %v3540
        %v3637 = vunpack.c.l.s4 1983009808
        %v3638 = vunpack.c.0.s8 %v3637
        %v3639 = vperm.slane %v3635, %v3638
        %v3640 = vrot.slane %v3639, 4
        %v3641 = vsel %vm972, %v3640, %v3633
        %v3643 = vunpack.c.l.s4 1934713408
        %v3644 = vunpack.c.0.s8 %v3643
        %v3645 = vperm.slane %v3641, %v3644
        %v3646 = vrot.slane %v3645, 4
        %v3647 = vsel %vm972, 0, %v3646
        %v3648 = vrot.slane %v3588, 4
        %v3649 = vsel %vm972, %v3648, %v3524
        %v3651 = vunpack.c.l.s4 1983009808
        %v3652 = vunpack.c.0.s8 %v3651
        %v3653 = vperm.slane %v3649, %v3652
        %v3654 = vrot.slane %v3620, 4
        %v3655 = vsel %vm972, %v3654, %v3556
        %v3657 = vunpack.c.l.s4 1983009808
        %v3658 = vunpack.c.0.s8 %v3657
        %v3659 = vperm.slane %v3655, %v3658
        %v3660 = vrot.slane %v3659, 4
        %v3661 = vsel %vm972, %v3660, %v3653
        %v3663 = vunpack.c.l.s4 1934713408
        %v3664 = vunpack.c.0.s8 %v3663
        %v3665 = vperm.slane %v3661, %v3664
        %v3666 = vrot.slane %v3665, 4
        %v3667 = vsel %vm972, 0, %v3666
        %v3670 = vpack.i.b16 %v3665, %v3645
        %v3671 = vshrl.u32 %v3645, 16
        %v3672 = vshrl.u32 %v3665, 16
        %v3673 = vpack.i.b16 %v3672, %v3671
        %v3676 = vpack.i.b16 %v3667, %v3647
        %v3677 = vshrl.u32 %v3647, 16
        %v3678 = vshrl.u32 %v3667, 16
        %v3679 = vpack.i.b16 %v3678, %v3677
        %v3681 = vsel %vm1420, %v3670, 0
        %v3684 = vsel %vm1420, %v3280, 0
        %3686 = vmatpush.bf16.xpose.msra.mxu0 0
        %3687 = vmatpush.bf16.xpose.msra.mxu0 0
        %3688 = vmatpush.bf16.xpose.msra.mxu0 0
        %3689 = vmatpush.bf16.xpose.msra.mxu0 0
        %3690 = vmatpush.bf16.xpose.msra.mxu0 0
        %3691 = vmatpush.bf16.xpose.msra.mxu0 0
        %3692 = vmatpush.bf16.xpose.msra.mxu0 0
        %3693 = vmatpush.bf16.xpose.msra.mxu0 %v3684
        %3694 = vmatmul.bf16.gmra.mxu0 %v3681
        %v3695 = vpop.f32.mrf.mxu0
        %v3696 = vadd.f32 0.0, %v3695
        %v3697 = vpop.f32.mrf.mxu0
        %3698 = vdwg.mxu0
        %v3700 = vsel %vm1420, %v3673, 0
        %v3703 = vsel %vm1420, %v3281, 0
        %3705 = vmatpush.bf16.xpose.msra.mxu0 0
        %3706 = vmatpush.bf16.xpose.msra.mxu0 0
        %3707 = vmatpush.bf16.xpose.msra.mxu0 0
        %3708 = vmatpush.bf16.xpose.msra.mxu0 0
        %3709 = vmatpush.bf16.xpose.msra.mxu0 0
        %3710 = vmatpush.bf16.xpose.msra.mxu0 0
        %3711 = vmatpush.bf16.xpose.msra.mxu0 0
        %3712 = vmatpush.bf16.xpose.msra.mxu0 %v3703
        %3713 = vmatmul.bf16.gmra.mxu0 %v3700
        %v3714 = vpop.f32.mrf.mxu0
        %v3715 = vadd.f32 0.0, %v3714
        %v3716 = vpop.f32.mrf.mxu0
        %3717 = vdwg.mxu0
        %v3719 = vsel %vm1420, %v3676, 0
        %v3722 = vsel %vm1420, %v3282, 0
        %3724 = vmatpush.bf16.xpose.msra.mxu0 0
        %3725 = vmatpush.bf16.xpose.msra.mxu0 0
        %3726 = vmatpush.bf16.xpose.msra.mxu0 0
        %3727 = vmatpush.bf16.xpose.msra.mxu0 0
        %3728 = vmatpush.bf16.xpose.msra.mxu0 0
        %3729 = vmatpush.bf16.xpose.msra.mxu0 0
        %3730 = vmatpush.bf16.xpose.msra.mxu0 0
        %3731 = vmatpush.bf16.xpose.msra.mxu0 %v3722
        %3732 = vmatmul.bf16.gmra.mxu0 %v3719
        %v3733 = vpop.f32.mrf.mxu0
        %v3734 = vadd.f32 0.0, %v3733
        %v3735 = vpop.f32.mrf.mxu0
        %3736 = vdwg.mxu0
        %v3738 = vsel %vm1420, %v3679, 0
        %v3741 = vsel %vm1420, %v3283, 0
        %3743 = vmatpush.bf16.xpose.msra.mxu0 0
        %3744 = vmatpush.bf16.xpose.msra.mxu0 0
        %3745 = vmatpush.bf16.xpose.msra.mxu0 0
        %3746 = vmatpush.bf16.xpose.msra.mxu0 0
        %3747 = vmatpush.bf16.xpose.msra.mxu0 0
        %3748 = vmatpush.bf16.xpose.msra.mxu0 0
        %3749 = vmatpush.bf16.xpose.msra.mxu0 0
        %3750 = vmatpush.bf16.xpose.msra.mxu0 %v3741
        %3751 = vmatmul.bf16.gmra.mxu0 %v3738
        %v3752 = vpop.f32.mrf.mxu0
        %v3753 = vadd.f32 0.0, %v3752
        %v3754 = vpop.f32.mrf.mxu0
        %3755 = vdwg.mxu0
        %3756 = vxpose.xlu0.b32.start [1/16] %v3696, 128
        %3757 = vxpose.xlu0.b32.cont [2/16] 0.0, 128
        %3758 = vxpose.xlu0.b32.cont [3/16] 0.0, 128
        %3759 = vxpose.xlu0.b32.cont [4/16] 0.0, 128
        %3760 = vxpose.xlu0.b32.cont [5/16] 0.0, 128
        %3761 = vxpose.xlu0.b32.cont [6/16] 0.0, 128
        %3762 = vxpose.xlu0.b32.cont [7/16] 0.0, 128
        %3763 = vxpose.xlu0.b32.cont [8/16] 0.0, 128
        %3764 = vxpose.xlu0.b32.cont [9/16] 0.0, 128
        %3765 = vxpose.xlu0.b32.cont [10/16] 0.0, 128
        %3766 = vxpose.xlu0.b32.cont [11/16] 0.0, 128
        %3767 = vxpose.xlu0.b32.cont [12/16] 0.0, 128
        %3768 = vxpose.xlu0.b32.cont [13/16] 0.0, 128
        %3769 = vxpose.xlu0.b32.cont [14/16] 0.0, 128
        %3770 = vxpose.xlu0.b32.cont [15/16] 0.0, 128
        %3771 = vxpose.xlu0.b32.end [16/16] 0.0, 128
        %v3772 = vpop.trf.xlu0
        %v3773 = vpop.trf.xlu0
        %v3774 = vpop.trf.xlu0
        %v3775 = vpop.trf.xlu0
        %v3776 = vpop.trf.xlu0
        %v3777 = vpop.trf.xlu0
        %v3778 = vpop.trf.xlu0
        %v3779 = vpop.trf.xlu0
        %v3780 = vpop.trf.xlu0
        %v3781 = vpop.trf.xlu0
        %v3782 = vpop.trf.xlu0
        %v3783 = vpop.trf.xlu0
        %v3784 = vpop.trf.xlu0
        %v3785 = vpop.trf.xlu0
        %v3786 = vpop.trf.xlu0
        %v3787 = vpop.trf.xlu0
        %3788 = vxpose.xlu0.b32.start [1/16] %v3715, 128
        %3789 = vxpose.xlu0.b32.cont [2/16] 0.0, 128
        %3790 = vxpose.xlu0.b32.cont [3/16] 0.0, 128
        %3791 = vxpose.xlu0.b32.cont [4/16] 0.0, 128
        %3792 = vxpose.xlu0.b32.cont [5/16] 0.0, 128
        %3793 = vxpose.xlu0.b32.cont [6/16] 0.0, 128
        %3794 = vxpose.xlu0.b32.cont [7/16] 0.0, 128
        %3795 = vxpose.xlu0.b32.cont [8/16] 0.0, 128
        %3796 = vxpose.xlu0.b32.cont [9/16] 0.0, 128
        %3797 = vxpose.xlu0.b32.cont [10/16] 0.0, 128
        %3798 = vxpose.xlu0.b32.cont [11/16] 0.0, 128
        %3799 = vxpose.xlu0.b32.cont [12/16] 0.0, 128
        %3800 = vxpose.xlu0.b32.cont [13/16] 0.0, 128
        %3801 = vxpose.xlu0.b32.cont [14/16] 0.0, 128
        %3802 = vxpose.xlu0.b32.cont [15/16] 0.0, 128
        %3803 = vxpose.xlu0.b32.end [16/16] 0.0, 128
        %v3804 = vpop.trf.xlu0
        %v3805 = vpop.trf.xlu0
        %v3806 = vpop.trf.xlu0
        %v3807 = vpop.trf.xlu0
        %v3808 = vpop.trf.xlu0
        %v3809 = vpop.trf.xlu0
        %v3810 = vpop.trf.xlu0
        %v3811 = vpop.trf.xlu0
        %v3812 = vpop.trf.xlu0
        %v3813 = vpop.trf.xlu0
        %v3814 = vpop.trf.xlu0
        %v3815 = vpop.trf.xlu0
        %v3816 = vpop.trf.xlu0
        %v3817 = vpop.trf.xlu0
        %v3818 = vpop.trf.xlu0
        %v3819 = vpop.trf.xlu0
        %3820 = vxpose.xlu0.b32.start [1/16] %v3734, 128
        %3821 = vxpose.xlu0.b32.cont [2/16] 0.0, 128
        %3822 = vxpose.xlu0.b32.cont [3/16] 0.0, 128
        %3823 = vxpose.xlu0.b32.cont [4/16] 0.0, 128
        %3824 = vxpose.xlu0.b32.cont [5/16] 0.0, 128
        %3825 = vxpose.xlu0.b32.cont [6/16] 0.0, 128
        %3826 = vxpose.xlu0.b32.cont [7/16] 0.0, 128
        %3827 = vxpose.xlu0.b32.cont [8/16] 0.0, 128
        %3828 = vxpose.xlu0.b32.cont [9/16] 0.0, 128
        %3829 = vxpose.xlu0.b32.cont [10/16] 0.0, 128
        %3830 = vxpose.xlu0.b32.cont [11/16] 0.0, 128
        %3831 = vxpose.xlu0.b32.cont [12/16] 0.0, 128
        %3832 = vxpose.xlu0.b32.cont [13/16] 0.0, 128
        %3833 = vxpose.xlu0.b32.cont [14/16] 0.0, 128
        %3834 = vxpose.xlu0.b32.cont [15/16] 0.0, 128
        %3835 = vxpose.xlu0.b32.end [16/16] 0.0, 128
        %v3836 = vpop.trf.xlu0
        %v3837 = vpop.trf.xlu0
        %v3838 = vpop.trf.xlu0
        %v3839 = vpop.trf.xlu0
        %v3840 = vpop.trf.xlu0
        %v3841 = vpop.trf.xlu0
        %v3842 = vpop.trf.xlu0
        %v3843 = vpop.trf.xlu0
        %v3844 = vpop.trf.xlu0
        %v3845 = vpop.trf.xlu0
        %v3846 = vpop.trf.xlu0
        %v3847 = vpop.trf.xlu0
        %v3848 = vpop.trf.xlu0
        %v3849 = vpop.trf.xlu0
        %v3850 = vpop.trf.xlu0
        %v3851 = vpop.trf.xlu0
        %3852 = vxpose.xlu0.b32.start [1/16] %v3753, 128
        %3853 = vxpose.xlu0.b32.cont [2/16] 0.0, 128
        %3854 = vxpose.xlu0.b32.cont [3/16] 0.0, 128
        %3855 = vxpose.xlu0.b32.cont [4/16] 0.0, 128
        %3856 = vxpose.xlu0.b32.cont [5/16] 0.0, 128
        %3857 = vxpose.xlu0.b32.cont [6/16] 0.0, 128
        %3858 = vxpose.xlu0.b32.cont [7/16] 0.0, 128
        %3859 = vxpose.xlu0.b32.cont [8/16] 0.0, 128
        %3860 = vxpose.xlu0.b32.cont [9/16] 0.0, 128
        %3861 = vxpose.xlu0.b32.cont [10/16] 0.0, 128
        %3862 = vxpose.xlu0.b32.cont [11/16] 0.0, 128
        %3863 = vxpose.xlu0.b32.cont [12/16] 0.0, 128
        %3864 = vxpose.xlu0.b32.cont [13/16] 0.0, 128
        %3865 = vxpose.xlu0.b32.cont [14/16] 0.0, 128
        %3866 = vxpose.xlu0.b32.cont [15/16] 0.0, 128
        %3867 = vxpose.xlu0.b32.end [16/16] 0.0, 128
        %v3868 = vpop.trf.xlu0
        %v3869 = vpop.trf.xlu0
        %v3870 = vpop.trf.xlu0
        %v3871 = vpop.trf.xlu0
        %v3872 = vpop.trf.xlu0
        %v3873 = vpop.trf.xlu0
        %v3874 = vpop.trf.xlu0
        %v3875 = vpop.trf.xlu0
        %v3876 = vpop.trf.xlu0
        %v3877 = vpop.trf.xlu0
        %v3878 = vpop.trf.xlu0
        %v3879 = vpop.trf.xlu0
        %v3880 = vpop.trf.xlu0
        %v3881 = vpop.trf.xlu0
        %v3882 = vpop.trf.xlu0
        %v3883 = vpop.trf.xlu0
        %v3884 = vrot.slane %v3836, 4
        %v3885 = vsel %vm755, %v3884, %v3772
        %v3886 = vrot.slane %v3772, 4
        %v3887 = vsel %vm755, %v3836, %v3886
        %v3889 = vunpack.c.l.s4 1983009808
        %v3890 = vunpack.c.0.s8 %v3889
        %v3891 = vperm.slane %v3885, %v3890
        %v3893 = vunpack.c.l.s4 1983009808
        %v3894 = vunpack.c.0.s8 %v3893
        %v3895 = vperm.slane %v3887, %v3894
        %v3896 = vrot.slane %v3868, 4
        %v3897 = vsel %vm755, %v3896, %v3804
        %v3898 = vrot.slane %v3804, 4
        %v3899 = vsel %vm755, %v3868, %v3898
        %v3901 = vunpack.c.l.s4 1983009808
        %v3902 = vunpack.c.0.s8 %v3901
        %v3903 = vperm.slane %v3897, %v3902
        %v3905 = vunpack.c.l.s4 1983009808
        %v3906 = vunpack.c.0.s8 %v3905
        %v3907 = vperm.slane %v3899, %v3906
        %v3908 = vrot.slane %v3903, 4
        %v3909 = vsel %vm755, %v3908, %v3891
        %v3910 = vrot.slane %v3891, 4
        %v3911 = vsel %vm755, %v3903, %v3910
        %v3913 = vunpack.c.l.s4 1934713408
        %v3914 = vunpack.c.0.s8 %v3913
        %v3915 = vperm.slane %v3909, %v3914
        %v3917 = vunpack.c.l.s4 1934713408
        %v3918 = vunpack.c.0.s8 %v3917
        %v3919 = vperm.slane %v3911, %v3918
        %v3920 = vrot.slane %v3907, 4
        %v3921 = vsel %vm755, %v3920, %v3895
        %v3922 = vrot.slane %v3895, 4
        %v3923 = vsel %vm755, %v3907, %v3922
        %v3925 = vunpack.c.l.s4 1934713408
        %v3926 = vunpack.c.0.s8 %v3925
        %v3927 = vperm.slane %v3921, %v3926
        %v3929 = vunpack.c.l.s4 1934713408
        %v3930 = vunpack.c.0.s8 %v3929
        %v3931 = vperm.slane %v3923, %v3930
        %v3932 = vrot.slane %v3915, 4
        %v3933 = vsel %vm755, 0.0, %v3932
        %v3934 = vrot.slane %v3919, 4
        %v3935 = vsel %vm755, 0.0, %v3934
        %v3936 = vrot.slane %v3927, 4
        %v3937 = vsel %vm755, 0.0, %v3936
        %v3938 = vrot.slane %v3931, 4
        %v3939 = vsel %vm755, 0.0, %v3938
        %v3940 = vsel %vm755, %v3934, %v3915
        %v3942 = vunpack.c.l.s4 1983009808
        %v3943 = vunpack.c.0.s8 %v3942
        %v3944 = vperm.slane %v3940, %v3943
        %v3945 = vrot.slane %v3935, 4
        %v3946 = vsel %vm755, %v3945, %v3933
        %v3948 = vunpack.c.l.s4 1983009808
        %v3949 = vunpack.c.0.s8 %v3948
        %v3950 = vperm.slane %v3946, %v3949
        %v3951 = vsel %vm755, %v3938, %v3927
        %v3953 = vunpack.c.l.s4 1983009808
        %v3954 = vunpack.c.0.s8 %v3953
        %v3955 = vperm.slane %v3951, %v3954
        %v3956 = vrot.slane %v3939, 4
        %v3957 = vsel %vm755, %v3956, %v3937
        %v3959 = vunpack.c.l.s4 1983009808
        %v3960 = vunpack.c.0.s8 %v3959
        %v3961 = vperm.slane %v3957, %v3960
        %v3962 = vrot.slane %v3950, 4
        %v3963 = vsel %vm755, %v3962, %v3944
        %v3964 = vrot.slane %v3944, 4
        %v3965 = vsel %vm755, %v3950, %v3964
        %v3967 = vunpack.c.l.s4 1934713408
        %v3968 = vunpack.c.0.s8 %v3967
        %v3969 = vperm.slane %v3963, %v3968
        %v3971 = vunpack.c.l.s4 1934713408
        %v3972 = vunpack.c.0.s8 %v3971
        %v3973 = vperm.slane %v3965, %v3972
        %v3974 = vrot.slane %v3961, 4
        %v3975 = vsel %vm755, %v3974, %v3955
        %v3976 = vrot.slane %v3955, 4
        %v3977 = vsel %vm755, %v3961, %v3976
        %v3979 = vunpack.c.l.s4 1934713408
        %v3980 = vunpack.c.0.s8 %v3979
        %v3981 = vperm.slane %v3975, %v3980
        %v3983 = vunpack.c.l.s4 1934713408
        %v3984 = vunpack.c.0.s8 %v3983
        %v3985 = vperm.slane %v3977, %v3984
        %v3986 = vrot.slane %v3981, 4
        %v3987 = vsel %vm755, %v3986, %v3969
        %v3988 = vrot.slane %v3969, 4
        %v3989 = vsel %vm755, %v3981, %v3988
        %v3990 = vrot.slane %v3985, 4
        %v3991 = vsel %vm755, %v3990, %v3973
        %v3992 = vrot.slane %v3973, 4
        %v3993 = vsel %vm755, %v3985, %v3992
        %3995 = vrot.lane.b32.xlu0 %v3989, 8
        %v3996 = vpop.permute.xlu0 %3995
        %3999 = vrot.lane.b32.xlu0 %v3991, 16
        %v4000 = vpop.permute.xlu0 %3999
        %4003 = vrot.lane.b32.xlu0 %v3993, 24
        %v4004 = vpop.permute.xlu0 %4003
        %v4006 = vsel %vm1420, %v3987, %v3996
        %v4007 = vsel %vm2269, %v4006, %v4000
        %v4008 = vsel %vm2271, %v4007, %v4004
        %v4009 = vpack.c.bf16 %v4008, %v4008
        %v4014 = vunpack.c.l.b16 %v2482
        %v4015 = vunpack.c.l.b16 %v2483
        %v4016 = vunpack.c.l.b16 %v2484
        %v4017 = vunpack.c.l.b16 %v2485
        %v4018 = vpack.c.b16 %v4015, %v4014
        %v4019 = vpack.c.b16 %v4017, %v4016
        %v4023 = vsel %vm681, %v4009, 0
        %4025 = vmatpush.bf16.msra.mxu0 0
        %4026 = vmatpush.bf16.msra.mxu0 0
        %4027 = vmatpush.bf16.msra.mxu0 0
        %4028 = vmatpush.bf16.msra.mxu0 0
        %4029 = vmatpush.bf16.msra.mxu0 0
        %4030 = vmatpush.bf16.msra.mxu0 0
        %4031 = vmatpush.bf16.msra.mxu0 %v4019
        %4032 = vmatpush.bf16.msra.mxu0 %v4018
        %4033 = vmatmul.bf16.gmra.mxu0 %v4023
        %v4034 = vpop.f32.mrf.mxu0
        %v4035 = vadd.f32 0.0, %v4034
        %v4036 = vpop.f32.mrf.mxu0
        %4037 = vdwg.mxu0
        %v4038 = vadd.f32 %v2428, %v4035
        %v4039 = vld [vmem:[%s6 + $0x4] sm:$0x1]
        %v4040 = vmul.f32 %v4038, %v4038
        %v4041 = vsel %vm681, %v4040, 0.0
        %4042 = vadd.xlane.f32.xlu0 %v4041
        %v4043 = vpop.xlane.xlu0 %4042
        %v4044 = vmul.f32 %v4043, %v691
        %v4045 = vadd.f32 %v4044, 1e-06
        %v4046 = vrsqrt.pop %v4045
        %v4047 = vmul.f32 %v4046, %v4045
        %v4048 = vmul.f32 %v4047, %v4046
        %v4049 = vmul.f32 0.5, %v4048
        %v4050 = vsub.f32 1.5, %v4049
        %v4051 = vmul.f32 %v4046, %v4050
        %vm4052 = vweird.f32 %v4045
        %vm4053 = vweird.f32 %v4046
        %vm4054 = vmor %vm4052, %vm4053
        %v4055 = vsel %vm4054, %v4046, %v4051
        %v4056 = vmul.f32 %v4038, %v4055
        %v4057 = vperm.slane %v4039, 0
        %v4058 = vmul.f32 %v4056, %v4057
        %v4059 = vld [vmem:[%s14] sm:$0xf]
        %v4060 = vld [vmem:[%s14 + $0x4] sm:$0xf]
        %v4061 = vld [vmem:[%s14 + $0x8] sm:$0xf]
        %v4062 = vld [vmem:[%s14 + $0xc] sm:$0xf]
        %v4063 = vpack.c.bf16 %v4058, %v4058
        %v4068 = vunpack.c.l.b16 %v4059
        %v4069 = vunpack.c.l.b16 %v4060
        %v4070 = vunpack.c.l.b16 %v4061
        %v4071 = vunpack.c.l.b16 %v4062
        %v4072 = vpack.c.b16 %v4069, %v4068
        %v4073 = vpack.c.b16 %v4071, %v4070
        %v4077 = vsel %vm681, %v4063, 0
        %4079 = vmatpush.bf16.msra.mxu0 0
        %4080 = vmatpush.bf16.msra.mxu0 0
        %4081 = vmatpush.bf16.msra.mxu0 0
        %4082 = vmatpush.bf16.msra.mxu0 0
        %4083 = vmatpush.bf16.msra.mxu0 0
        %4084 = vmatpush.bf16.msra.mxu0 0
        %4085 = vmatpush.bf16.msra.mxu0 %v4073
        %4086 = vmatpush.bf16.msra.mxu0 %v4072
        %4087 = vmatmul.bf16.gmra.mxu0 %v4077
        %v4088 = vpop.f32.mrf.mxu0
        %v4089 = vadd.f32 0.0, %v4088
        %v4090 = vpop.f32.mrf.mxu0
        %4091 = vdwg.mxu0
        %v4092 = vld [vmem:[%s15] sm:$0xf]
        %v4093 = vld [vmem:[%s15 + $0x4] sm:$0xf]
        %v4094 = vld [vmem:[%s15 + $0x8] sm:$0xf]
        %v4095 = vld [vmem:[%s15 + $0xc] sm:$0xf]
        %v4096 = vpack.c.bf16 %v2427, %v2427
        %v4101 = vunpack.c.l.b16 %v4092
        %v4102 = vunpack.c.l.b16 %v4093
        %v4103 = vunpack.c.l.b16 %v4094
        %v4104 = vunpack.c.l.b16 %v4095
        %v4105 = vpack.c.b16 %v4102, %v4101
        %v4106 = vpack.c.b16 %v4104, %v4103
        %v4110 = vsel %vm681, %v4096, 0
        %4112 = vmatpush.bf16.msra.mxu0 0
        %4113 = vmatpush.bf16.msra.mxu0 0
        %4114 = vmatpush.bf16.msra.mxu0 0
        %4115 = vmatpush.bf16.msra.mxu0 0
        %4116 = vmatpush.bf16.msra.mxu0 0
        %4117 = vmatpush.bf16.msra.mxu0 0
        %4118 = vmatpush.bf16.msra.mxu0 %v4106
        %4119 = vmatpush.bf16.msra.mxu0 %v4105
        %4120 = vmatmul.bf16.gmra.mxu0 %v4110
        %v4121 = vpop.f32.mrf.mxu0
        %v4122 = vadd.f32 0.0, %v4121
        %v4123 = vpop.f32.mrf.mxu0
        %4124 = vdwg.mxu0
        %v4125 = vld [vmem:[%s16] sm:$0xf]
        %v4126 = vld [vmem:[%s16 + $0x4] sm:$0xf]
        %v4127 = vld [vmem:[%s16 + $0x8] sm:$0xf]
        %v4128 = vld [vmem:[%s16 + $0xc] sm:$0xf]
        %4130 = vrot.lane.b32.xlu0 %v4089, 120
        %v4131 = vpop.permute.xlu0 %4130
        %4133 = vrot.lane.b32.xlu0 %v4089, 112
        %v4134 = vpop.permute.xlu0 %4133
        %4136 = vrot.lane.b32.xlu0 %v4089, 104
        %v4137 = vpop.permute.xlu0 %4136
        %v4139 = vrot.slane %v4134, 4
        %v4140 = vsel %vm755, %v4139, %v4089
        %v4141 = vrot.slane %v4089, 4
        %v4142 = vsel %vm755, %v4134, %v4141
        %v4144 = vunpack.c.l.s4 1983009808
        %v4145 = vunpack.c.0.s8 %v4144
        %v4146 = vperm.slane %v4140, %v4145
        %v4148 = vunpack.c.l.s4 1983009808
        %v4149 = vunpack.c.0.s8 %v4148
        %v4150 = vperm.slane %v4142, %v4149
        %v4151 = vrot.slane %v4137, 4
        %v4152 = vsel %vm755, %v4151, %v4131
        %v4153 = vrot.slane %v4131, 4
        %v4154 = vsel %vm755, %v4137, %v4153
        %v4156 = vunpack.c.l.s4 1983009808
        %v4157 = vunpack.c.0.s8 %v4156
        %v4158 = vperm.slane %v4152, %v4157
        %v4160 = vunpack.c.l.s4 1983009808
        %v4161 = vunpack.c.0.s8 %v4160
        %v4162 = vperm.slane %v4154, %v4161
        %v4163 = vrot.slane %v4158, 4
        %v4164 = vsel %vm755, %v4163, %v4146
        %v4165 = vrot.slane %v4146, 4
        %v4166 = vsel %vm755, %v4158, %v4165
        %v4168 = vunpack.c.l.s4 1934713408
        %v4169 = vunpack.c.0.s8 %v4168
        %v4170 = vperm.slane %v4164, %v4169
        %v4172 = vunpack.c.l.s4 1934713408
        %v4173 = vunpack.c.0.s8 %v4172
        %v4174 = vperm.slane %v4166, %v4173
        %v4175 = vrot.slane %v4162, 4
        %v4176 = vsel %vm755, %v4175, %v4150
        %v4177 = vrot.slane %v4150, 4
        %v4178 = vsel %vm755, %v4162, %v4177
        %v4180 = vunpack.c.l.s4 1934713408
        %v4181 = vunpack.c.0.s8 %v4180
        %v4182 = vperm.slane %v4176, %v4181
        %v4184 = vunpack.c.l.s4 1934713408
        %v4185 = vunpack.c.0.s8 %v4184
        %v4186 = vperm.slane %v4178, %v4185
        %v4187 = vrot.slane %v4170, 4
        %v4188 = vsel %vm755, 0.0, %v4187
        %v4189 = vrot.slane %v4174, 4
        %v4190 = vsel %vm755, 0.0, %v4189
        %v4191 = vrot.slane %v4182, 4
        %v4192 = vsel %vm755, 0.0, %v4191
        %v4193 = vrot.slane %v4186, 4
        %v4194 = vsel %vm755, 0.0, %v4193
        %v4195 = vpack.c.bf16 %v4170, %v4170
        %v4196 = vpack.c.bf16 %v4188, %v4188
        %v4197 = vpack.c.bf16 %v4174, %v4174
        %v4198 = vpack.c.bf16 %v4190, %v4190
        %v4199 = vpack.c.bf16 %v4182, %v4182
        %v4200 = vpack.c.bf16 %v4192, %v4192
        %v4201 = vpack.c.bf16 %v4186, %v4186
        %v4202 = vpack.c.bf16 %v4194, %v4194
        %4204 = vrot.lane.b32.xlu0 %v4122, 120
        %v4205 = vpop.permute.xlu0 %4204
        %4207 = vrot.lane.b32.xlu0 %v4122, 112
        %v4208 = vpop.permute.xlu0 %4207
        %4210 = vrot.lane.b32.xlu0 %v4122, 104
        %v4211 = vpop.permute.xlu0 %4210
        %v4213 = vrot.slane %v4208, 4
        %v4214 = vsel %vm755, %v4213, %v4122
        %v4215 = vrot.slane %v4122, 4
        %v4216 = vsel %vm755, %v4208, %v4215
        %v4218 = vunpack.c.l.s4 1983009808
        %v4219 = vunpack.c.0.s8 %v4218
        %v4220 = vperm.slane %v4214, %v4219
        %v4222 = vunpack.c.l.s4 1983009808
        %v4223 = vunpack.c.0.s8 %v4222
        %v4224 = vperm.slane %v4216, %v4223
        %v4225 = vrot.slane %v4211, 4
        %v4226 = vsel %vm755, %v4225, %v4205
        %v4227 = vrot.slane %v4205, 4
        %v4228 = vsel %vm755, %v4211, %v4227
        %v4230 = vunpack.c.l.s4 1983009808
        %v4231 = vunpack.c.0.s8 %v4230
        %v4232 = vperm.slane %v4226, %v4231
        %v4234 = vunpack.c.l.s4 1983009808
        %v4235 = vunpack.c.0.s8 %v4234
        %v4236 = vperm.slane %v4228, %v4235
        %v4237 = vrot.slane %v4232, 4
        %v4238 = vsel %vm755, %v4237, %v4220
        %v4239 = vrot.slane %v4220, 4
        %v4240 = vsel %vm755, %v4232, %v4239
        %v4242 = vunpack.c.l.s4 1934713408
        %v4243 = vunpack.c.0.s8 %v4242
        %v4244 = vperm.slane %v4238, %v4243
        %v4246 = vunpack.c.l.s4 1934713408
        %v4247 = vunpack.c.0.s8 %v4246
        %v4248 = vperm.slane %v4240, %v4247
        %v4249 = vrot.slane %v4236, 4
        %v4250 = vsel %vm755, %v4249, %v4224
        %v4251 = vrot.slane %v4224, 4
        %v4252 = vsel %vm755, %v4236, %v4251
        %v4254 = vunpack.c.l.s4 1934713408
        %v4255 = vunpack.c.0.s8 %v4254
        %v4256 = vperm.slane %v4250, %v4255
        %v4258 = vunpack.c.l.s4 1934713408
        %v4259 = vunpack.c.0.s8 %v4258
        %v4260 = vperm.slane %v4252, %v4259
        %v4261 = vrot.slane %v4244, 4
        %v4262 = vsel %vm755, 0.0, %v4261
        %v4263 = vrot.slane %v4248, 4
        %v4264 = vsel %vm755, 0.0, %v4263
        %v4265 = vrot.slane %v4256, 4
        %v4266 = vsel %vm755, 0.0, %v4265
        %v4267 = vrot.slane %v4260, 4
        %v4268 = vsel %vm755, 0.0, %v4267
        %v4269 = vpack.c.bf16 %v4244, %v4244
        %v4270 = vpack.c.bf16 %v4262, %v4262
        %v4271 = vpack.c.bf16 %v4248, %v4248
        %v4272 = vpack.c.bf16 %v4264, %v4264
        %v4273 = vpack.c.bf16 %v4256, %v4256
        %v4274 = vpack.c.bf16 %v4266, %v4266
        %v4275 = vpack.c.bf16 %v4260, %v4260
        %v4276 = vpack.c.bf16 %v4268, %v4268
        %4277 = vrot.lane.b32.xlu0 %v4122, 96
        %v4278 = vpop.permute.xlu0 %4277
        %4279 = vrot.lane.b32.xlu0 %v4205, 96
        %v4280 = vpop.permute.xlu0 %4279
        %4281 = vrot.lane.b32.xlu0 %v4208, 96
        %v4282 = vpop.permute.xlu0 %4281
        %4283 = vrot.lane.b32.xlu0 %v4211, 96
        %v4284 = vpop.permute.xlu0 %4283
        %v4289 = vrot.slane %v4282, 4
        %v4290 = vsel %vm755, %v4289, %v4278
        %v4291 = vrot.slane %v4278, 4
        %v4292 = vsel %vm755, %v4282, %v4291
        %v4294 = vunpack.c.l.s4 1983009808
        %v4295 = vunpack.c.0.s8 %v4294
        %v4296 = vperm.slane %v4290, %v4295
        %v4298 = vunpack.c.l.s4 1983009808
        %v4299 = vunpack.c.0.s8 %v4298
        %v4300 = vperm.slane %v4292, %v4299
        %v4301 = vrot.slane %v4284, 4
        %v4302 = vsel %vm755, %v4301, %v4280
        %v4303 = vrot.slane %v4280, 4
        %v4304 = vsel %vm755, %v4284, %v4303
        %v4306 = vunpack.c.l.s4 1983009808
        %v4307 = vunpack.c.0.s8 %v4306
        %v4308 = vperm.slane %v4302, %v4307
        %v4310 = vunpack.c.l.s4 1983009808
        %v4311 = vunpack.c.0.s8 %v4310
        %v4312 = vperm.slane %v4304, %v4311
        %v4313 = vrot.slane %v4308, 4
        %v4314 = vsel %vm755, %v4313, %v4296
        %v4315 = vrot.slane %v4296, 4
        %v4316 = vsel %vm755, %v4308, %v4315
        %v4318 = vunpack.c.l.s4 1934713408
        %v4319 = vunpack.c.0.s8 %v4318
        %v4320 = vperm.slane %v4314, %v4319
        %v4322 = vunpack.c.l.s4 1934713408
        %v4323 = vunpack.c.0.s8 %v4322
        %v4324 = vperm.slane %v4316, %v4323
        %v4325 = vrot.slane %v4312, 4
        %v4326 = vsel %vm755, %v4325, %v4300
        %v4327 = vrot.slane %v4300, 4
        %v4328 = vsel %vm755, %v4312, %v4327
        %v4330 = vunpack.c.l.s4 1934713408
        %v4331 = vunpack.c.0.s8 %v4330
        %v4332 = vperm.slane %v4326, %v4331
        %v4334 = vunpack.c.l.s4 1934713408
        %v4335 = vunpack.c.0.s8 %v4334
        %v4336 = vperm.slane %v4328, %v4335
        %v4337 = vrot.slane %v4320, 4
        %v4338 = vsel %vm755, 0.0, %v4337
        %v4339 = vrot.slane %v4324, 4
        %v4340 = vsel %vm755, 0.0, %v4339
        %v4341 = vrot.slane %v4332, 4
        %v4342 = vsel %vm755, 0.0, %v4341
        %v4343 = vrot.slane %v4336, 4
        %v4344 = vsel %vm755, 0.0, %v4343
        %v4345 = vpack.c.bf16 %v4320, %v4320
        %v4346 = vpack.c.bf16 %v4338, %v4338
        %v4347 = vpack.c.bf16 %v4324, %v4324
        %v4348 = vpack.c.bf16 %v4340, %v4340
        %v4349 = vpack.c.bf16 %v4332, %v4332
        %v4350 = vpack.c.bf16 %v4342, %v4342
        %v4351 = vpack.c.bf16 %v4336, %v4336
        %v4352 = vpack.c.bf16 %v4344, %v4344
        %v4353 = vrot.slane %v4199, 4
        %v4354 = vsel %vm972, %v4353, %v4195
        %v4356 = vunpack.c.l.s4 1983009808
        %v4357 = vunpack.c.0.s8 %v4356
        %v4358 = vperm.slane %v4354, %v4357
        %v4359 = vrot.slane %v4201, 4
        %v4360 = vsel %vm972, %v4359, %v4197
        %v4362 = vunpack.c.l.s4 1983009808
        %v4363 = vunpack.c.0.s8 %v4362
        %v4364 = vperm.slane %v4360, %v4363
        %v4365 = vrot.slane %v4364, 4
        %v4366 = vsel %vm972, %v4365, %v4358
        %v4368 = vunpack.c.l.s4 1934713408
        %v4369 = vunpack.c.0.s8 %v4368
        %v4370 = vperm.slane %v4366, %v4369
        %v4371 = vrot.slane %v4370, 4
        %v4372 = vsel %vm972, 0, %v4371
        %v4373 = vrot.slane %v4200, 4
        %v4374 = vsel %vm972, %v4373, %v4196
        %v4376 = vunpack.c.l.s4 1983009808
        %v4377 = vunpack.c.0.s8 %v4376
        %v4378 = vperm.slane %v4374, %v4377
        %v4379 = vrot.slane %v4202, 4
        %v4380 = vsel %vm972, %v4379, %v4198
        %v4382 = vunpack.c.l.s4 1983009808
        %v4383 = vunpack.c.0.s8 %v4382
        %v4384 = vperm.slane %v4380, %v4383
        %v4385 = vrot.slane %v4384, 4
        %v4386 = vsel %vm972, %v4385, %v4378
        %v4388 = vunpack.c.l.s4 1934713408
        %v4389 = vunpack.c.0.s8 %v4388
        %v4390 = vperm.slane %v4386, %v4389
        %v4391 = vrot.slane %v4390, 4
        %v4392 = vsel %vm972, 0, %v4391
        %v4395 = vpack.i.b16 %v4390, %v4370
        %v4396 = vshrl.u32 %v4370, 16
        %v4397 = vshrl.u32 %v4390, 16
        %v4398 = vpack.i.b16 %v4397, %v4396
        %v4401 = vpack.i.b16 %v4392, %v4372
        %v4402 = vshrl.u32 %v4372, 16
        %v4403 = vshrl.u32 %v4392, 16
        %v4404 = vpack.i.b16 %v4403, %v4402
        %4405 = vxpose.xlu0.c.b16.start [1/8] %v4269, 128
        %4406 = vxpose.xlu0.c.b16.cont [2/8] 0, 128
        %4407 = vxpose.xlu0.c.b16.cont [3/8] 0, 128
        %4408 = vxpose.xlu0.c.b16.cont [4/8] 0, 128
        %4409 = vxpose.xlu0.c.b16.cont [5/8] 0, 128
        %4410 = vxpose.xlu0.c.b16.cont [6/8] 0, 128
        %4411 = vxpose.xlu0.c.b16.cont [7/8] 0, 128
        %4412 = vxpose.xlu0.c.b16.end [8/8] 0, 128
        %v4413 = vpop.trf.xlu0
        %v4414 = vpop.trf.xlu0
        %v4415 = vpop.trf.xlu0
        %v4416 = vpop.trf.xlu0
        %v4417 = vpop.trf.xlu0
        %v4418 = vpop.trf.xlu0
        %v4419 = vpop.trf.xlu0
        %v4420 = vpop.trf.xlu0
        %4421 = vxpose.xlu0.c.b16.start [1/8] %v4270, 128
        %4422 = vxpose.xlu0.c.b16.cont [2/8] 0, 128
        %4423 = vxpose.xlu0.c.b16.cont [3/8] 0, 128
        %4424 = vxpose.xlu0.c.b16.cont [4/8] 0, 128
        %4425 = vxpose.xlu0.c.b16.cont [5/8] 0, 128
        %4426 = vxpose.xlu0.c.b16.cont [6/8] 0, 128
        %4427 = vxpose.xlu0.c.b16.cont [7/8] 0, 128
        %4428 = vxpose.xlu0.c.b16.end [8/8] 0, 128
        %v4429 = vpop.trf.xlu0
        %v4430 = vpop.trf.xlu0
        %v4431 = vpop.trf.xlu0
        %v4432 = vpop.trf.xlu0
        %v4433 = vpop.trf.xlu0
        %v4434 = vpop.trf.xlu0
        %v4435 = vpop.trf.xlu0
        %v4436 = vpop.trf.xlu0
        %4437 = vxpose.xlu0.c.b16.start [1/8] %v4271, 128
        %4438 = vxpose.xlu0.c.b16.cont [2/8] 0, 128
        %4439 = vxpose.xlu0.c.b16.cont [3/8] 0, 128
        %4440 = vxpose.xlu0.c.b16.cont [4/8] 0, 128
        %4441 = vxpose.xlu0.c.b16.cont [5/8] 0, 128
        %4442 = vxpose.xlu0.c.b16.cont [6/8] 0, 128
        %4443 = vxpose.xlu0.c.b16.cont [7/8] 0, 128
        %4444 = vxpose.xlu0.c.b16.end [8/8] 0, 128
        %v4445 = vpop.trf.xlu0
        %v4446 = vpop.trf.xlu0
        %v4447 = vpop.trf.xlu0
        %v4448 = vpop.trf.xlu0
        %v4449 = vpop.trf.xlu0
        %v4450 = vpop.trf.xlu0
        %v4451 = vpop.trf.xlu0
        %v4452 = vpop.trf.xlu0
        %4453 = vxpose.xlu0.c.b16.start [1/8] %v4272, 128
        %4454 = vxpose.xlu0.c.b16.cont [2/8] 0, 128
        %4455 = vxpose.xlu0.c.b16.cont [3/8] 0, 128
        %4456 = vxpose.xlu0.c.b16.cont [4/8] 0, 128
        %4457 = vxpose.xlu0.c.b16.cont [5/8] 0, 128
        %4458 = vxpose.xlu0.c.b16.cont [6/8] 0, 128
        %4459 = vxpose.xlu0.c.b16.cont [7/8] 0, 128
        %4460 = vxpose.xlu0.c.b16.end [8/8] 0, 128
        %v4461 = vpop.trf.xlu0
        %v4462 = vpop.trf.xlu0
        %v4463 = vpop.trf.xlu0
        %v4464 = vpop.trf.xlu0
        %v4465 = vpop.trf.xlu0
        %v4466 = vpop.trf.xlu0
        %v4467 = vpop.trf.xlu0
        %v4468 = vpop.trf.xlu0
        %4469 = vxpose.xlu0.c.b16.start [1/8] %v4273, 128
        %4470 = vxpose.xlu0.c.b16.cont [2/8] 0, 128
        %4471 = vxpose.xlu0.c.b16.cont [3/8] 0, 128
        %4472 = vxpose.xlu0.c.b16.cont [4/8] 0, 128
        %4473 = vxpose.xlu0.c.b16.cont [5/8] 0, 128
        %4474 = vxpose.xlu0.c.b16.cont [6/8] 0, 128
        %4475 = vxpose.xlu0.c.b16.cont [7/8] 0, 128
        %4476 = vxpose.xlu0.c.b16.end [8/8] 0, 128
        %v4477 = vpop.trf.xlu0
        %v4478 = vpop.trf.xlu0
        %v4479 = vpop.trf.xlu0
        %v4480 = vpop.trf.xlu0
        %v4481 = vpop.trf.xlu0
        %v4482 = vpop.trf.xlu0
        %v4483 = vpop.trf.xlu0
        %v4484 = vpop.trf.xlu0
        %4485 = vxpose.xlu0.c.b16.start [1/8] %v4274, 128
        %4486 = vxpose.xlu0.c.b16.cont [2/8] 0, 128
        %4487 = vxpose.xlu0.c.b16.cont [3/8] 0, 128
        %4488 = vxpose.xlu0.c.b16.cont [4/8] 0, 128
        %4489 = vxpose.xlu0.c.b16.cont [5/8] 0, 128
        %4490 = vxpose.xlu0.c.b16.cont [6/8] 0, 128
        %4491 = vxpose.xlu0.c.b16.cont [7/8] 0, 128
        %4492 = vxpose.xlu0.c.b16.end [8/8] 0, 128
        %v4493 = vpop.trf.xlu0
        %v4494 = vpop.trf.xlu0
        %v4495 = vpop.trf.xlu0
        %v4496 = vpop.trf.xlu0
        %v4497 = vpop.trf.xlu0
        %v4498 = vpop.trf.xlu0
        %v4499 = vpop.trf.xlu0
        %v4500 = vpop.trf.xlu0
        %4501 = vxpose.xlu0.c.b16.start [1/8] %v4275, 128
        %4502 = vxpose.xlu0.c.b16.cont [2/8] 0, 128
        %4503 = vxpose.xlu0.c.b16.cont [3/8] 0, 128
        %4504 = vxpose.xlu0.c.b16.cont [4/8] 0, 128
        %4505 = vxpose.xlu0.c.b16.cont [5/8] 0, 128
        %4506 = vxpose.xlu0.c.b16.cont [6/8] 0, 128
        %4507 = vxpose.xlu0.c.b16.cont [7/8] 0, 128
        %4508 = vxpose.xlu0.c.b16.end [8/8] 0, 128
        %v4509 = vpop.trf.xlu0
        %v4510 = vpop.trf.xlu0
        %v4511 = vpop.trf.xlu0
        %v4512 = vpop.trf.xlu0
        %v4513 = vpop.trf.xlu0
        %v4514 = vpop.trf.xlu0
        %v4515 = vpop.trf.xlu0
        %v4516 = vpop.trf.xlu0
        %4517 = vxpose.xlu0.c.b16.start [1/8] %v4276, 128
        %4518 = vxpose.xlu0.c.b16.cont [2/8] 0, 128
        %4519 = vxpose.xlu0.c.b16.cont [3/8] 0, 128
        %4520 = vxpose.xlu0.c.b16.cont [4/8] 0, 128
        %4521 = vxpose.xlu0.c.b16.cont [5/8] 0, 128
        %4522 = vxpose.xlu0.c.b16.cont [6/8] 0, 128
        %4523 = vxpose.xlu0.c.b16.cont [7/8] 0, 128
        %4524 = vxpose.xlu0.c.b16.end [8/8] 0, 128
        %v4525 = vpop.trf.xlu0
        %v4526 = vpop.trf.xlu0
        %v4527 = vpop.trf.xlu0
        %v4528 = vpop.trf.xlu0
        %v4529 = vpop.trf.xlu0
        %v4530 = vpop.trf.xlu0
        %v4531 = vpop.trf.xlu0
        %v4532 = vpop.trf.xlu0
        %v4533 = vrot.slane %v4477, 4
        %v4534 = vsel %vm972, %v4533, %v4413
        %v4536 = vunpack.c.l.s4 1983009808
        %v4537 = vunpack.c.0.s8 %v4536
        %v4538 = vperm.slane %v4534, %v4537
        %v4539 = vrot.slane %v4509, 4
        %v4540 = vsel %vm972, %v4539, %v4445
        %v4542 = vunpack.c.l.s4 1983009808
        %v4543 = vunpack.c.0.s8 %v4542
        %v4544 = vperm.slane %v4540, %v4543
        %v4545 = vrot.slane %v4544, 4
        %v4546 = vsel %vm972, %v4545, %v4538
        %v4547 = vrot.slane %v4538, 4
        %v4548 = vsel %vm972, %v4544, %v4547
        %v4550 = vunpack.c.l.s4 1934713408
        %v4551 = vunpack.c.0.s8 %v4550
        %v4552 = vperm.slane %v4546, %v4551
        %v4554 = vunpack.c.l.s4 1934713408
        %v4555 = vunpack.c.0.s8 %v4554
        %v4556 = vperm.slane %v4548, %v4555
        %v4557 = vrot.slane %v4552, 4
        %v4558 = vsel %vm972, 0, %v4557
        %v4559 = vrot.slane %v4556, 4
        %v4560 = vsel %vm972, 0, %v4559
        %v4561 = vrot.slane %v4493, 4
        %v4562 = vsel %vm972, %v4561, %v4429
        %v4564 = vunpack.c.l.s4 1983009808
        %v4565 = vunpack.c.0.s8 %v4564
        %v4566 = vperm.slane %v4562, %v4565
        %v4567 = vrot.slane %v4525, 4
        %v4568 = vsel %vm972, %v4567, %v4461
        %v4570 = vunpack.c.l.s4 1983009808
        %v4571 = vunpack.c.0.s8 %v4570
        %v4572 = vperm.slane %v4568, %v4571
        %v4573 = vrot.slane %v4572, 4
        %v4574 = vsel %vm972, %v4573, %v4566
        %v4575 = vrot.slane %v4566, 4
        %v4576 = vsel %vm972, %v4572, %v4575
        %v4578 = vunpack.c.l.s4 1934713408
        %v4579 = vunpack.c.0.s8 %v4578
        %v4580 = vperm.slane %v4574, %v4579
        %v4582 = vunpack.c.l.s4 1934713408
        %v4583 = vunpack.c.0.s8 %v4582
        %v4584 = vperm.slane %v4576, %v4583
        %v4585 = vrot.slane %v4580, 4
        %v4586 = vsel %vm972, 0, %v4585
        %v4587 = vrot.slane %v4584, 4
        %v4588 = vsel %vm972, 0, %v4587
        %v4591 = vpack.i.b16 %v4580, %v4552
        %v4593 = vshrl.u32 %v4552, 16
        %v4594 = vshrl.u32 %v4580, 16
        %v4595 = vpack.i.b16 %v4594, %v4593
        %v4599 = vpack.i.b16 %v4586, %v4558
        %v4601 = vshrl.u32 %v4558, 16
        %v4602 = vshrl.u32 %v4586, 16
        %v4603 = vpack.i.b16 %v4602, %v4601
        %v4607 = vpack.i.b16 %v4584, %v4556
        %v4609 = vshrl.u32 %v4556, 16
        %v4610 = vshrl.u32 %v4584, 16
        %v4611 = vpack.i.b16 %v4610, %v4609
        %v4615 = vpack.i.b16 %v4588, %v4560
        %v4617 = vshrl.u32 %v4560, 16
        %v4618 = vshrl.u32 %v4588, 16
        %v4619 = vpack.i.b16 %v4618, %v4617
        %4621 = vxpose.xlu0.c.b16.start [1/8] %v4591, 128
        %4622 = vxpose.xlu0.c.b16.cont [2/8] 0, 128
        %4623 = vxpose.xlu0.c.b16.cont [3/8] 0, 128
        %4624 = vxpose.xlu0.c.b16.cont [4/8] 0, 128
        %4625 = vxpose.xlu0.c.b16.cont [5/8] 0, 128
        %4626 = vxpose.xlu0.c.b16.cont [6/8] 0, 128
        %4627 = vxpose.xlu0.c.b16.cont [7/8] 0, 128
        %4628 = vxpose.xlu0.c.b16.end [8/8] 0, 128
        %v4629 = vpop.trf.xlu0
        %v4630 = vpop.trf.xlu0
        %v4631 = vpop.trf.xlu0
        %v4632 = vpop.trf.xlu0
        %v4633 = vpop.trf.xlu0
        %v4634 = vpop.trf.xlu0
        %v4635 = vpop.trf.xlu0
        %v4636 = vpop.trf.xlu0
        %4637 = vxpose.xlu0.c.b16.start [1/8] %v4595, 128
        %4638 = vxpose.xlu0.c.b16.cont [2/8] 0, 128
        %4639 = vxpose.xlu0.c.b16.cont [3/8] 0, 128
        %4640 = vxpose.xlu0.c.b16.cont [4/8] 0, 128
        %4641 = vxpose.xlu0.c.b16.cont [5/8] 0, 128
        %4642 = vxpose.xlu0.c.b16.cont [6/8] 0, 128
        %4643 = vxpose.xlu0.c.b16.cont [7/8] 0, 128
        %4644 = vxpose.xlu0.c.b16.end [8/8] 0, 128
        %v4645 = vpop.trf.xlu0
        %v4646 = vpop.trf.xlu0
        %v4647 = vpop.trf.xlu0
        %v4648 = vpop.trf.xlu0
        %v4649 = vpop.trf.xlu0
        %v4650 = vpop.trf.xlu0
        %v4651 = vpop.trf.xlu0
        %v4652 = vpop.trf.xlu0
        %4653 = vxpose.xlu0.c.b16.start [1/8] %v4599, 128
        %4654 = vxpose.xlu0.c.b16.cont [2/8] 0, 128
        %4655 = vxpose.xlu0.c.b16.cont [3/8] 0, 128
        %4656 = vxpose.xlu0.c.b16.cont [4/8] 0, 128
        %4657 = vxpose.xlu0.c.b16.cont [5/8] 0, 128
        %4658 = vxpose.xlu0.c.b16.cont [6/8] 0, 128
        %4659 = vxpose.xlu0.c.b16.cont [7/8] 0, 128
        %4660 = vxpose.xlu0.c.b16.end [8/8] 0, 128
        %v4661 = vpop.trf.xlu0
        %v4662 = vpop.trf.xlu0
        %v4663 = vpop.trf.xlu0
        %v4664 = vpop.trf.xlu0
        %v4665 = vpop.trf.xlu0
        %v4666 = vpop.trf.xlu0
        %v4667 = vpop.trf.xlu0
        %v4668 = vpop.trf.xlu0
        %4669 = vxpose.xlu0.c.b16.start [1/8] %v4603, 128
        %4670 = vxpose.xlu0.c.b16.cont [2/8] 0, 128
        %4671 = vxpose.xlu0.c.b16.cont [3/8] 0, 128
        %4672 = vxpose.xlu0.c.b16.cont [4/8] 0, 128
        %4673 = vxpose.xlu0.c.b16.cont [5/8] 0, 128
        %4674 = vxpose.xlu0.c.b16.cont [6/8] 0, 128
        %4675 = vxpose.xlu0.c.b16.cont [7/8] 0, 128
        %4676 = vxpose.xlu0.c.b16.end [8/8] 0, 128
        %v4677 = vpop.trf.xlu0
        %v4678 = vpop.trf.xlu0
        %v4679 = vpop.trf.xlu0
        %v4680 = vpop.trf.xlu0
        %v4681 = vpop.trf.xlu0
        %v4682 = vpop.trf.xlu0
        %v4683 = vpop.trf.xlu0
        %v4684 = vpop.trf.xlu0
        %4685 = vxpose.xlu0.c.b16.start [1/8] %v4607, 128
        %4686 = vxpose.xlu0.c.b16.cont [2/8] 0, 128
        %4687 = vxpose.xlu0.c.b16.cont [3/8] 0, 128
        %4688 = vxpose.xlu0.c.b16.cont [4/8] 0, 128
        %4689 = vxpose.xlu0.c.b16.cont [5/8] 0, 128
        %4690 = vxpose.xlu0.c.b16.cont [6/8] 0, 128
        %4691 = vxpose.xlu0.c.b16.cont [7/8] 0, 128
        %4692 = vxpose.xlu0.c.b16.end [8/8] 0, 128
        %v4693 = vpop.trf.xlu0
        %v4694 = vpop.trf.xlu0
        %v4695 = vpop.trf.xlu0
        %v4696 = vpop.trf.xlu0
        %v4697 = vpop.trf.xlu0
        %v4698 = vpop.trf.xlu0
        %v4699 = vpop.trf.xlu0
        %v4700 = vpop.trf.xlu0
        %4701 = vxpose.xlu0.c.b16.start [1/8] %v4611, 128
        %4702 = vxpose.xlu0.c.b16.cont [2/8] 0, 128
        %4703 = vxpose.xlu0.c.b16.cont [3/8] 0, 128
        %4704 = vxpose.xlu0.c.b16.cont [4/8] 0, 128
        %4705 = vxpose.xlu0.c.b16.cont [5/8] 0, 128
        %4706 = vxpose.xlu0.c.b16.cont [6/8] 0, 128
        %4707 = vxpose.xlu0.c.b16.cont [7/8] 0, 128
        %4708 = vxpose.xlu0.c.b16.end [8/8] 0, 128
        %v4709 = vpop.trf.xlu0
        %v4710 = vpop.trf.xlu0
        %v4711 = vpop.trf.xlu0
        %v4712 = vpop.trf.xlu0
        %v4713 = vpop.trf.xlu0
        %v4714 = vpop.trf.xlu0
        %v4715 = vpop.trf.xlu0
        %v4716 = vpop.trf.xlu0
        %4717 = vxpose.xlu0.c.b16.start [1/8] %v4615, 128
        %4718 = vxpose.xlu0.c.b16.cont [2/8] 0, 128
        %4719 = vxpose.xlu0.c.b16.cont [3/8] 0, 128
        %4720 = vxpose.xlu0.c.b16.cont [4/8] 0, 128
        %4721 = vxpose.xlu0.c.b16.cont [5/8] 0, 128
        %4722 = vxpose.xlu0.c.b16.cont [6/8] 0, 128
        %4723 = vxpose.xlu0.c.b16.cont [7/8] 0, 128
        %4724 = vxpose.xlu0.c.b16.end [8/8] 0, 128
        %v4725 = vpop.trf.xlu0
        %v4726 = vpop.trf.xlu0
        %v4727 = vpop.trf.xlu0
        %v4728 = vpop.trf.xlu0
        %v4729 = vpop.trf.xlu0
        %v4730 = vpop.trf.xlu0
        %v4731 = vpop.trf.xlu0
        %v4732 = vpop.trf.xlu0
        %4733 = vxpose.xlu0.c.b16.start [1/8] %v4619, 128
        %4734 = vxpose.xlu0.c.b16.cont [2/8] 0, 128
        %4735 = vxpose.xlu0.c.b16.cont [3/8] 0, 128
        %4736 = vxpose.xlu0.c.b16.cont [4/8] 0, 128
        %4737 = vxpose.xlu0.c.b16.cont [5/8] 0, 128
        %4738 = vxpose.xlu0.c.b16.cont [6/8] 0, 128
        %4739 = vxpose.xlu0.c.b16.cont [7/8] 0, 128
        %4740 = vxpose.xlu0.c.b16.end [8/8] 0, 128
        %v4741 = vpop.trf.xlu0
        %v4742 = vpop.trf.xlu0
        %v4743 = vpop.trf.xlu0
        %v4744 = vpop.trf.xlu0
        %v4745 = vpop.trf.xlu0
        %v4746 = vpop.trf.xlu0
        %v4747 = vpop.trf.xlu0
        %v4748 = vpop.trf.xlu0
        %v4749 = vrot.slane %v4693, 4
        %v4750 = vsel %vm972, %v4749, %v4629
        %v4752 = vunpack.c.l.s4 1983009808
        %v4753 = vunpack.c.0.s8 %v4752
        %v4754 = vperm.slane %v4750, %v4753
        %v4755 = vrot.slane %v4725, 4
        %v4756 = vsel %vm972, %v4755, %v4661
        %v4758 = vunpack.c.l.s4 1983009808
        %v4759 = vunpack.c.0.s8 %v4758
        %v4760 = vperm.slane %v4756, %v4759
        %v4761 = vrot.slane %v4760, 4
        %v4762 = vsel %vm972, %v4761, %v4754
        %v4764 = vunpack.c.l.s4 1934713408
        %v4765 = vunpack.c.0.s8 %v4764
        %v4766 = vperm.slane %v4762, %v4765
        %v4767 = vrot.slane %v4766, 4
        %v4768 = vsel %vm972, 0, %v4767
        %v4769 = vrot.slane %v4709, 4
        %v4770 = vsel %vm972, %v4769, %v4645
        %v4772 = vunpack.c.l.s4 1983009808
        %v4773 = vunpack.c.0.s8 %v4772
        %v4774 = vperm.slane %v4770, %v4773
        %v4775 = vrot.slane %v4741, 4
        %v4776 = vsel %vm972, %v4775, %v4677
        %v4778 = vunpack.c.l.s4 1983009808
        %v4779 = vunpack.c.0.s8 %v4778
        %v4780 = vperm.slane %v4776, %v4779
        %v4781 = vrot.slane %v4780, 4
        %v4782 = vsel %vm972, %v4781, %v4774
        %v4784 = vunpack.c.l.s4 1934713408
        %v4785 = vunpack.c.0.s8 %v4784
        %v4786 = vperm.slane %v4782, %v4785
        %v4787 = vrot.slane %v4786, 4
        %v4788 = vsel %vm972, 0, %v4787
        %v4791 = vpack.i.b16 %v4786, %v4766
        %v4792 = vshrl.u32 %v4766, 16
        %v4793 = vshrl.u32 %v4786, 16
        %v4794 = vpack.i.b16 %v4793, %v4792
        %v4797 = vpack.i.b16 %v4788, %v4768
        %v4798 = vshrl.u32 %v4768, 16
        %v4799 = vshrl.u32 %v4788, 16
        %v4800 = vpack.i.b16 %v4799, %v4798
        %v4802 = vsel %vm1420, %v4395, 0
        %v4805 = vsel %vm1424, %v4791, 0
        %4807 = vmatpush.bf16.msra.mxu0 0
        %4808 = vmatpush.bf16.msra.mxu0 0
        %4809 = vmatpush.bf16.msra.mxu0 0
        %4810 = vmatpush.bf16.msra.mxu0 0
        %4811 = vmatpush.bf16.msra.mxu0 0
        %4812 = vmatpush.bf16.msra.mxu0 0
        %4813 = vmatpush.bf16.msra.mxu0 0
        %4814 = vmatpush.bf16.msra.mxu0 %v4805
        %4815 = vmatmul.bf16.gmra.mxu0 %v4802
        %v4816 = vpop.f32.mrf.mxu0
        %v4817 = vadd.f32 %v652, %v4816
        %v4818 = vpop.f32.mrf.mxu0
        %4819 = vdwg.mxu0
        %v4821 = vsel %vm1420, %v4398, 0
        %v4824 = vsel %vm1424, %v4794, 0
        %4826 = vmatpush.bf16.msra.mxu0 0
        %4827 = vmatpush.bf16.msra.mxu0 0
        %4828 = vmatpush.bf16.msra.mxu0 0
        %4829 = vmatpush.bf16.msra.mxu0 0
        %4830 = vmatpush.bf16.msra.mxu0 0
        %4831 = vmatpush.bf16.msra.mxu0 0
        %4832 = vmatpush.bf16.msra.mxu0 0
        %4833 = vmatpush.bf16.msra.mxu0 %v4824
        %4834 = vmatmul.bf16.gmra.mxu0 %v4821
        %v4835 = vpop.f32.mrf.mxu0
        %v4836 = vadd.f32 %v652, %v4835
        %v4837 = vpop.f32.mrf.mxu0
        %4838 = vdwg.mxu0
        %v4840 = vsel %vm1420, %v4401, 0
        %v4843 = vsel %vm1424, %v4797, 0
        %4845 = vmatpush.bf16.msra.mxu0 0
        %4846 = vmatpush.bf16.msra.mxu0 0
        %4847 = vmatpush.bf16.msra.mxu0 0
        %4848 = vmatpush.bf16.msra.mxu0 0
        %4849 = vmatpush.bf16.msra.mxu0 0
        %4850 = vmatpush.bf16.msra.mxu0 0
        %4851 = vmatpush.bf16.msra.mxu0 0
        %4852 = vmatpush.bf16.msra.mxu0 %v4843
        %4853 = vmatmul.bf16.gmra.mxu0 %v4840
        %v4854 = vpop.f32.mrf.mxu0
        %v4855 = vadd.f32 %v652, %v4854
        %v4856 = vpop.f32.mrf.mxu0
        %4857 = vdwg.mxu0
        %v4859 = vsel %vm1420, %v4404, 0
        %v4862 = vsel %vm1424, %v4800, 0
        %4864 = vmatpush.bf16.msra.mxu0 0
        %4865 = vmatpush.bf16.msra.mxu0 0
        %4866 = vmatpush.bf16.msra.mxu0 0
        %4867 = vmatpush.bf16.msra.mxu0 0
        %4868 = vmatpush.bf16.msra.mxu0 0
        %4869 = vmatpush.bf16.msra.mxu0 0
        %4870 = vmatpush.bf16.msra.mxu0 0
        %4871 = vmatpush.bf16.msra.mxu0 %v4862
        %4872 = vmatmul.bf16.gmra.mxu0 %v4859
        %v4873 = vpop.f32.mrf.mxu0
        %v4874 = vadd.f32 %v652, %v4873
        %v4875 = vpop.f32.mrf.mxu0
        %4876 = vdwg.mxu0
        %v4877 = vsel %vm1420, %v4817, -inf
        %4878 = vmax.xlane.f32.xlu0 %v4877
        %v4879 = vpop.xlane.xlu0 %4878
        %v4880 = vsel %vm1420, %v4836, -inf
        %4881 = vmax.xlane.f32.xlu0 %v4880
        %v4882 = vpop.xlane.xlu0 %4881
        %v4883 = vsel %vm1420, %v4855, -inf
        %4884 = vmax.xlane.f32.xlu0 %v4883
        %v4885 = vpop.xlane.xlu0 %4884
        %v4886 = vsel %vm1420, %v4874, -inf
        %4887 = vmax.xlane.f32.xlu0 %v4886
        %v4888 = vpop.xlane.xlu0 %4887
        %v4889 = vsub.f32 %v4817, %v4879
        %v4890 = vsub.f32 %v4836, %v4882
        %v4891 = vsub.f32 %v4855, %v4885
        %v4892 = vsub.f32 %v4874, %v4888
        %v4893 = vmul.f32 %v4889, 1.442695
        %v4894 = vpow.pop %v4893
        %v4895 = vmul.f32 %v4890, 1.442695
        %v4896 = vpow.pop %v4895
        %v4897 = vmul.f32 %v4891, 1.442695
        %v4898 = vpow.pop %v4897
        %v4899 = vmul.f32 %v4892, 1.442695
        %v4900 = vpow.pop %v4899
        %v4901 = vsel %vm1420, %v4894, 0.0
        %4902 = vadd.xlane.f32.xlu0 %v4901
        %v4903 = vpop.xlane.xlu0 %4902
        %v4904 = vsel %vm1420, %v4896, 0.0
        %4905 = vadd.xlane.f32.xlu0 %v4904
        %v4906 = vpop.xlane.xlu0 %4905
        %v4907 = vsel %vm1420, %v4898, 0.0
        %4908 = vadd.xlane.f32.xlu0 %v4907
        %v4909 = vpop.xlane.xlu0 %4908
        %v4910 = vsel %vm1420, %v4900, 0.0
        %4911 = vadd.xlane.f32.xlu0 %v4910
        %v4912 = vpop.xlane.xlu0 %4911
        %v4913 = vrcp.pop %v4903
        %v4914 = vrcp.pop %v4906
        %v4915 = vrcp.pop %v4909
        %v4916 = vrcp.pop %v4912
        %v4917 = vmul.f32 %v4894, %v4913
        %v4918 = vmul.f32 %v4896, %v4914
        %v4919 = vmul.f32 %v4898, %v4915
        %v4920 = vmul.f32 %v4900, %v4916
        %v4921 = vpack.c.bf16 %v4917, %v4917
        %v4922 = vpack.c.bf16 %v4918, %v4918
        %v4923 = vpack.c.bf16 %v4919, %v4919
        %v4924 = vpack.c.bf16 %v4920, %v4920
        %4925 = vxpose.xlu0.c.b16.start [1/8] %v4345, 128
        %4926 = vxpose.xlu0.c.b16.cont [2/8] 0, 128
        %4927 = vxpose.xlu0.c.b16.cont [3/8] 0, 128
        %4928 = vxpose.xlu0.c.b16.cont [4/8] 0, 128
        %4929 = vxpose.xlu0.c.b16.cont [5/8] 0, 128
        %4930 = vxpose.xlu0.c.b16.cont [6/8] 0, 128
        %4931 = vxpose.xlu0.c.b16.cont [7/8] 0, 128
        %4932 = vxpose.xlu0.c.b16.end [8/8] 0, 128
        %v4933 = vpop.trf.xlu0
        %v4934 = vpop.trf.xlu0
        %v4935 = vpop.trf.xlu0
        %v4936 = vpop.trf.xlu0
        %v4937 = vpop.trf.xlu0
        %v4938 = vpop.trf.xlu0
        %v4939 = vpop.trf.xlu0
        %v4940 = vpop.trf.xlu0
        %4941 = vxpose.xlu0.c.b16.start [1/8] %v4346, 128
        %4942 = vxpose.xlu0.c.b16.cont [2/8] 0, 128
        %4943 = vxpose.xlu0.c.b16.cont [3/8] 0, 128
        %4944 = vxpose.xlu0.c.b16.cont [4/8] 0, 128
        %4945 = vxpose.xlu0.c.b16.cont [5/8] 0, 128
        %4946 = vxpose.xlu0.c.b16.cont [6/8] 0, 128
        %4947 = vxpose.xlu0.c.b16.cont [7/8] 0, 128
        %4948 = vxpose.xlu0.c.b16.end [8/8] 0, 128
        %v4949 = vpop.trf.xlu0
        %v4950 = vpop.trf.xlu0
        %v4951 = vpop.trf.xlu0
        %v4952 = vpop.trf.xlu0
        %v4953 = vpop.trf.xlu0
        %v4954 = vpop.trf.xlu0
        %v4955 = vpop.trf.xlu0
        %v4956 = vpop.trf.xlu0
        %4957 = vxpose.xlu0.c.b16.start [1/8] %v4347, 128
        %4958 = vxpose.xlu0.c.b16.cont [2/8] 0, 128
        %4959 = vxpose.xlu0.c.b16.cont [3/8] 0, 128
        %4960 = vxpose.xlu0.c.b16.cont [4/8] 0, 128
        %4961 = vxpose.xlu0.c.b16.cont [5/8] 0, 128
        %4962 = vxpose.xlu0.c.b16.cont [6/8] 0, 128
        %4963 = vxpose.xlu0.c.b16.cont [7/8] 0, 128
        %4964 = vxpose.xlu0.c.b16.end [8/8] 0, 128
        %v4965 = vpop.trf.xlu0
        %v4966 = vpop.trf.xlu0
        %v4967 = vpop.trf.xlu0
        %v4968 = vpop.trf.xlu0
        %v4969 = vpop.trf.xlu0
        %v4970 = vpop.trf.xlu0
        %v4971 = vpop.trf.xlu0
        %v4972 = vpop.trf.xlu0
        %4973 = vxpose.xlu0.c.b16.start [1/8] %v4348, 128
        %4974 = vxpose.xlu0.c.b16.cont [2/8] 0, 128
        %4975 = vxpose.xlu0.c.b16.cont [3/8] 0, 128
        %4976 = vxpose.xlu0.c.b16.cont [4/8] 0, 128
        %4977 = vxpose.xlu0.c.b16.cont [5/8] 0, 128
        %4978 = vxpose.xlu0.c.b16.cont [6/8] 0, 128
        %4979 = vxpose.xlu0.c.b16.cont [7/8] 0, 128
        %4980 = vxpose.xlu0.c.b16.end [8/8] 0, 128
        %v4981 = vpop.trf.xlu0
        %v4982 = vpop.trf.xlu0
        %v4983 = vpop.trf.xlu0
        %v4984 = vpop.trf.xlu0
        %v4985 = vpop.trf.xlu0
        %v4986 = vpop.trf.xlu0
        %v4987 = vpop.trf.xlu0
        %v4988 = vpop.trf.xlu0
        %4989 = vxpose.xlu0.c.b16.start [1/8] %v4349, 128
        %4990 = vxpose.xlu0.c.b16.cont [2/8] 0, 128
        %4991 = vxpose.xlu0.c.b16.cont [3/8] 0, 128
        %4992 = vxpose.xlu0.c.b16.cont [4/8] 0, 128
        %4993 = vxpose.xlu0.c.b16.cont [5/8] 0, 128
        %4994 = vxpose.xlu0.c.b16.cont [6/8] 0, 128
        %4995 = vxpose.xlu0.c.b16.cont [7/8] 0, 128
        %4996 = vxpose.xlu0.c.b16.end [8/8] 0, 128
        %v4997 = vpop.trf.xlu0
        %v4998 = vpop.trf.xlu0
        %v4999 = vpop.trf.xlu0
        %v5000 = vpop.trf.xlu0
        %v5001 = vpop.trf.xlu0
        %v5002 = vpop.trf.xlu0
        %v5003 = vpop.trf.xlu0
        %v5004 = vpop.trf.xlu0
        %5005 = vxpose.xlu0.c.b16.start [1/8] %v4350, 128
        %5006 = vxpose.xlu0.c.b16.cont [2/8] 0, 128
        %5007 = vxpose.xlu0.c.b16.cont [3/8] 0, 128
        %5008 = vxpose.xlu0.c.b16.cont [4/8] 0, 128
        %5009 = vxpose.xlu0.c.b16.cont [5/8] 0, 128
        %5010 = vxpose.xlu0.c.b16.cont [6/8] 0, 128
        %5011 = vxpose.xlu0.c.b16.cont [7/8] 0, 128
        %5012 = vxpose.xlu0.c.b16.end [8/8] 0, 128
        %v5013 = vpop.trf.xlu0
        %v5014 = vpop.trf.xlu0
        %v5015 = vpop.trf.xlu0
        %v5016 = vpop.trf.xlu0
        %v5017 = vpop.trf.xlu0
        %v5018 = vpop.trf.xlu0
        %v5019 = vpop.trf.xlu0
        %v5020 = vpop.trf.xlu0
        %5021 = vxpose.xlu0.c.b16.start [1/8] %v4351, 128
        %5022 = vxpose.xlu0.c.b16.cont [2/8] 0, 128
        %5023 = vxpose.xlu0.c.b16.cont [3/8] 0, 128
        %5024 = vxpose.xlu0.c.b16.cont [4/8] 0, 128
        %5025 = vxpose.xlu0.c.b16.cont [5/8] 0, 128
        %5026 = vxpose.xlu0.c.b16.cont [6/8] 0, 128
        %5027 = vxpose.xlu0.c.b16.cont [7/8] 0, 128
        %5028 = vxpose.xlu0.c.b16.end [8/8] 0, 128
        %v5029 = vpop.trf.xlu0
        %v5030 = vpop.trf.xlu0
        %v5031 = vpop.trf.xlu0
        %v5032 = vpop.trf.xlu0
        %v5033 = vpop.trf.xlu0
        %v5034 = vpop.trf.xlu0
        %v5035 = vpop.trf.xlu0
        %v5036 = vpop.trf.xlu0
        %5037 = vxpose.xlu0.c.b16.start [1/8] %v4352, 128
        %5038 = vxpose.xlu0.c.b16.cont [2/8] 0, 128
        %5039 = vxpose.xlu0.c.b16.cont [3/8] 0, 128
        %5040 = vxpose.xlu0.c.b16.cont [4/8] 0, 128
        %5041 = vxpose.xlu0.c.b16.cont [5/8] 0, 128
        %5042 = vxpose.xlu0.c.b16.cont [6/8] 0, 128
        %5043 = vxpose.xlu0.c.b16.cont [7/8] 0, 128
        %5044 = vxpose.xlu0.c.b16.end [8/8] 0, 128
        %v5045 = vpop.trf.xlu0
        %v5046 = vpop.trf.xlu0
        %v5047 = vpop.trf.xlu0
        %v5048 = vpop.trf.xlu0
        %v5049 = vpop.trf.xlu0
        %v5050 = vpop.trf.xlu0
        %v5051 = vpop.trf.xlu0
        %v5052 = vpop.trf.xlu0
        %v5053 = vrot.slane %v4997, 4
        %v5054 = vsel %vm972, %v5053, %v4933
        %v5056 = vunpack.c.l.s4 1983009808
        %v5057 = vunpack.c.0.s8 %v5056
        %v5058 = vperm.slane %v5054, %v5057
        %v5059 = vrot.slane %v5029, 4
        %v5060 = vsel %vm972, %v5059, %v4965
        %v5062 = vunpack.c.l.s4 1983009808
        %v5063 = vunpack.c.0.s8 %v5062
        %v5064 = vperm.slane %v5060, %v5063
        %v5065 = vrot.slane %v5064, 4
        %v5066 = vsel %vm972, %v5065, %v5058
        %v5067 = vrot.slane %v5058, 4
        %v5068 = vsel %vm972, %v5064, %v5067
        %v5070 = vunpack.c.l.s4 1934713408
        %v5071 = vunpack.c.0.s8 %v5070
        %v5072 = vperm.slane %v5066, %v5071
        %v5074 = vunpack.c.l.s4 1934713408
        %v5075 = vunpack.c.0.s8 %v5074
        %v5076 = vperm.slane %v5068, %v5075
        %v5077 = vrot.slane %v5072, 4
        %v5078 = vsel %vm972, 0, %v5077
        %v5079 = vrot.slane %v5076, 4
        %v5080 = vsel %vm972, 0, %v5079
        %v5081 = vrot.slane %v5013, 4
        %v5082 = vsel %vm972, %v5081, %v4949
        %v5084 = vunpack.c.l.s4 1983009808
        %v5085 = vunpack.c.0.s8 %v5084
        %v5086 = vperm.slane %v5082, %v5085
        %v5087 = vrot.slane %v5045, 4
        %v5088 = vsel %vm972, %v5087, %v4981
        %v5090 = vunpack.c.l.s4 1983009808
        %v5091 = vunpack.c.0.s8 %v5090
        %v5092 = vperm.slane %v5088, %v5091
        %v5093 = vrot.slane %v5092, 4
        %v5094 = vsel %vm972, %v5093, %v5086
        %v5095 = vrot.slane %v5086, 4
        %v5096 = vsel %vm972, %v5092, %v5095
        %v5098 = vunpack.c.l.s4 1934713408
        %v5099 = vunpack.c.0.s8 %v5098
        %v5100 = vperm.slane %v5094, %v5099
        %v5102 = vunpack.c.l.s4 1934713408
        %v5103 = vunpack.c.0.s8 %v5102
        %v5104 = vperm.slane %v5096, %v5103
        %v5105 = vrot.slane %v5100, 4
        %v5106 = vsel %vm972, 0, %v5105
        %v5107 = vrot.slane %v5104, 4
        %v5108 = vsel %vm972, 0, %v5107
        %v5111 = vpack.i.b16 %v5100, %v5072
        %v5113 = vshrl.u32 %v5072, 16
        %v5114 = vshrl.u32 %v5100, 16
        %v5115 = vpack.i.b16 %v5114, %v5113
        %v5119 = vpack.i.b16 %v5106, %v5078
        %v5121 = vshrl.u32 %v5078, 16
        %v5122 = vshrl.u32 %v5106, 16
        %v5123 = vpack.i.b16 %v5122, %v5121
        %v5127 = vpack.i.b16 %v5104, %v5076
        %v5129 = vshrl.u32 %v5076, 16
        %v5130 = vshrl.u32 %v5104, 16
        %v5131 = vpack.i.b16 %v5130, %v5129
        %v5135 = vpack.i.b16 %v5108, %v5080
        %v5137 = vshrl.u32 %v5080, 16
        %v5138 = vshrl.u32 %v5108, 16
        %v5139 = vpack.i.b16 %v5138, %v5137
        %5141 = vxpose.xlu0.c.b16.start [1/8] %v5111, 128
        %5142 = vxpose.xlu0.c.b16.cont [2/8] 0, 128
        %5143 = vxpose.xlu0.c.b16.cont [3/8] 0, 128
        %5144 = vxpose.xlu0.c.b16.cont [4/8] 0, 128
        %5145 = vxpose.xlu0.c.b16.cont [5/8] 0, 128
        %5146 = vxpose.xlu0.c.b16.cont [6/8] 0, 128
        %5147 = vxpose.xlu0.c.b16.cont [7/8] 0, 128
        %5148 = vxpose.xlu0.c.b16.end [8/8] 0, 128
        %v5149 = vpop.trf.xlu0
        %v5150 = vpop.trf.xlu0
        %v5151 = vpop.trf.xlu0
        %v5152 = vpop.trf.xlu0
        %v5153 = vpop.trf.xlu0
        %v5154 = vpop.trf.xlu0
        %v5155 = vpop.trf.xlu0
        %v5156 = vpop.trf.xlu0
        %5157 = vxpose.xlu0.c.b16.start [1/8] %v5115, 128
        %5158 = vxpose.xlu0.c.b16.cont [2/8] 0, 128
        %5159 = vxpose.xlu0.c.b16.cont [3/8] 0, 128
        %5160 = vxpose.xlu0.c.b16.cont [4/8] 0, 128
        %5161 = vxpose.xlu0.c.b16.cont [5/8] 0, 128
        %5162 = vxpose.xlu0.c.b16.cont [6/8] 0, 128
        %5163 = vxpose.xlu0.c.b16.cont [7/8] 0, 128
        %5164 = vxpose.xlu0.c.b16.end [8/8] 0, 128
        %v5165 = vpop.trf.xlu0
        %v5166 = vpop.trf.xlu0
        %v5167 = vpop.trf.xlu0
        %v5168 = vpop.trf.xlu0
        %v5169 = vpop.trf.xlu0
        %v5170 = vpop.trf.xlu0
        %v5171 = vpop.trf.xlu0
        %v5172 = vpop.trf.xlu0
        %5173 = vxpose.xlu0.c.b16.start [1/8] %v5119, 128
        %5174 = vxpose.xlu0.c.b16.cont [2/8] 0, 128
        %5175 = vxpose.xlu0.c.b16.cont [3/8] 0, 128
        %5176 = vxpose.xlu0.c.b16.cont [4/8] 0, 128
        %5177 = vxpose.xlu0.c.b16.cont [5/8] 0, 128
        %5178 = vxpose.xlu0.c.b16.cont [6/8] 0, 128
        %5179 = vxpose.xlu0.c.b16.cont [7/8] 0, 128
        %5180 = vxpose.xlu0.c.b16.end [8/8] 0, 128
        %v5181 = vpop.trf.xlu0
        %v5182 = vpop.trf.xlu0
        %v5183 = vpop.trf.xlu0
        %v5184 = vpop.trf.xlu0
        %v5185 = vpop.trf.xlu0
        %v5186 = vpop.trf.xlu0
        %v5187 = vpop.trf.xlu0
        %v5188 = vpop.trf.xlu0
        %5189 = vxpose.xlu0.c.b16.start [1/8] %v5123, 128
        %5190 = vxpose.xlu0.c.b16.cont [2/8] 0, 128
        %5191 = vxpose.xlu0.c.b16.cont [3/8] 0, 128
        %5192 = vxpose.xlu0.c.b16.cont [4/8] 0, 128
        %5193 = vxpose.xlu0.c.b16.cont [5/8] 0, 128
        %5194 = vxpose.xlu0.c.b16.cont [6/8] 0, 128
        %5195 = vxpose.xlu0.c.b16.cont [7/8] 0, 128
        %5196 = vxpose.xlu0.c.b16.end [8/8] 0, 128
        %v5197 = vpop.trf.xlu0
        %v5198 = vpop.trf.xlu0
        %v5199 = vpop.trf.xlu0
        %v5200 = vpop.trf.xlu0
        %v5201 = vpop.trf.xlu0
        %v5202 = vpop.trf.xlu0
        %v5203 = vpop.trf.xlu0
        %v5204 = vpop.trf.xlu0
        %5205 = vxpose.xlu0.c.b16.start [1/8] %v5127, 128
        %5206 = vxpose.xlu0.c.b16.cont [2/8] 0, 128
        %5207 = vxpose.xlu0.c.b16.cont [3/8] 0, 128
        %5208 = vxpose.xlu0.c.b16.cont [4/8] 0, 128
        %5209 = vxpose.xlu0.c.b16.cont [5/8] 0, 128
        %5210 = vxpose.xlu0.c.b16.cont [6/8] 0, 128
        %5211 = vxpose.xlu0.c.b16.cont [7/8] 0, 128
        %5212 = vxpose.xlu0.c.b16.end [8/8] 0, 128
        %v5213 = vpop.trf.xlu0
        %v5214 = vpop.trf.xlu0
        %v5215 = vpop.trf.xlu0
        %v5216 = vpop.trf.xlu0
        %v5217 = vpop.trf.xlu0
        %v5218 = vpop.trf.xlu0
        %v5219 = vpop.trf.xlu0
        %v5220 = vpop.trf.xlu0
        %5221 = vxpose.xlu0.c.b16.start [1/8] %v5131, 128
        %5222 = vxpose.xlu0.c.b16.cont [2/8] 0, 128
        %5223 = vxpose.xlu0.c.b16.cont [3/8] 0, 128
        %5224 = vxpose.xlu0.c.b16.cont [4/8] 0, 128
        %5225 = vxpose.xlu0.c.b16.cont [5/8] 0, 128
        %5226 = vxpose.xlu0.c.b16.cont [6/8] 0, 128
        %5227 = vxpose.xlu0.c.b16.cont [7/8] 0, 128
        %5228 = vxpose.xlu0.c.b16.end [8/8] 0, 128
        %v5229 = vpop.trf.xlu0
        %v5230 = vpop.trf.xlu0
        %v5231 = vpop.trf.xlu0
        %v5232 = vpop.trf.xlu0
        %v5233 = vpop.trf.xlu0
        %v5234 = vpop.trf.xlu0
        %v5235 = vpop.trf.xlu0
        %v5236 = vpop.trf.xlu0
        %5237 = vxpose.xlu0.c.b16.start [1/8] %v5135, 128
        %5238 = vxpose.xlu0.c.b16.cont [2/8] 0, 128
        %5239 = vxpose.xlu0.c.b16.cont [3/8] 0, 128
        %5240 = vxpose.xlu0.c.b16.cont [4/8] 0, 128
        %5241 = vxpose.xlu0.c.b16.cont [5/8] 0, 128
        %5242 = vxpose.xlu0.c.b16.cont [6/8] 0, 128
        %5243 = vxpose.xlu0.c.b16.cont [7/8] 0, 128
        %5244 = vxpose.xlu0.c.b16.end [8/8] 0, 128
        %v5245 = vpop.trf.xlu0
        %v5246 = vpop.trf.xlu0
        %v5247 = vpop.trf.xlu0
        %v5248 = vpop.trf.xlu0
        %v5249 = vpop.trf.xlu0
        %v5250 = vpop.trf.xlu0
        %v5251 = vpop.trf.xlu0
        %v5252 = vpop.trf.xlu0
        %5253 = vxpose.xlu0.c.b16.start [1/8] %v5139, 128
        %5254 = vxpose.xlu0.c.b16.cont [2/8] 0, 128
        %5255 = vxpose.xlu0.c.b16.cont [3/8] 0, 128
        %5256 = vxpose.xlu0.c.b16.cont [4/8] 0, 128
        %5257 = vxpose.xlu0.c.b16.cont [5/8] 0, 128
        %5258 = vxpose.xlu0.c.b16.cont [6/8] 0, 128
        %5259 = vxpose.xlu0.c.b16.cont [7/8] 0, 128
        %5260 = vxpose.xlu0.c.b16.end [8/8] 0, 128
        %v5261 = vpop.trf.xlu0
        %v5262 = vpop.trf.xlu0
        %v5263 = vpop.trf.xlu0
        %v5264 = vpop.trf.xlu0
        %v5265 = vpop.trf.xlu0
        %v5266 = vpop.trf.xlu0
        %v5267 = vpop.trf.xlu0
        %v5268 = vpop.trf.xlu0
        %v5269 = vrot.slane %v5213, 4
        %v5270 = vsel %vm972, %v5269, %v5149
        %v5272 = vunpack.c.l.s4 1983009808
        %v5273 = vunpack.c.0.s8 %v5272
        %v5274 = vperm.slane %v5270, %v5273
        %v5275 = vrot.slane %v5245, 4
        %v5276 = vsel %vm972, %v5275, %v5181
        %v5278 = vunpack.c.l.s4 1983009808
        %v5279 = vunpack.c.0.s8 %v5278
        %v5280 = vperm.slane %v5276, %v5279
        %v5281 = vrot.slane %v5280, 4
        %v5282 = vsel %vm972, %v5281, %v5274
        %v5284 = vunpack.c.l.s4 1934713408
        %v5285 = vunpack.c.0.s8 %v5284
        %v5286 = vperm.slane %v5282, %v5285
        %v5287 = vrot.slane %v5286, 4
        %v5288 = vsel %vm972, 0, %v5287
        %v5289 = vrot.slane %v5229, 4
        %v5290 = vsel %vm972, %v5289, %v5165
        %v5292 = vunpack.c.l.s4 1983009808
        %v5293 = vunpack.c.0.s8 %v5292
        %v5294 = vperm.slane %v5290, %v5293
        %v5295 = vrot.slane %v5261, 4
        %v5296 = vsel %vm972, %v5295, %v5197
        %v5298 = vunpack.c.l.s4 1983009808
        %v5299 = vunpack.c.0.s8 %v5298
        %v5300 = vperm.slane %v5296, %v5299
        %v5301 = vrot.slane %v5300, 4
        %v5302 = vsel %vm972, %v5301, %v5294
        %v5304 = vunpack.c.l.s4 1934713408
        %v5305 = vunpack.c.0.s8 %v5304
        %v5306 = vperm.slane %v5302, %v5305
        %v5307 = vrot.slane %v5306, 4
        %v5308 = vsel %vm972, 0, %v5307
        %v5311 = vpack.i.b16 %v5306, %v5286
        %v5312 = vshrl.u32 %v5286, 16
        %v5313 = vshrl.u32 %v5306, 16
        %v5314 = vpack.i.b16 %v5313, %v5312
        %v5317 = vpack.i.b16 %v5308, %v5288
        %v5318 = vshrl.u32 %v5288, 16
        %v5319 = vshrl.u32 %v5308, 16
        %v5320 = vpack.i.b16 %v5319, %v5318
        %v5322 = vsel %vm1420, %v5311, 0
        %v5325 = vsel %vm1420, %v4921, 0
        %5327 = vmatpush.bf16.xpose.msra.mxu0 0
        %5328 = vmatpush.bf16.xpose.msra.mxu0 0
        %5329 = vmatpush.bf16.xpose.msra.mxu0 0
        %5330 = vmatpush.bf16.xpose.msra.mxu0 0
        %5331 = vmatpush.bf16.xpose.msra.mxu0 0
        %5332 = vmatpush.bf16.xpose.msra.mxu0 0
        %5333 = vmatpush.bf16.xpose.msra.mxu0 0
        %5334 = vmatpush.bf16.xpose.msra.mxu0 %v5325
        %5335 = vmatmul.bf16.gmra.mxu0 %v5322
        %v5336 = vpop.f32.mrf.mxu0
        %v5337 = vadd.f32 0.0, %v5336
        %v5338 = vpop.f32.mrf.mxu0
        %5339 = vdwg.mxu0
        %v5341 = vsel %vm1420, %v5314, 0
        %v5344 = vsel %vm1420, %v4922, 0
        %5346 = vmatpush.bf16.xpose.msra.mxu0 0
        %5347 = vmatpush.bf16.xpose.msra.mxu0 0
        %5348 = vmatpush.bf16.xpose.msra.mxu0 0
        %5349 = vmatpush.bf16.xpose.msra.mxu0 0
        %5350 = vmatpush.bf16.xpose.msra.mxu0 0
        %5351 = vmatpush.bf16.xpose.msra.mxu0 0
        %5352 = vmatpush.bf16.xpose.msra.mxu0 0
        %5353 = vmatpush.bf16.xpose.msra.mxu0 %v5344
        %5354 = vmatmul.bf16.gmra.mxu0 %v5341
        %v5355 = vpop.f32.mrf.mxu0
        %v5356 = vadd.f32 0.0, %v5355
        %v5357 = vpop.f32.mrf.mxu0
        %5358 = vdwg.mxu0
        %v5360 = vsel %vm1420, %v5317, 0
        %v5363 = vsel %vm1420, %v4923, 0
        %5365 = vmatpush.bf16.xpose.msra.mxu0 0
        %5366 = vmatpush.bf16.xpose.msra.mxu0 0
        %5367 = vmatpush.bf16.xpose.msra.mxu0 0
        %5368 = vmatpush.bf16.xpose.msra.mxu0 0
        %5369 = vmatpush.bf16.xpose.msra.mxu0 0
        %5370 = vmatpush.bf16.xpose.msra.mxu0 0
        %5371 = vmatpush.bf16.xpose.msra.mxu0 0
        %5372 = vmatpush.bf16.xpose.msra.mxu0 %v5363
        %5373 = vmatmul.bf16.gmra.mxu0 %v5360
        %v5374 = vpop.f32.mrf.mxu0
        %v5375 = vadd.f32 0.0, %v5374
        %v5376 = vpop.f32.mrf.mxu0
        %5377 = vdwg.mxu0
        %v5379 = vsel %vm1420, %v5320, 0
        %v5382 = vsel %vm1420, %v4924, 0
        %5384 = vmatpush.bf16.xpose.msra.mxu0 0
        %5385 = vmatpush.bf16.xpose.msra.mxu0 0
        %5386 = vmatpush.bf16.xpose.msra.mxu0 0
        %5387 = vmatpush.bf16.xpose.msra.mxu0 0
        %5388 = vmatpush.bf16.xpose.msra.mxu0 0
        %5389 = vmatpush.bf16.xpose.msra.mxu0 0
        %5390 = vmatpush.bf16.xpose.msra.mxu0 0
        %5391 = vmatpush.bf16.xpose.msra.mxu0 %v5382
        %5392 = vmatmul.bf16.gmra.mxu0 %v5379
        %v5393 = vpop.f32.mrf.mxu0
        %v5394 = vadd.f32 0.0, %v5393
        %v5395 = vpop.f32.mrf.mxu0
        %5396 = vdwg.mxu0
        %5397 = vxpose.xlu0.b32.start [1/16] %v5337, 128
        %5398 = vxpose.xlu0.b32.cont [2/16] 0.0, 128
        %5399 = vxpose.xlu0.b32.cont [3/16] 0.0, 128
        %5400 = vxpose.xlu0.b32.cont [4/16] 0.0, 128
        %5401 = vxpose.xlu0.b32.cont [5/16] 0.0, 128
        %5402 = vxpose.xlu0.b32.cont [6/16] 0.0, 128
        %5403 = vxpose.xlu0.b32.cont [7/16] 0.0, 128
        %5404 = vxpose.xlu0.b32.cont [8/16] 0.0, 128
        %5405 = vxpose.xlu0.b32.cont [9/16] 0.0, 128
        %5406 = vxpose.xlu0.b32.cont [10/16] 0.0, 128
        %5407 = vxpose.xlu0.b32.cont [11/16] 0.0, 128
        %5408 = vxpose.xlu0.b32.cont [12/16] 0.0, 128
        %5409 = vxpose.xlu0.b32.cont [13/16] 0.0, 128
        %5410 = vxpose.xlu0.b32.cont [14/16] 0.0, 128
        %5411 = vxpose.xlu0.b32.cont [15/16] 0.0, 128
        %5412 = vxpose.xlu0.b32.end [16/16] 0.0, 128
        %v5413 = vpop.trf.xlu0
        %v5414 = vpop.trf.xlu0
        %v5415 = vpop.trf.xlu0
        %v5416 = vpop.trf.xlu0
        %v5417 = vpop.trf.xlu0
        %v5418 = vpop.trf.xlu0
        %v5419 = vpop.trf.xlu0
        %v5420 = vpop.trf.xlu0
        %v5421 = vpop.trf.xlu0
        %v5422 = vpop.trf.xlu0
        %v5423 = vpop.trf.xlu0
        %v5424 = vpop.trf.xlu0
        %v5425 = vpop.trf.xlu0
        %v5426 = vpop.trf.xlu0
        %v5427 = vpop.trf.xlu0
        %v5428 = vpop.trf.xlu0
        %5429 = vxpose.xlu0.b32.start [1/16] %v5356, 128
        %5430 = vxpose.xlu0.b32.cont [2/16] 0.0, 128
        %5431 = vxpose.xlu0.b32.cont [3/16] 0.0, 128
        %5432 = vxpose.xlu0.b32.cont [4/16] 0.0, 128
        %5433 = vxpose.xlu0.b32.cont [5/16] 0.0, 128
        %5434 = vxpose.xlu0.b32.cont [6/16] 0.0, 128
        %5435 = vxpose.xlu0.b32.cont [7/16] 0.0, 128
        %5436 = vxpose.xlu0.b32.cont [8/16] 0.0, 128
        %5437 = vxpose.xlu0.b32.cont [9/16] 0.0, 128
        %5438 = vxpose.xlu0.b32.cont [10/16] 0.0, 128
        %5439 = vxpose.xlu0.b32.cont [11/16] 0.0, 128
        %5440 = vxpose.xlu0.b32.cont [12/16] 0.0, 128
        %5441 = vxpose.xlu0.b32.cont [13/16] 0.0, 128
        %5442 = vxpose.xlu0.b32.cont [14/16] 0.0, 128
        %5443 = vxpose.xlu0.b32.cont [15/16] 0.0, 128
        %5444 = vxpose.xlu0.b32.end [16/16] 0.0, 128
        %v5445 = vpop.trf.xlu0
        %v5446 = vpop.trf.xlu0
        %v5447 = vpop.trf.xlu0
        %v5448 = vpop.trf.xlu0
        %v5449 = vpop.trf.xlu0
        %v5450 = vpop.trf.xlu0
        %v5451 = vpop.trf.xlu0
        %v5452 = vpop.trf.xlu0
        %v5453 = vpop.trf.xlu0
        %v5454 = vpop.trf.xlu0
        %v5455 = vpop.trf.xlu0
        %v5456 = vpop.trf.xlu0
        %v5457 = vpop.trf.xlu0
        %v5458 = vpop.trf.xlu0
        %v5459 = vpop.trf.xlu0
        %v5460 = vpop.trf.xlu0
        %5461 = vxpose.xlu0.b32.start [1/16] %v5375, 128
        %5462 = vxpose.xlu0.b32.cont [2/16] 0.0, 128
        %5463 = vxpose.xlu0.b32.cont [3/16] 0.0, 128
        %5464 = vxpose.xlu0.b32.cont [4/16] 0.0, 128
        %5465 = vxpose.xlu0.b32.cont [5/16] 0.0, 128
        %5466 = vxpose.xlu0.b32.cont [6/16] 0.0, 128
        %5467 = vxpose.xlu0.b32.cont [7/16] 0.0, 128
        %5468 = vxpose.xlu0.b32.cont [8/16] 0.0, 128
        %5469 = vxpose.xlu0.b32.cont [9/16] 0.0, 128
        %5470 = vxpose.xlu0.b32.cont [10/16] 0.0, 128
        %5471 = vxpose.xlu0.b32.cont [11/16] 0.0, 128
        %5472 = vxpose.xlu0.b32.cont [12/16] 0.0, 128
        %5473 = vxpose.xlu0.b32.cont [13/16] 0.0, 128
        %5474 = vxpose.xlu0.b32.cont [14/16] 0.0, 128
        %5475 = vxpose.xlu0.b32.cont [15/16] 0.0, 128
        %5476 = vxpose.xlu0.b32.end [16/16] 0.0, 128
        %v5477 = vpop.trf.xlu0
        %v5478 = vpop.trf.xlu0
        %v5479 = vpop.trf.xlu0
        %v5480 = vpop.trf.xlu0
        %v5481 = vpop.trf.xlu0
        %v5482 = vpop.trf.xlu0
        %v5483 = vpop.trf.xlu0
        %v5484 = vpop.trf.xlu0
        %v5485 = vpop.trf.xlu0
        %v5486 = vpop.trf.xlu0
        %v5487 = vpop.trf.xlu0
        %v5488 = vpop.trf.xlu0
        %v5489 = vpop.trf.xlu0
        %v5490 = vpop.trf.xlu0
        %v5491 = vpop.trf.xlu0
        %v5492 = vpop.trf.xlu0
        %5493 = vxpose.xlu0.b32.start [1/16] %v5394, 128
        %5494 = vxpose.xlu0.b32.cont [2/16] 0.0, 128
        %5495 = vxpose.xlu0.b32.cont [3/16] 0.0, 128
        %5496 = vxpose.xlu0.b32.cont [4/16] 0.0, 128
        %5497 = vxpose.xlu0.b32.cont [5/16] 0.0, 128
        %5498 = vxpose.xlu0.b32.cont [6/16] 0.0, 128
        %5499 = vxpose.xlu0.b32.cont [7/16] 0.0, 128
        %5500 = vxpose.xlu0.b32.cont [8/16] 0.0, 128
        %5501 = vxpose.xlu0.b32.cont [9/16] 0.0, 128
        %5502 = vxpose.xlu0.b32.cont [10/16] 0.0, 128
        %5503 = vxpose.xlu0.b32.cont [11/16] 0.0, 128
        %5504 = vxpose.xlu0.b32.cont [12/16] 0.0, 128
        %5505 = vxpose.xlu0.b32.cont [13/16] 0.0, 128
        %5506 = vxpose.xlu0.b32.cont [14/16] 0.0, 128
        %5507 = vxpose.xlu0.b32.cont [15/16] 0.0, 128
        %5508 = vxpose.xlu0.b32.end [16/16] 0.0, 128
        %v5509 = vpop.trf.xlu0
        %v5510 = vpop.trf.xlu0
        %v5511 = vpop.trf.xlu0
        %v5512 = vpop.trf.xlu0
        %v5513 = vpop.trf.xlu0
        %v5514 = vpop.trf.xlu0
        %v5515 = vpop.trf.xlu0
        %v5516 = vpop.trf.xlu0
        %v5517 = vpop.trf.xlu0
        %v5518 = vpop.trf.xlu0
        %v5519 = vpop.trf.xlu0
        %v5520 = vpop.trf.xlu0
        %v5521 = vpop.trf.xlu0
        %v5522 = vpop.trf.xlu0
        %v5523 = vpop.trf.xlu0
        %v5524 = vpop.trf.xlu0
        %v5525 = vrot.slane %v5477, 4
        %v5526 = vsel %vm755, %v5525, %v5413
        %v5527 = vrot.slane %v5413, 4
        %v5528 = vsel %vm755, %v5477, %v5527
        %v5530 = vunpack.c.l.s4 1983009808
        %v5531 = vunpack.c.0.s8 %v5530
        %v5532 = vperm.slane %v5526, %v5531
        %v5534 = vunpack.c.l.s4 1983009808
        %v5535 = vunpack.c.0.s8 %v5534
        %v5536 = vperm.slane %v5528, %v5535
        %v5537 = vrot.slane %v5509, 4
        %v5538 = vsel %vm755, %v5537, %v5445
        %v5539 = vrot.slane %v5445, 4
        %v5540 = vsel %vm755, %v5509, %v5539
        %v5542 = vunpack.c.l.s4 1983009808
        %v5543 = vunpack.c.0.s8 %v5542
        %v5544 = vperm.slane %v5538, %v5543
        %v5546 = vunpack.c.l.s4 1983009808
        %v5547 = vunpack.c.0.s8 %v5546
        %v5548 = vperm.slane %v5540, %v5547
        %v5549 = vrot.slane %v5544, 4
        %v5550 = vsel %vm755, %v5549, %v5532
        %v5551 = vrot.slane %v5532, 4
        %v5552 = vsel %vm755, %v5544, %v5551
        %v5554 = vunpack.c.l.s4 1934713408
        %v5555 = vunpack.c.0.s8 %v5554
        %v5556 = vperm.slane %v5550, %v5555
        %v5558 = vunpack.c.l.s4 1934713408
        %v5559 = vunpack.c.0.s8 %v5558
        %v5560 = vperm.slane %v5552, %v5559
        %v5561 = vrot.slane %v5548, 4
        %v5562 = vsel %vm755, %v5561, %v5536
        %v5563 = vrot.slane %v5536, 4
        %v5564 = vsel %vm755, %v5548, %v5563
        %v5566 = vunpack.c.l.s4 1934713408
        %v5567 = vunpack.c.0.s8 %v5566
        %v5568 = vperm.slane %v5562, %v5567
        %v5570 = vunpack.c.l.s4 1934713408
        %v5571 = vunpack.c.0.s8 %v5570
        %v5572 = vperm.slane %v5564, %v5571
        %v5573 = vrot.slane %v5556, 4
        %v5574 = vsel %vm755, 0.0, %v5573
        %v5575 = vrot.slane %v5560, 4
        %v5576 = vsel %vm755, 0.0, %v5575
        %v5577 = vrot.slane %v5568, 4
        %v5578 = vsel %vm755, 0.0, %v5577
        %v5579 = vrot.slane %v5572, 4
        %v5580 = vsel %vm755, 0.0, %v5579
        %v5581 = vsel %vm755, %v5575, %v5556
        %v5583 = vunpack.c.l.s4 1983009808
        %v5584 = vunpack.c.0.s8 %v5583
        %v5585 = vperm.slane %v5581, %v5584
        %v5586 = vrot.slane %v5576, 4
        %v5587 = vsel %vm755, %v5586, %v5574
        %v5589 = vunpack.c.l.s4 1983009808
        %v5590 = vunpack.c.0.s8 %v5589
        %v5591 = vperm.slane %v5587, %v5590
        %v5592 = vsel %vm755, %v5579, %v5568
        %v5594 = vunpack.c.l.s4 1983009808
        %v5595 = vunpack.c.0.s8 %v5594
        %v5596 = vperm.slane %v5592, %v5595
        %v5597 = vrot.slane %v5580, 4
        %v5598 = vsel %vm755, %v5597, %v5578
        %v5600 = vunpack.c.l.s4 1983009808
        %v5601 = vunpack.c.0.s8 %v5600
        %v5602 = vperm.slane %v5598, %v5601
        %v5603 = vrot.slane %v5591, 4
        %v5604 = vsel %vm755, %v5603, %v5585
        %v5605 = vrot.slane %v5585, 4
        %v5606 = vsel %vm755, %v5591, %v5605
        %v5608 = vunpack.c.l.s4 1934713408
        %v5609 = vunpack.c.0.s8 %v5608
        %v5610 = vperm.slane %v5604, %v5609
        %v5612 = vunpack.c.l.s4 1934713408
        %v5613 = vunpack.c.0.s8 %v5612
        %v5614 = vperm.slane %v5606, %v5613
        %v5615 = vrot.slane %v5602, 4
        %v5616 = vsel %vm755, %v5615, %v5596
        %v5617 = vrot.slane %v5596, 4
        %v5618 = vsel %vm755, %v5602, %v5617
        %v5620 = vunpack.c.l.s4 1934713408
        %v5621 = vunpack.c.0.s8 %v5620
        %v5622 = vperm.slane %v5616, %v5621
        %v5624 = vunpack.c.l.s4 1934713408
        %v5625 = vunpack.c.0.s8 %v5624
        %v5626 = vperm.slane %v5618, %v5625
        %v5627 = vrot.slane %v5622, 4
        %v5628 = vsel %vm755, %v5627, %v5610
        %v5629 = vrot.slane %v5610, 4
        %v5630 = vsel %vm755, %v5622, %v5629
        %v5631 = vrot.slane %v5626, 4
        %v5632 = vsel %vm755, %v5631, %v5614
        %v5633 = vrot.slane %v5614, 4
        %v5634 = vsel %vm755, %v5626, %v5633
        %5636 = vrot.lane.b32.xlu0 %v5630, 8
        %v5637 = vpop.permute.xlu0 %5636
        %5640 = vrot.lane.b32.xlu0 %v5632, 16
        %v5641 = vpop.permute.xlu0 %5640
        %5644 = vrot.lane.b32.xlu0 %v5634, 24
        %v5645 = vpop.permute.xlu0 %5644
        %v5647 = vsel %vm1420, %v5628, %v5637
        %v5648 = vsel %vm2269, %v5647, %v5641
        %v5649 = vsel %vm2271, %v5648, %v5645
        %v5650 = vpack.c.bf16 %v5649, %v5649
        %v5655 = vunpack.c.l.b16 %v4125
        %v5656 = vunpack.c.l.b16 %v4126
        %v5657 = vunpack.c.l.b16 %v4127
        %v5658 = vunpack.c.l.b16 %v4128
        %v5659 = vpack.c.b16 %v5656, %v5655
        %v5660 = vpack.c.b16 %v5658, %v5657
        %v5664 = vsel %vm681, %v5650, 0
        %5666 = vmatpush.bf16.msra.mxu0 0
        %5667 = vmatpush.bf16.msra.mxu0 0
        %5668 = vmatpush.bf16.msra.mxu0 0
        %5669 = vmatpush.bf16.msra.mxu0 0
        %5670 = vmatpush.bf16.msra.mxu0 0
        %5671 = vmatpush.bf16.msra.mxu0 0
        %5672 = vmatpush.bf16.msra.mxu0 %v5660
        %5673 = vmatpush.bf16.msra.mxu0 %v5659
        %5674 = vmatmul.bf16.gmra.mxu0 %v5664
        %v5675 = vpop.f32.mrf.mxu0
        %v5676 = vadd.f32 0.0, %v5675
        %v5677 = vpop.f32.mrf.mxu0
        %5678 = vdwg.mxu0
        %v5679 = vadd.f32 %v4038, %v5676
        %v5680 = vld [vmem:[%s6 + $0x5] sm:$0x1]
        %v5681 = vmul.f32 %v5679, %v5679
        %v5682 = vsel %vm681, %v5681, 0.0
        %5683 = vadd.xlane.f32.xlu0 %v5682
        %v5684 = vpop.xlane.xlu0 %5683
        %v5685 = vmul.f32 %v5684, %v691
        %v5686 = vadd.f32 %v5685, 1e-06
        %v5687 = vrsqrt.pop %v5686
        %v5688 = vmul.f32 %v5687, %v5686
        %v5689 = vmul.f32 %v5688, %v5687
        %v5690 = vmul.f32 0.5, %v5689
        %v5691 = vsub.f32 1.5, %v5690
        %v5692 = vmul.f32 %v5687, %v5691
        %vm5693 = vweird.f32 %v5686
        %vm5694 = vweird.f32 %v5687
        %vm5695 = vmor %vm5693, %vm5694
        %v5696 = vsel %vm5695, %v5687, %v5692
        %v5697 = vmul.f32 %v5679, %v5696
        %v5698 = vperm.slane %v5680, 0
        %v5699 = vmul.f32 %v5697, %v5698
        %v5700 = vld [vmem:[%s17] sm:$0xf]
        %v5701 = vld [vmem:[%s17 + $0x4] sm:$0xf]
        %v5702 = vld [vmem:[%s17 + $0x8] sm:$0xf]
        %v5703 = vld [vmem:[%s17 + $0xc] sm:$0xf]
        %v5704 = vpack.c.bf16 %v5699, %v5699
        %v5709 = vunpack.c.l.b16 %v5700
        %v5710 = vunpack.c.l.b16 %v5701
        %v5711 = vunpack.c.l.b16 %v5702
        %v5712 = vunpack.c.l.b16 %v5703
        %v5713 = vpack.c.b16 %v5710, %v5709
        %v5714 = vpack.c.b16 %v5712, %v5711
        %v5718 = vsel %vm681, %v5704, 0
        %5720 = vmatpush.bf16.msra.mxu0 0
        %5721 = vmatpush.bf16.msra.mxu0 0
        %5722 = vmatpush.bf16.msra.mxu0 0
        %5723 = vmatpush.bf16.msra.mxu0 0
        %5724 = vmatpush.bf16.msra.mxu0 0
        %5725 = vmatpush.bf16.msra.mxu0 0
        %5726 = vmatpush.bf16.msra.mxu0 %v5714
        %5727 = vmatpush.bf16.msra.mxu0 %v5713
        %5728 = vmatmul.bf16.gmra.mxu0 %v5718
        %v5729 = vpop.f32.mrf.mxu0
        %v5730 = vadd.f32 0.0, %v5729
        %v5731 = vpop.f32.mrf.mxu0
        %5732 = vdwg.mxu0
        %v5733 = vmax.f32 %v5730, 0.0
        %v5734 = vld [vmem:[%s18] sm:$0xf]
        %v5735 = vld [vmem:[%s18 + $0x4] sm:$0xf]
        %v5736 = vld [vmem:[%s18 + $0x8] sm:$0xf]
        %v5737 = vld [vmem:[%s18 + $0xc] sm:$0xf]
        %v5738 = vld [vmem:[%s18 + $0x10] sm:$0xf]
        %v5739 = vld [vmem:[%s18 + $0x14] sm:$0xf]
        %v5740 = vld [vmem:[%s18 + $0x18] sm:$0xf]
        %v5741 = vld [vmem:[%s18 + $0x1c] sm:$0xf]
        %v5742 = vpack.c.bf16 %v5733, %v5733
        %v5751 = vunpack.c.l.b16 %v5734
        %v5752 = vunpack.c.l.b16 %v5735
        %v5753 = vunpack.c.l.b16 %v5736
        %v5754 = vunpack.c.l.b16 %v5737
        %v5755 = vunpack.c.l.b16 %v5738
        %v5756 = vunpack.c.l.b16 %v5739
        %v5757 = vunpack.c.l.b16 %v5740
        %v5758 = vunpack.c.l.b16 %v5741
        %v5759 = vpack.c.b16 %v5752, %v5751
        %v5760 = vpack.c.b16 %v5754, %v5753
        %v5761 = vpack.c.b16 %v5756, %v5755
        %v5762 = vpack.c.b16 %v5758, %v5757
        %v5768 = vsel %vm2390, %v5742, 0
        %5770 = vmatpush.bf16.msra.mxu0 0
        %5771 = vmatpush.bf16.msra.mxu0 0
        %5772 = vmatpush.bf16.msra.mxu0 0
        %5773 = vmatpush.bf16.msra.mxu0 0
        %5774 = vmatpush.bf16.msra.mxu0 %v5762
        %5775 = vmatpush.bf16.msra.mxu0 %v5761
        %5776 = vmatpush.bf16.msra.mxu0 %v5760
        %5777 = vmatpush.bf16.msra.mxu0 %v5759
        %5778 = vmatmul.bf16.gmra.mxu0 %v5768
        %v5779 = vpop.f32.mrf.mxu0
        %v5780 = vadd.f32 0.0, %v5779
        %v5781 = vpop.f32.mrf.mxu0
        %5782 = vdwg.mxu0
        %v5783 = vadd.f32 %v5679, %v5780
        %v5784 = vld [vmem:[%s6 + $0x6] sm:$0x1]
        %v5785 = vmul.f32 %v5783, %v5783
        %v5786 = vsel %vm681, %v5785, 0.0
        %5787 = vadd.xlane.f32.xlu0 %v5786
        %v5788 = vpop.xlane.xlu0 %5787
        %v5789 = vmul.f32 %v5788, %v691
        %v5790 = vadd.f32 %v5789, 1e-06
        %v5791 = vrsqrt.pop %v5790
        %v5792 = vmul.f32 %v5791, %v5790
        %v5793 = vmul.f32 %v5792, %v5791
        %v5794 = vmul.f32 0.5, %v5793
        %v5795 = vsub.f32 1.5, %v5794
        %v5796 = vmul.f32 %v5791, %v5795
        %vm5797 = vweird.f32 %v5790
        %vm5798 = vweird.f32 %v5791
        %vm5799 = vmor %vm5797, %vm5798
        %v5800 = vsel %vm5799, %v5791, %v5796
        %v5801 = vmul.f32 %v5783, %v5800
        %v5802 = vperm.slane %v5784, 0
        %v5803 = vmul.f32 %v5801, %v5802
        %v5804 = vmul.f32 %v5803, 0.17677669
        %v5805 = vpack.c.bf16 %v5804, %v5804
        %v5806 = vld [vmem:[%s7] sm:$0xf]
        %v5807 = vld [vmem:[%s7 + $0x4] sm:$0xf]
        %v5808 = vld [vmem:[%s7 + $0x8] sm:$0xf]
        %v5809 = vld [vmem:[%s7 + $0xc] sm:$0xf]
        %v5814 = vunpack.c.l.b16 %v5806
        %v5815 = vunpack.c.l.b16 %v5807
        %v5816 = vunpack.c.l.b16 %v5808
        %v5817 = vunpack.c.l.b16 %v5809
        %v5818 = vpack.c.b16 %v5815, %v5814
        %v5819 = vpack.c.b16 %v5817, %v5816
        %v5823 = vsel %vm681, %v5805, 0
        %5825 = vmatpush.bf16.msra.mxu0 0
        %5826 = vmatpush.bf16.msra.mxu0 0
        %5827 = vmatpush.bf16.msra.mxu0 0
        %5828 = vmatpush.bf16.msra.mxu0 0
        %5829 = vmatpush.bf16.msra.mxu0 0
        %5830 = vmatpush.bf16.msra.mxu0 0
        %5831 = vmatpush.bf16.msra.mxu0 %v5819
        %5832 = vmatpush.bf16.msra.mxu0 %v5818
        %5833 = vmatmul.bf16.gmra.mxu0 %v5823
        %v5834 = vpop.f32.mrf.mxu0
        %v5835 = vadd.f32 0.0, %v5834
        %v5836 = vpop.f32.mrf.mxu0
        %5837 = vdwg.mxu0
        %5838 = vst [vmem:[%s628] sm:$0xff] %v5835
        %s5839 = sand.u32 %s460, 1
        %s5840 = scalar_lea.sflag [#allocation3], %s5839
        %s5841 = sand.u32 %s460, 1
        %s5842 = smul.addr %s5841, 8
        %s5843 = scalar_lea.vmem [#allocation2], %s5842
        // Predicated region
        $region97: #{reprover_forward.1} parent=95 // pred_check
          %p5844 = pneg %p470
        $region98: #{reprover_forward.1} parent=95 // pred_check_branch
          %5846 = sbr.rel (%p5844) target = $region100
        $region99: #{reprover_forward.1} parent=95 // pred_region
          %5848 = vsyncadd %s5840, 0
          %s5849 = smul.addr %s33, 8
          %s5850 = scalar_lea.hbm %s19, %s5849
          %s5852 = sshll.u32 %s5843, 4
          %s5853 = int_to_ptr.vmem [resolvable:$true] %s5852
          %s5854 = sshll.u32 %s5850, 4
          %s5855 = int_to_ptr.hbm [resolvable:$true] %s5854
          %5857 = dma.vmem_to_hbm [thread:$0]  %s5853, 128, %s5855, %s5840
        $region100: #{reprover_forward.1} parent=95 // pred_fallthru
          _
      $region96: #{reprover_forward.1} parent=5 // pred_fallthru
        _
      %p5858 = scmp.le.s32.totalorder 2, %s28
      // Predicated region
      $region101: #{reprover_forward.1} parent=5 // pred_check
        %p5859 = pneg %p5858
      $region102: #{reprover_forward.1} parent=5 // pred_check_branch
        %5861 = sbr.rel (%p5859) target = $region104
      $region103: #{reprover_forward.1} parent=5 // pred_region
        %s5862 = ssub.s32 %s28, 2
        // Predicated region
        $region105: #{reprover_forward.1} parent=103 // pred_check
          %p5863 = pneg %p476
        $region106: #{reprover_forward.1} parent=103 // pred_check_branch
          %5865 = sbr.rel (%p5863) target = $region108
        $region107: #{reprover_forward.1} parent=103 // pred_region
          %s5866 = sand.u32 %s461, 1
          %s5867 = scalar_lea.sflag [#allocation3], %s5866
          %s5868 = sand.u32 %s461, 1
          %s5869 = smul.addr %s5868, 8
          %s5870 = scalar_lea.vmem [#allocation2], %s5869
          %5872 = dma.done %s5867, 128
        $region108: #{reprover_forward.1} parent=103 // pred_fallthru
          _
      $region104: #{reprover_forward.1} parent=5 // pred_fallthru
        _
    $region6: #{reprover_forward.1} parent=1 // loop_footer
      %s32 = sadd.s32 1, %s28
    $region7: #{reprover_forward.1} parent=1 // loop_footer_branch
      %27 = sbr.rel target = $region3
    $region8: #{reprover_forward.1} parent=1 // loop_exit
      _
    %5873 = vsyncpa [#allocation3], 1
    %s5874 = scalar_lea.sflag [#allocation3], 1
    %5875 = vsyncpa %s5874, 1

</llo_original>
